<compile_context>
chip_gen: v6e
topology: v6e:2x2x1
jax: 0.10.0
libtpu: 0.0.40
codegen_flags: <defaults>
</compile_context>

<pallas_src>
import functools

import jax
import jax.numpy as jnp
from jax.experimental import pallas as pl
from jax.experimental.pallas import tpu as pltpu


def _lstm_seq_kernel(x_ref, wih_ref, whh_ref, b_ref, wlin_ref, blin_ref,
                     out_ref, preact_sc, hstack_sc, *, seq_len, hidden):
    """Whole-sequence LSTM + output Linear in one kernel invocation.

    x_ref    : (T, B, F)     time-major inputs (full block, resident in VMEM)
    wih_ref  : (F, 4H)       W_ih^T   (gate order i, f, g, o — PyTorch convention)
    whh_ref  : (H, 4H)       W_hh^T
    b_ref    : (1, 4H)       b_ih + b_hh
    wlin_ref : (H, Npad)     Linear weight^T, zero-padded to a lane-dense width
    blin_ref : (1, Npad)     Linear bias, zero-padded
    out_ref  : (T, B, Npad)  lane-dense output
    preact_sc: (T, B, 4H)    VMEM scratch: hoisted x @ W_ih + bias
    hstack_sc: (T, B, H)     VMEM scratch: per-step hidden states
    """
    T = seq_len
    H = hidden
    B = x_ref.shape[1]
    F = x_ref.shape[2]
    n_pad = out_ref.shape[-1]

    # ---- Prologue: hoist the non-recurrent input projection off the serial path.
    # One (T*B, F) x (F, 4H) matmul instead of T small ones inside the recurrence.
    x_2d = x_ref[...].reshape(T * B, F)
    preact = (jnp.dot(x_2d, wih_ref[...], preferred_element_type=jnp.float32)
              + b_ref[...])                               # (T*B, 4H)
    preact_sc[...] = preact.reshape(T, B, 4 * H)

    # ---- Serial recurrence: only h @ W_hh + gate activations per step.
    def step(t, carry):
        h, c = carry
        gates = preact_sc[t] + jnp.dot(h, whh_ref[...],
                                       preferred_element_type=jnp.float32)  # (B, 4H)
        i_g = jax.nn.sigmoid(gates[:, 0 * H:1 * H])
        f_g = jax.nn.sigmoid(gates[:, 1 * H:2 * H])
        g_g = jnp.tanh(gates[:, 2 * H:3 * H])
        o_g = jax.nn.sigmoid(gates[:, 3 * H:4 * H])
        c_new = f_g * c + i_g * g_g
        h_new = o_g * jnp.tanh(c_new)
        hstack_sc[t] = h_new
        return (h_new, c_new)

    h0 = jnp.zeros((B, H), jnp.float32)
    c0 = jnp.zeros((B, H), jnp.float32)
    unroll = True if T <= 32 else 8   # full unroll for short sequences
    jax.lax.fori_loop(0, T, step, (h0, c0), unroll=unroll)

    # ---- Epilogue: batched output Linear, single matmul, lane-dense store.
    h_all = hstack_sc[...].reshape(T * B, H)
    out = (jnp.dot(h_all, wlin_ref[...], preferred_element_type=jnp.float32)
           + blin_ref[...])                               # (T*B, Npad)
    out_ref[...] = out.reshape(T, B, n_pad).astype(out_ref.dtype)


def rnn_predictor_forward(x_btf, params):
    """x_btf: (B, T, F) float32. Returns (B, T, nvar) float32."""
    B, T, F = x_btf.shape
    H = params["w_hh_t"].shape[0]
    nvar = params["w_lin_t"].shape[1]
    n_pad = max(128, ((nvar + 127) // 128) * 128)   # lane-dense output width

    # Time-major inside the kernel so every per-step access is a dense
    # leading-dim slice.  These transposes move only O(KiB) of data.
    x_tbf = jnp.transpose(x_btf, (1, 0, 2))

    # Pad the output Linear to a lane-dense width (zeros in the padded columns).
    w_lin_pad = jnp.pad(params["w_lin_t"], ((0, 0), (0, n_pad - nvar)))
    b_lin_pad = jnp.pad(params["b_lin"], ((0, 0), (0, n_pad - nvar)))

    kernel = functools.partial(_lstm_seq_kernel, seq_len=T, hidden=H)

    out_tbn = pl.pallas_call(
        kernel,
        out_shape=jax.ShapeDtypeStruct((T, B, n_pad), jnp.float32),
        grid_spec=pltpu.PrefetchScalarGridSpec(
            num_scalar_prefetch=0,
            grid=(1,),   # single invocation; recurrence runs in-kernel
            in_specs=[
                pl.BlockSpec((T, B, F), lambda i: (0, 0, 0)),
                pl.BlockSpec((F, 4 * H), lambda i: (0, 0)),
                pl.BlockSpec((H, 4 * H), lambda i: (0, 0)),
                pl.BlockSpec((1, 4 * H), lambda i: (0, 0)),
                pl.BlockSpec((H, n_pad), lambda i: (0, 0)),
                pl.BlockSpec((1, n_pad), lambda i: (0, 0)),
            ],
            out_specs=pl.BlockSpec((T, B, n_pad), lambda i: (0, 0, 0)),
            scratch_shapes=[
                pltpu.VMEM((T, B, 4 * H), jnp.float32),   # hoisted input projection
                pltpu.VMEM((T, B, H), jnp.float32),       # hidden-state stack
            ],
        ),
        compiler_params=pltpu.CompilerParams(
            dimension_semantics=("arbitrary",)),
        # NOTE: at production scale, bf16 weights (v6e/v7x MXU) and a batch-parallel
        # split across the two v7x TensorCores are further options; at these sizes
        # and for exact f32 parity with the PyTorch reference we keep f32.
    )(x_tbf, params["w_ih_t"], params["w_hh_t"], params["b"],
      w_lin_pad, b_lin_pad)

    return jnp.transpose(out_tbn, (1, 0, 2))[:, :, :nvar]


def init_params(key, input_size, hidden_size, nvar):
    """Deterministic parameter init mimicking PyTorch's U(-1/sqrt(H), 1/sqrt(H))."""
    ks = jax.random.split(key, 6)
    s = 1.0 / jnp.sqrt(jnp.float32(hidden_size))
    w_ih = jax.random.uniform(ks[0], (4 * hidden_size, input_size), minval=-s, maxval=s)
    w_hh = jax.random.uniform(ks[1], (4 * hidden_size, hidden_size), minval=-s, maxval=s)
    b_ih = jax.random.uniform(ks[2], (4 * hidden_size,), minval=-s, maxval=s)
    b_hh = jax.random.uniform(ks[3], (4 * hidden_size,), minval=-s, maxval=s)
    w_lin = jax.random.uniform(ks[4], (nvar, hidden_size), minval=-s, maxval=s)
    b_lin = jax.random.uniform(ks[5], (nvar,), minval=-s, maxval=s)
    return {
        "w_ih_t": w_ih.T.astype(jnp.float32),                      # (F, 4H)
        "w_hh_t": w_hh.T.astype(jnp.float32),                      # (H, 4H)
        "b": (b_ih + b_hh).reshape(1, -1).astype(jnp.float32),     # (1, 4H)
        "w_lin_t": w_lin.T.astype(jnp.float32),                    # (H, nvar)
        "b_lin": b_lin.reshape(1, -1).astype(jnp.float32),         # (1, nvar)
    }


def rnn_predictor_forward_ref(x_btf, params):
    """Pure-JAX reference (lax.scan) matching nn.LSTMCell + nn.Linear semantics."""
    B, T, F = x_btf.shape
    H = params["w_hh_t"].shape[0]

    def step(carry, x_t):
        h, c = carry
        gates = x_t @ params["w_ih_t"] + h @ params["w_hh_t"] + params["b"]
        i_g = jax.nn.sigmoid(gates[:, 0 * H:1 * H])
        f_g = jax.nn.sigmoid(gates[:, 1 * H:2 * H])
        g_g = jnp.tanh(gates[:, 2 * H:3 * H])
        o_g = jax.nn.sigmoid(gates[:, 3 * H:4 * H])
        c_new = f_g * c + i_g * g_g
        h_new = o_g * jnp.tanh(c_new)
        out = h_new @ params["w_lin_t"] + params["b_lin"]
        return (h_new, c_new), out

    h0 = jnp.zeros((B, H), jnp.float32)
    c0 = jnp.zeros((B, H), jnp.float32)
    _, outs = jax.lax.scan(step, (h0, c0), jnp.transpose(x_btf, (1, 0, 2)))
    return jnp.transpose(outs, (1, 0, 2))


if __name__ == "__main__":
    # Small shapes: batch=8, seq=8, nvar=4, hidden=128 (auxvar=0 default).
    B, T, NVAR, H = 8, 8, 4, 128

    key = jax.random.PRNGKey(0)
    k_x, k_p = jax.random.split(key)
    x = jax.random.normal(k_x, (B, T, NVAR), dtype=jnp.float32)
    params = init_params(k_p, input_size=NVAR, hidden_size=H, nvar=NVAR)

    out = jax.jit(rnn_predictor_forward)(x, params)
    out = jax.block_until_ready(out)

    ref = rnn_predictor_forward_ref(x, params)
    assert out.shape == (B, T, NVAR)
    assert jnp.allclose(out, ref, rtol=1e-4, atol=1e-4), "mismatch vs JAX reference"

    print("KERNEL_OK")
</pallas_src>

<mosaic_0001>
module attributes {stable_mosaic.version = 11 : i64} {
  func.func @_lstm_seq_kernel(%arg0: i32, %arg1: memref<8x8x4xf32, #tpu.memory_space<vmem>>, %arg2: memref<4x512xf32, #tpu.memory_space<vmem>>, %arg3: memref<128x512xf32, #tpu.memory_space<vmem>>, %arg4: memref<1x512xf32, #tpu.memory_space<vmem>>, %arg5: memref<128x128xf32, #tpu.memory_space<vmem>>, %arg6: memref<1x128xf32, #tpu.memory_space<vmem>>, %arg7: memref<8x8x128xf32, #tpu.memory_space<vmem>>, %arg8: memref<8x8x512xf32, #tpu.memory_space<vmem>>, %arg9: memref<8x8x128xf32, #tpu.memory_space<vmem>>) attributes {dimension_semantics = [#tpu.dimension_semantics<arbitrary>], iteration_bounds = array<i64: 1>, scalar_prefetch = 0 : i64, scratch_operands = 2 : i64, tpu.core_type = #tpu.core_type<tc>, window_params = [{pipeline_mode = #tpu.pipeline_mode<synchronous>, transform_indices = @transform_0, window_bounds = array<i64: 8, 8, 4>}, {pipeline_mode = #tpu.pipeline_mode<synchronous>, transform_indices = @transform_1, window_bounds = array<i64: 4, 512>}, {pipeline_mode = #tpu.pipeline_mode<synchronous>, transform_indices = @transform_2, window_bounds = array<i64: 128, 512>}, {pipeline_mode = #tpu.pipeline_mode<synchronous>, transform_indices = @transform_3, window_bounds = array<i64: 1, 512>}, {pipeline_mode = #tpu.pipeline_mode<synchronous>, transform_indices = @transform_4, window_bounds = array<i64: 128, 128>}, {pipeline_mode = #tpu.pipeline_mode<synchronous>, transform_indices = @transform_5, window_bounds = array<i64: 1, 128>}, {pipeline_mode = #tpu.pipeline_mode<synchronous>, transform_indices = @transform_6, window_bounds = array<i64: 8, 8, 128>}]} {
    %c0 = arith.constant 0 : index
    %c0_0 = arith.constant 0 : index
    %c0_1 = arith.constant 0 : index
    %0 = vector.load %arg1[%c0, %c0_0, %c0_1] : memref<8x8x4xf32, #tpu.memory_space<vmem>>, vector<8x8x4xf32>
    %1 = vector.shape_cast %0 : vector<8x8x4xf32> to vector<64x4xf32>
    %c0_2 = arith.constant 0 : index
    %c0_3 = arith.constant 0 : index
    %2 = vector.load %arg2[%c0_2, %c0_3] : memref<4x512xf32, #tpu.memory_space<vmem>>, vector<4x512xf32>
    %cst = arith.constant dense<0.000000e+00> : vector<64x512xf32>
    %3 = tpu.matmul %1, %2, %cst {dimension_numbers = #tpu.dot_dimension_numbers<[1], [0], [0], [1], [0, 0, 1, 1], [], []>} : vector<64x4xf32>, vector<4x512xf32>, vector<64x512xf32> -> vector<64x512xf32>
    %c0_4 = arith.constant 0 : index
    %c0_5 = arith.constant 0 : index
    %4 = vector.load %arg4[%c0_4, %c0_5] : memref<1x512xf32, #tpu.memory_space<vmem>>, vector<1x512xf32>
    %5 = vector.broadcast %4 : vector<1x512xf32> to vector<64x512xf32>
    %6 = arith.addf %3, %5 : vector<64x512xf32>
    %7 = vector.shape_cast %6 : vector<64x512xf32> to vector<8x8x512xf32>
    %c0_6 = arith.constant 0 : index
    %c0_7 = arith.constant 0 : index
    %c0_8 = arith.constant 0 : index
    %8 = vector.load %arg8[%c0_6, %c0_7, %c0_8] : memref<8x8x512xf32, #tpu.memory_space<vmem>>, vector<8x8x512xf32>
    tpu.vector_store %arg8[%c0_6, %c0_7, %c0_8], %7 {strides = array<i32>} : memref<8x8x512xf32, #tpu.memory_space<vmem>>, vector<8x8x512xf32>,
    %cst_9 = arith.constant 0.000000e+00 : f32
    %9 = vector.broadcast %cst_9 : f32 to vector<8x128xf32>
    %cst_10 = arith.constant 0.000000e+00 : f32
    %10 = vector.broadcast %cst_10 : f32 to vector<8x128xf32>
    %c0_i32 = arith.constant 0 : i32
    %11 = arith.index_cast %c0_i32 : i32 to index
    %c0_11 = arith.constant 0 : index
    %c0_12 = arith.constant 0 : index
    %12 = vector.load %arg8[%11, %c0_11, %c0_12] : memref<8x8x512xf32, #tpu.memory_space<vmem>>, vector<1x8x512xf32>
    %13 = vector.shape_cast %12 : vector<1x8x512xf32> to vector<8x512xf32>
    %c0_13 = arith.constant 0 : index
    %c0_14 = arith.constant 0 : index
    %14 = vector.load %arg3[%c0_13, %c0_14] : memref<128x512xf32, #tpu.memory_space<vmem>>, vector<128x512xf32>
    %cst_15 = arith.constant dense<0.000000e+00> : vector<8x512xf32>
    %15 = tpu.matmul %9, %14, %cst_15 {dimension_numbers = #tpu.dot_dimension_numbers<[1], [0], [0], [1], [0, 0, 1, 1], [], []>} : vector<8x128xf32>, vector<128x512xf32>, vector<8x512xf32> -> vector<8x512xf32>
    %16 = arith.addf %13, %15 : vector<8x512xf32>
    %17 = vector.extract_strided_slice %16 {offsets = [0, 0], sizes = [8, 128], strides = [1, 1]} : vector<8x512xf32> to vector<8x128xf32>
    %18 = arith.negf %17 : vector<8x128xf32>
    %19 = math.exp %18 : vector<8x128xf32>
    %cst_16 = arith.constant 1.000000e+00 : f32
    %20 = vector.broadcast %cst_16 : f32 to vector<8x128xf32>
    %21 = arith.addf %20, %19 : vector<8x128xf32>
    %22 = arith.divf %20, %21 : vector<8x128xf32>
    %23 = vector.extract_strided_slice %16 {offsets = [0, 128], sizes = [8, 128], strides = [1, 1]} : vector<8x512xf32> to vector<8x128xf32>
    %24 = arith.negf %23 : vector<8x128xf32>
    %25 = math.exp %24 : vector<8x128xf32>
    %cst_17 = arith.constant 1.000000e+00 : f32
    %26 = vector.broadcast %cst_17 : f32 to vector<8x128xf32>
    %27 = arith.addf %26, %25 : vector<8x128xf32>
    %28 = arith.divf %26, %27 : vector<8x128xf32>
    %29 = vector.extract_strided_slice %16 {offsets = [0, 256], sizes = [8, 128], strides = [1, 1]} : vector<8x512xf32> to vector<8x128xf32>
    %30 = math.tanh %29 : vector<8x128xf32>
    %31 = vector.extract_strided_slice %16 {offsets = [0, 384], sizes = [8, 128], strides = [1, 1]} : vector<8x512xf32> to vector<8x128xf32>
    %32 = arith.negf %31 : vector<8x128xf32>
    %33 = math.exp %32 : vector<8x128xf32>
    %cst_18 = arith.constant 1.000000e+00 : f32
    %34 = vector.broadcast %cst_18 : f32 to vector<8x128xf32>
    %35 = arith.addf %34, %33 : vector<8x128xf32>
    %36 = arith.divf %34, %35 : vector<8x128xf32>
    %37 = arith.mulf %28, %10 : vector<8x128xf32>
    %38 = arith.mulf %22, %30 : vector<8x128xf32>
    %39 = arith.addf %37, %38 : vector<8x128xf32>
    %40 = math.tanh %39 : vector<8x128xf32>
    %41 = arith.mulf %36, %40 : vector<8x128xf32>
    %42 = arith.index_cast %c0_i32 : i32 to index
    %c0_19 = arith.constant 0 : index
    %c0_20 = arith.constant 0 : index
    %43 = vector.load %arg9[%42, %c0_19, %c0_20] : memref<8x8x128xf32, #tpu.memory_space<vmem>>, vector<1x8x128xf32>
    %44 = vector.shape_cast %43 : vector<1x8x128xf32> to vector<8x128xf32>
    %45 = vector.shape_cast %41 : vector<8x128xf32> to vector<1x8x128xf32>
    tpu.vector_store %arg9[%42, %c0_19, %c0_20], %45 {strides = array<i32>} : memref<8x8x128xf32, #tpu.memory_space<vmem>>, vector<1x8x128xf32>,
    %c1_i32 = arith.constant 1 : i32
    %46 = arith.index_cast %c1_i32 : i32 to index
    %c0_21 = arith.constant 0 : index
    %c0_22 = arith.constant 0 : index
    %47 = vector.load %arg8[%46, %c0_21, %c0_22] : memref<8x8x512xf32, #tpu.memory_space<vmem>>, vector<1x8x512xf32>
    %48 = vector.shape_cast %47 : vector<1x8x512xf32> to vector<8x512xf32>
    %c0_23 = arith.constant 0 : index
    %c0_24 = arith.constant 0 : index
    %49 = vector.load %arg3[%c0_23, %c0_24] : memref<128x512xf32, #tpu.memory_space<vmem>>, vector<128x512xf32>
    %cst_25 = arith.constant dense<0.000000e+00> : vector<8x512xf32>
    %50 = tpu.matmul %41, %49, %cst_25 {dimension_numbers = #tpu.dot_dimension_numbers<[1], [0], [0], [1], [0, 0, 1, 1], [], []>} : vector<8x128xf32>, vector<128x512xf32>, vector<8x512xf32> -> vector<8x512xf32>
    %51 = arith.addf %48, %50 : vector<8x512xf32>
    %52 = vector.extract_strided_slice %51 {offsets = [0, 0], sizes = [8, 128], strides = [1, 1]} : vector<8x512xf32> to vector<8x128xf32>
    %53 = arith.negf %52 : vector<8x128xf32>
    %54 = math.exp %53 : vector<8x128xf32>
    %cst_26 = arith.constant 1.000000e+00 : f32
    %55 = vector.broadcast %cst_26 : f32 to vector<8x128xf32>
    %56 = arith.addf %55, %54 : vector<8x128xf32>
    %57 = arith.divf %55, %56 : vector<8x128xf32>
    %58 = vector.extract_strided_slice %51 {offsets = [0, 128], sizes = [8, 128], strides = [1, 1]} : vector<8x512xf32> to vector<8x128xf32>
    %59 = arith.negf %58 : vector<8x128xf32>
    %60 = math.exp %59 : vector<8x128xf32>
    %cst_27 = arith.constant 1.000000e+00 : f32
    %61 = vector.broadcast %cst_27 : f32 to vector<8x128xf32>
    %62 = arith.addf %61, %60 : vector<8x128xf32>
    %63 = arith.divf %61, %62 : vector<8x128xf32>
    %64 = vector.extract_strided_slice %51 {offsets = [0, 256], sizes = [8, 128], strides = [1, 1]} : vector<8x512xf32> to vector<8x128xf32>
    %65 = math.tanh %64 : vector<8x128xf32>
    %66 = vector.extract_strided_slice %51 {offsets = [0, 384], sizes = [8, 128], strides = [1, 1]} : vector<8x512xf32> to vector<8x128xf32>
    %67 = arith.negf %66 : vector<8x128xf32>
    %68 = math.exp %67 : vector<8x128xf32>
    %cst_28 = arith.constant 1.000000e+00 : f32
    %69 = vector.broadcast %cst_28 : f32 to vector<8x128xf32>
    %70 = arith.addf %69, %68 : vector<8x128xf32>
    %71 = arith.divf %69, %70 : vector<8x128xf32>
    %72 = arith.mulf %63, %39 : vector<8x128xf32>
    %73 = arith.mulf %57, %65 : vector<8x128xf32>
    %74 = arith.addf %72, %73 : vector<8x128xf32>
    %75 = math.tanh %74 : vector<8x128xf32>
    %76 = arith.mulf %71, %75 : vector<8x128xf32>
    %77 = arith.index_cast %c1_i32 : i32 to index
    %c0_29 = arith.constant 0 : index
    %c0_30 = arith.constant 0 : index
    %78 = vector.load %arg9[%77, %c0_29, %c0_30] : memref<8x8x128xf32, #tpu.memory_space<vmem>>, vector<1x8x128xf32>
    %79 = vector.shape_cast %78 : vector<1x8x128xf32> to vector<8x128xf32>
    %80 = vector.shape_cast %76 : vector<8x128xf32> to vector<1x8x128xf32>
    tpu.vector_store %arg9[%77, %c0_29, %c0_30], %80 {strides = array<i32>} : memref<8x8x128xf32, #tpu.memory_space<vmem>>, vector<1x8x128xf32>,
    %c2_i32 = arith.constant 2 : i32
    %81 = arith.index_cast %c2_i32 : i32 to index
    %c0_31 = arith.constant 0 : index
    %c0_32 = arith.constant 0 : index
    %82 = vector.load %arg8[%81, %c0_31, %c0_32] : memref<8x8x512xf32, #tpu.memory_space<vmem>>, vector<1x8x512xf32>
    %83 = vector.shape_cast %82 : vector<1x8x512xf32> to vector<8x512xf32>
    %c0_33 = arith.constant 0 : index
    %c0_34 = arith.constant 0 : index
    %84 = vector.load %arg3[%c0_33, %c0_34] : memref<128x512xf32, #tpu.memory_space<vmem>>, vector<128x512xf32>
    %cst_35 = arith.constant dense<0.000000e+00> : vector<8x512xf32>
    %85 = tpu.matmul %76, %84, %cst_35 {dimension_numbers = #tpu.dot_dimension_numbers<[1], [0], [0], [1], [0, 0, 1, 1], [], []>} : vector<8x128xf32>, vector<128x512xf32>, vector<8x512xf32> -> vector<8x512xf32>
    %86 = arith.addf %83, %85 : vector<8x512xf32>
    %87 = vector.extract_strided_slice %86 {offsets = [0, 0], sizes = [8, 128], strides = [1, 1]} : vector<8x512xf32> to vector<8x128xf32>
    %88 = arith.negf %87 : vector<8x128xf32>
    %89 = math.exp %88 : vector<8x128xf32>
    %cst_36 = arith.constant 1.000000e+00 : f32
    %90 = vector.broadcast %cst_36 : f32 to vector<8x128xf32>
    %91 = arith.addf %90, %89 : vector<8x128xf32>
    %92 = arith.divf %90, %91 : vector<8x128xf32>
    %93 = vector.extract_strided_slice %86 {offsets = [0, 128], sizes = [8, 128], strides = [1, 1]} : vector<8x512xf32> to vector<8x128xf32>
    %94 = arith.negf %93 : vector<8x128xf32>
    %95 = math.exp %94 : vector<8x128xf32>
    %cst_37 = arith.constant 1.000000e+00 : f32
    %96 = vector.broadcast %cst_37 : f32 to vector<8x128xf32>
    %97 = arith.addf %96, %95 : vector<8x128xf32>
    %98 = arith.divf %96, %97 : vector<8x128xf32>
    %99 = vector.extract_strided_slice %86 {offsets = [0, 256], sizes = [8, 128], strides = [1, 1]} : vector<8x512xf32> to vector<8x128xf32>
    %100 = math.tanh %99 : vector<8x128xf32>
    %101 = vector.extract_strided_slice %86 {offsets = [0, 384], sizes = [8, 128], strides = [1, 1]} : vector<8x512xf32> to vector<8x128xf32>
    %102 = arith.negf %101 : vector<8x128xf32>
    %103 = math.exp %102 : vector<8x128xf32>
    %cst_38 = arith.constant 1.000000e+00 : f32
    %104 = vector.broadcast %cst_38 : f32 to vector<8x128xf32>
    %105 = arith.addf %104, %103 : vector<8x128xf32>
    %106 = arith.divf %104, %105 : vector<8x128xf32>
    %107 = arith.mulf %98, %74 : vector<8x128xf32>
    %108 = arith.mulf %92, %100 : vector<8x128xf32>
    %109 = arith.addf %107, %108 : vector<8x128xf32>
    %110 = math.tanh %109 : vector<8x128xf32>
    %111 = arith.mulf %106, %110 : vector<8x128xf32>
    %112 = arith.index_cast %c2_i32 : i32 to index
    %c0_39 = arith.constant 0 : index
    %c0_40 = arith.constant 0 : index
    %113 = vector.load %arg9[%112, %c0_39, %c0_40] : memref<8x8x128xf32, #tpu.memory_space<vmem>>, vector<1x8x128xf32>
    %114 = vector.shape_cast %113 : vector<1x8x128xf32> to vector<8x128xf32>
    %115 = vector.shape_cast %111 : vector<8x128xf32> to vector<1x8x128xf32>
    tpu.vector_store %arg9[%112, %c0_39, %c0_40], %115 {strides = array<i32>} : memref<8x8x128xf32, #tpu.memory_space<vmem>>, vector<1x8x128xf32>,
    %c3_i32 = arith.constant 3 : i32
    %116 = arith.index_cast %c3_i32 : i32 to index
    %c0_41 = arith.constant 0 : index
    %c0_42 = arith.constant 0 : index
    %117 = vector.load %arg8[%116, %c0_41, %c0_42] : memref<8x8x512xf32, #tpu.memory_space<vmem>>, vector<1x8x512xf32>
    %118 = vector.shape_cast %117 : vector<1x8x512xf32> to vector<8x512xf32>
    %c0_43 = arith.constant 0 : index
    %c0_44 = arith.constant 0 : index
    %119 = vector.load %arg3[%c0_43, %c0_44] : memref<128x512xf32, #tpu.memory_space<vmem>>, vector<128x512xf32>
    %cst_45 = arith.constant dense<0.000000e+00> : vector<8x512xf32>
    %120 = tpu.matmul %111, %119, %cst_45 {dimension_numbers = #tpu.dot_dimension_numbers<[1], [0], [0], [1], [0, 0, 1, 1], [], []>} : vector<8x128xf32>, vector<128x512xf32>, vector<8x512xf32> -> vector<8x512xf32>
    %121 = arith.addf %118, %120 : vector<8x512xf32>
    %122 = vector.extract_strided_slice %121 {offsets = [0, 0], sizes = [8, 128], strides = [1, 1]} : vector<8x512xf32> to vector<8x128xf32>
    %123 = arith.negf %122 : vector<8x128xf32>
    %124 = math.exp %123 : vector<8x128xf32>
    %cst_46 = arith.constant 1.000000e+00 : f32
    %125 = vector.broadcast %cst_46 : f32 to vector<8x128xf32>
    %126 = arith.addf %125, %124 : vector<8x128xf32>
    %127 = arith.divf %125, %126 : vector<8x128xf32>
    %128 = vector.extract_strided_slice %121 {offsets = [0, 128], sizes = [8, 128], strides = [1, 1]} : vector<8x512xf32> to vector<8x128xf32>
    %129 = arith.negf %128 : vector<8x128xf32>
    %130 = math.exp %129 : vector<8x128xf32>
    %cst_47 = arith.constant 1.000000e+00 : f32
    %131 = vector.broadcast %cst_47 : f32 to vector<8x128xf32>
    %132 = arith.addf %131, %130 : vector<8x128xf32>
    %133 = arith.divf %131, %132 : vector<8x128xf32>
    %134 = vector.extract_strided_slice %121 {offsets = [0, 256], sizes = [8, 128], strides = [1, 1]} : vector<8x512xf32> to vector<8x128xf32>
    %135 = math.tanh %134 : vector<8x128xf32>
    %136 = vector.extract_strided_slice %121 {offsets = [0, 384], sizes = [8, 128], strides = [1, 1]} : vector<8x512xf32> to vector<8x128xf32>
    %137 = arith.negf %136 : vector<8x128xf32>
    %138 = math.exp %137 : vector<8x128xf32>
    %cst_48 = arith.constant 1.000000e+00 : f32
    %139 = vector.broadcast %cst_48 : f32 to vector<8x128xf32>
    %140 = arith.addf %139, %138 : vector<8x128xf32>
    %141 = arith.divf %139, %140 : vector<8x128xf32>
    %142 = arith.mulf %133, %109 : vector<8x128xf32>
    %143 = arith.mulf %127, %135 : vector<8x128xf32>
    %144 = arith.addf %142, %143 : vector<8x128xf32>
    %145 = math.tanh %144 : vector<8x128xf32>
    %146 = arith.mulf %141, %145 : vector<8x128xf32>
    %147 = arith.index_cast %c3_i32 : i32 to index
    %c0_49 = arith.constant 0 : index
    %c0_50 = arith.constant 0 : index
    %148 = vector.load %arg9[%147, %c0_49, %c0_50] : memref<8x8x128xf32, #tpu.memory_space<vmem>>, vector<1x8x128xf32>
    %149 = vector.shape_cast %148 : vector<1x8x128xf32> to vector<8x128xf32>
    %150 = vector.shape_cast %146 : vector<8x128xf32> to vector<1x8x128xf32>
    tpu.vector_store %arg9[%147, %c0_49, %c0_50], %150 {strides = array<i32>} : memref<8x8x128xf32, #tpu.memory_space<vmem>>, vector<1x8x128xf32>,
    %c4_i32 = arith.constant 4 : i32
    %151 = arith.index_cast %c4_i32 : i32 to index
    %c0_51 = arith.constant 0 : index
    %c0_52 = arith.constant 0 : index
    %152 = vector.load %arg8[%151, %c0_51, %c0_52] : memref<8x8x512xf32, #tpu.memory_space<vmem>>, vector<1x8x512xf32>
    %153 = vector.shape_cast %152 : vector<1x8x512xf32> to vector<8x512xf32>
    %c0_53 = arith.constant 0 : index
    %c0_54 = arith.constant 0 : index
    %154 = vector.load %arg3[%c0_53, %c0_54] : memref<128x512xf32, #tpu.memory_space<vmem>>, vector<128x512xf32>
    %cst_55 = arith.constant dense<0.000000e+00> : vector<8x512xf32>
    %155 = tpu.matmul %146, %154, %cst_55 {dimension_numbers = #tpu.dot_dimension_numbers<[1], [0], [0], [1], [0, 0, 1, 1], [], []>} : vector<8x128xf32>, vector<128x512xf32>, vector<8x512xf32> -> vector<8x512xf32>
    %156 = arith.addf %153, %155 : vector<8x512xf32>
    %157 = vector.extract_strided_slice %156 {offsets = [0, 0], sizes = [8, 128], strides = [1, 1]} : vector<8x512xf32> to vector<8x128xf32>
    %158 = arith.negf %157 : vector<8x128xf32>
    %159 = math.exp %158 : vector<8x128xf32>
    %cst_56 = arith.constant 1.000000e+00 : f32
    %160 = vector.broadcast %cst_56 : f32 to vector<8x128xf32>
    %161 = arith.addf %160, %159 : vector<8x128xf32>
    %162 = arith.divf %160, %161 : vector<8x128xf32>
    %163 = vector.extract_strided_slice %156 {offsets = [0, 128], sizes = [8, 128], strides = [1, 1]} : vector<8x512xf32> to vector<8x128xf32>
    %164 = arith.negf %163 : vector<8x128xf32>
    %165 = math.exp %164 : vector<8x128xf32>
    %cst_57 = arith.constant 1.000000e+00 : f32
    %166 = vector.broadcast %cst_57 : f32 to vector<8x128xf32>
    %167 = arith.addf %166, %165 : vector<8x128xf32>
    %168 = arith.divf %166, %167 : vector<8x128xf32>
    %169 = vector.extract_strided_slice %156 {offsets = [0, 256], sizes = [8, 128], strides = [1, 1]} : vector<8x512xf32> to vector<8x128xf32>
    %170 = math.tanh %169 : vector<8x128xf32>
    %171 = vector.extract_strided_slice %156 {offsets = [0, 384], sizes = [8, 128], strides = [1, 1]} : vector<8x512xf32> to vector<8x128xf32>
    %172 = arith.negf %171 : vector<8x128xf32>
    %173 = math.exp %172 : vector<8x128xf32>
    %cst_58 = arith.constant 1.000000e+00 : f32
    %174 = vector.broadcast %cst_58 : f32 to vector<8x128xf32>
    %175 = arith.addf %174, %173 : vector<8x128xf32>
    %176 = arith.divf %174, %175 : vector<8x128xf32>
    %177 = arith.mulf %168, %144 : vector<8x128xf32>
    %178 = arith.mulf %162, %170 : vector<8x128xf32>
    %179 = arith.addf %177, %178 : vector<8x128xf32>
    %180 = math.tanh %179 : vector<8x128xf32>
    %181 = arith.mulf %176, %180 : vector<8x128xf32>
    %182 = arith.index_cast %c4_i32 : i32 to index
    %c0_59 = arith.constant 0 : index
    %c0_60 = arith.constant 0 : index
    %183 = vector.load %arg9[%182, %c0_59, %c0_60] : memref<8x8x128xf32, #tpu.memory_space<vmem>>, vector<1x8x128xf32>
    %184 = vector.shape_cast %183 : vector<1x8x128xf32> to vector<8x128xf32>
    %185 = vector.shape_cast %181 : vector<8x128xf32> to vector<1x8x128xf32>
    tpu.vector_store %arg9[%182, %c0_59, %c0_60], %185 {strides = array<i32>} : memref<8x8x128xf32, #tpu.memory_space<vmem>>, vector<1x8x128xf32>,
    %c5_i32 = arith.constant 5 : i32
    %186 = arith.index_cast %c5_i32 : i32 to index
    %c0_61 = arith.constant 0 : index
    %c0_62 = arith.constant 0 : index
    %187 = vector.load %arg8[%186, %c0_61, %c0_62] : memref<8x8x512xf32, #tpu.memory_space<vmem>>, vector<1x8x512xf32>
    %188 = vector.shape_cast %187 : vector<1x8x512xf32> to vector<8x512xf32>
    %c0_63 = arith.constant 0 : index
    %c0_64 = arith.constant 0 : index
    %189 = vector.load %arg3[%c0_63, %c0_64] : memref<128x512xf32, #tpu.memory_space<vmem>>, vector<128x512xf32>
    %cst_65 = arith.constant dense<0.000000e+00> : vector<8x512xf32>
    %190 = tpu.matmul %181, %189, %cst_65 {dimension_numbers = #tpu.dot_dimension_numbers<[1], [0], [0], [1], [0, 0, 1, 1], [], []>} : vector<8x128xf32>, vector<128x512xf32>, vector<8x512xf32> -> vector<8x512xf32>
    %191 = arith.addf %188, %190 : vector<8x512xf32>
    %192 = vector.extract_strided_slice %191 {offsets = [0, 0], sizes = [8, 128], strides = [1, 1]} : vector<8x512xf32> to vector<8x128xf32>
    %193 = arith.negf %192 : vector<8x128xf32>
    %194 = math.exp %193 : vector<8x128xf32>
    %cst_66 = arith.constant 1.000000e+00 : f32
    %195 = vector.broadcast %cst_66 : f32 to vector<8x128xf32>
    %196 = arith.addf %195, %194 : vector<8x128xf32>
    %197 = arith.divf %195, %196 : vector<8x128xf32>
    %198 = vector.extract_strided_slice %191 {offsets = [0, 128], sizes = [8, 128], strides = [1, 1]} : vector<8x512xf32> to vector<8x128xf32>
    %199 = arith.negf %198 : vector<8x128xf32>
    %200 = math.exp %199 : vector<8x128xf32>
    %cst_67 = arith.constant 1.000000e+00 : f32
    %201 = vector.broadcast %cst_67 : f32 to vector<8x128xf32>
    %202 = arith.addf %201, %200 : vector<8x128xf32>
    %203 = arith.divf %201, %202 : vector<8x128xf32>
    %204 = vector.extract_strided_slice %191 {offsets = [0, 256], sizes = [8, 128], strides = [1, 1]} : vector<8x512xf32> to vector<8x128xf32>
    %205 = math.tanh %204 : vector<8x128xf32>
    %206 = vector.extract_strided_slice %191 {offsets = [0, 384], sizes = [8, 128], strides = [1, 1]} : vector<8x512xf32> to vector<8x128xf32>
    %207 = arith.negf %206 : vector<8x128xf32>
    %208 = math.exp %207 : vector<8x128xf32>
    %cst_68 = arith.constant 1.000000e+00 : f32
    %209 = vector.broadcast %cst_68 : f32 to vector<8x128xf32>
    %210 = arith.addf %209, %208 : vector<8x128xf32>
    %211 = arith.divf %209, %210 : vector<8x128xf32>
    %212 = arith.mulf %203, %179 : vector<8x128xf32>
    %213 = arith.mulf %197, %205 : vector<8x128xf32>
    %214 = arith.addf %212, %213 : vector<8x128xf32>
    %215 = math.tanh %214 : vector<8x128xf32>
    %216 = arith.mulf %211, %215 : vector<8x128xf32>
    %217 = arith.index_cast %c5_i32 : i32 to index
    %c0_69 = arith.constant 0 : index
    %c0_70 = arith.constant 0 : index
    %218 = vector.load %arg9[%217, %c0_69, %c0_70] : memref<8x8x128xf32, #tpu.memory_space<vmem>>, vector<1x8x128xf32>
    %219 = vector.shape_cast %218 : vector<1x8x128xf32> to vector<8x128xf32>
    %220 = vector.shape_cast %216 : vector<8x128xf32> to vector<1x8x128xf32>
    tpu.vector_store %arg9[%217, %c0_69, %c0_70], %220 {strides = array<i32>} : memref<8x8x128xf32, #tpu.memory_space<vmem>>, vector<1x8x128xf32>,
    %c6_i32 = arith.constant 6 : i32
    %221 = arith.index_cast %c6_i32 : i32 to index
    %c0_71 = arith.constant 0 : index
    %c0_72 = arith.constant 0 : index
    %222 = vector.load %arg8[%221, %c0_71, %c0_72] : memref<8x8x512xf32, #tpu.memory_space<vmem>>, vector<1x8x512xf32>
    %223 = vector.shape_cast %222 : vector<1x8x512xf32> to vector<8x512xf32>
    %c0_73 = arith.constant 0 : index
    %c0_74 = arith.constant 0 : index
    %224 = vector.load %arg3[%c0_73, %c0_74] : memref<128x512xf32, #tpu.memory_space<vmem>>, vector<128x512xf32>
    %cst_75 = arith.constant dense<0.000000e+00> : vector<8x512xf32>
    %225 = tpu.matmul %216, %224, %cst_75 {dimension_numbers = #tpu.dot_dimension_numbers<[1], [0], [0], [1], [0, 0, 1, 1], [], []>} : vector<8x128xf32>, vector<128x512xf32>, vector<8x512xf32> -> vector<8x512xf32>
    %226 = arith.addf %223, %225 : vector<8x512xf32>
    %227 = vector.extract_strided_slice %226 {offsets = [0, 0], sizes = [8, 128], strides = [1, 1]} : vector<8x512xf32> to vector<8x128xf32>
    %228 = arith.negf %227 : vector<8x128xf32>
    %229 = math.exp %228 : vector<8x128xf32>
    %cst_76 = arith.constant 1.000000e+00 : f32
    %230 = vector.broadcast %cst_76 : f32 to vector<8x128xf32>
    %231 = arith.addf %230, %229 : vector<8x128xf32>
    %232 = arith.divf %230, %231 : vector<8x128xf32>
    %233 = vector.extract_strided_slice %226 {offsets = [0, 128], sizes = [8, 128], strides = [1, 1]} : vector<8x512xf32> to vector<8x128xf32>
    %234 = arith.negf %233 : vector<8x128xf32>
    %235 = math.exp %234 : vector<8x128xf32>
    %cst_77 = arith.constant 1.000000e+00 : f32
    %236 = vector.broadcast %cst_77 : f32 to vector<8x128xf32>
    %237 = arith.addf %236, %235 : vector<8x128xf32>
    %238 = arith.divf %236, %237 : vector<8x128xf32>
    %239 = vector.extract_strided_slice %226 {offsets = [0, 256], sizes = [8, 128], strides = [1, 1]} : vector<8x512xf32> to vector<8x128xf32>
    %240 = math.tanh %239 : vector<8x128xf32>
    %241 = vector.extract_strided_slice %226 {offsets = [0, 384], sizes = [8, 128], strides = [1, 1]} : vector<8x512xf32> to vector<8x128xf32>
    %242 = arith.negf %241 : vector<8x128xf32>
    %243 = math.exp %242 : vector<8x128xf32>
    %cst_78 = arith.constant 1.000000e+00 : f32
    %244 = vector.broadcast %cst_78 : f32 to vector<8x128xf32>
    %245 = arith.addf %244, %243 : vector<8x128xf32>
    %246 = arith.divf %244, %245 : vector<8x128xf32>
    %247 = arith.mulf %238, %214 : vector<8x128xf32>
    %248 = arith.mulf %232, %240 : vector<8x128xf32>
    %249 = arith.addf %247, %248 : vector<8x128xf32>
    %250 = math.tanh %249 : vector<8x128xf32>
    %251 = arith.mulf %246, %250 : vector<8x128xf32>
    %252 = arith.index_cast %c6_i32 : i32 to index
    %c0_79 = arith.constant 0 : index
    %c0_80 = arith.constant 0 : index
    %253 = vector.load %arg9[%252, %c0_79, %c0_80] : memref<8x8x128xf32, #tpu.memory_space<vmem>>, vector<1x8x128xf32>
    %254 = vector.shape_cast %253 : vector<1x8x128xf32> to vector<8x128xf32>
    %255 = vector.shape_cast %251 : vector<8x128xf32> to vector<1x8x128xf32>
    tpu.vector_store %arg9[%252, %c0_79, %c0_80], %255 {strides = array<i32>} : memref<8x8x128xf32, #tpu.memory_space<vmem>>, vector<1x8x128xf32>,
    %c7_i32 = arith.constant 7 : i32
    %256 = arith.index_cast %c7_i32 : i32 to index
    %c0_81 = arith.constant 0 : index
    %c0_82 = arith.constant 0 : index
    %257 = vector.load %arg8[%256, %c0_81, %c0_82] : memref<8x8x512xf32, #tpu.memory_space<vmem>>, vector<1x8x512xf32>
    %258 = vector.shape_cast %257 : vector<1x8x512xf32> to vector<8x512xf32>
    %c0_83 = arith.constant 0 : index
    %c0_84 = arith.constant 0 : index
    %259 = vector.load %arg3[%c0_83, %c0_84] : memref<128x512xf32, #tpu.memory_space<vmem>>, vector<128x512xf32>
    %cst_85 = arith.constant dense<0.000000e+00> : vector<8x512xf32>
    %260 = tpu.matmul %251, %259, %cst_85 {dimension_numbers = #tpu.dot_dimension_numbers<[1], [0], [0], [1], [0, 0, 1, 1], [], []>} : vector<8x128xf32>, vector<128x512xf32>, vector<8x512xf32> -> vector<8x512xf32>
    %261 = arith.addf %258, %260 : vector<8x512xf32>
    %262 = vector.extract_strided_slice %261 {offsets = [0, 0], sizes = [8, 128], strides = [1, 1]} : vector<8x512xf32> to vector<8x128xf32>
    %263 = arith.negf %262 : vector<8x128xf32>
    %264 = math.exp %263 : vector<8x128xf32>
    %cst_86 = arith.constant 1.000000e+00 : f32
    %265 = vector.broadcast %cst_86 : f32 to vector<8x128xf32>
    %266 = arith.addf %265, %264 : vector<8x128xf32>
    %267 = arith.divf %265, %266 : vector<8x128xf32>
    %268 = vector.extract_strided_slice %261 {offsets = [0, 128], sizes = [8, 128], strides = [1, 1]} : vector<8x512xf32> to vector<8x128xf32>
    %269 = arith.negf %268 : vector<8x128xf32>
    %270 = math.exp %269 : vector<8x128xf32>
    %cst_87 = arith.constant 1.000000e+00 : f32
    %271 = vector.broadcast %cst_87 : f32 to vector<8x128xf32>
    %272 = arith.addf %271, %270 : vector<8x128xf32>
    %273 = arith.divf %271, %272 : vector<8x128xf32>
    %274 = vector.extract_strided_slice %261 {offsets = [0, 256], sizes = [8, 128], strides = [1, 1]} : vector<8x512xf32> to vector<8x128xf32>
    %275 = math.tanh %274 : vector<8x128xf32>
    %276 = vector.extract_strided_slice %261 {offsets = [0, 384], sizes = [8, 128], strides = [1, 1]} : vector<8x512xf32> to vector<8x128xf32>
    %277 = arith.negf %276 : vector<8x128xf32>
    %278 = math.exp %277 : vector<8x128xf32>
    %cst_88 = arith.constant 1.000000e+00 : f32
    %279 = vector.broadcast %cst_88 : f32 to vector<8x128xf32>
    %280 = arith.addf %279, %278 : vector<8x128xf32>
    %281 = arith.divf %279, %280 : vector<8x128xf32>
    %282 = arith.mulf %273, %249 : vector<8x128xf32>
    %283 = arith.mulf %267, %275 : vector<8x128xf32>
    %284 = arith.addf %282, %283 : vector<8x128xf32>
    %285 = math.tanh %284 : vector<8x128xf32>
    %286 = arith.mulf %281, %285 : vector<8x128xf32>
    %287 = arith.index_cast %c7_i32 : i32 to index
    %c0_89 = arith.constant 0 : index
    %c0_90 = arith.constant 0 : index
    %288 = vector.load %arg9[%287, %c0_89, %c0_90] : memref<8x8x128xf32, #tpu.memory_space<vmem>>, vector<1x8x128xf32>
    %289 = vector.shape_cast %288 : vector<1x8x128xf32> to vector<8x128xf32>
    %290 = vector.shape_cast %286 : vector<8x128xf32> to vector<1x8x128xf32>
    tpu.vector_store %arg9[%287, %c0_89, %c0_90], %290 {strides = array<i32>} : memref<8x8x128xf32, #tpu.memory_space<vmem>>, vector<1x8x128xf32>,
    %c8_i32 = arith.constant 8 : i32
    %c0_91 = arith.constant 0 : index
    %c0_92 = arith.constant 0 : index
    %c0_93 = arith.constant 0 : index
    %291 = vector.load %arg9[%c0_91, %c0_92, %c0_93] : memref<8x8x128xf32, #tpu.memory_space<vmem>>, vector<8x8x128xf32>
    %292 = vector.shape_cast %291 : vector<8x8x128xf32> to vector<64x128xf32>
    %c0_94 = arith.constant 0 : index
    %c0_95 = arith.constant 0 : index
    %293 = vector.load %arg5[%c0_94, %c0_95] : memref<128x128xf32, #tpu.memory_space<vmem>>, vector<128x128xf32>
    %cst_96 = arith.constant dense<0.000000e+00> : vector<64x128xf32>
    %294 = tpu.matmul %292, %293, %cst_96 {dimension_numbers = #tpu.dot_dimension_numbers<[1], [0], [0], [1], [0, 0, 1, 1], [], []>} : vector<64x128xf32>, vector<128x128xf32>, vector<64x128xf32> -> vector<64x128xf32>
    %c0_97 = arith.constant 0 : index
    %c0_98 = arith.constant 0 : index
    %295 = vector.load %arg6[%c0_97, %c0_98] : memref<1x128xf32, #tpu.memory_space<vmem>>, vector<1x128xf32>
    %296 = vector.broadcast %295 : vector<1x128xf32> to vector<64x128xf32>
    %297 = arith.addf %294, %296 : vector<64x128xf32>
    %298 = vector.shape_cast %297 : vector<64x128xf32> to vector<8x8x128xf32>
    %c0_99 = arith.constant 0 : index
    %c0_100 = arith.constant 0 : index
    %c0_101 = arith.constant 0 : index
    %299 = vector.load %arg7[%c0_99, %c0_100, %c0_101] : memref<8x8x128xf32, #tpu.memory_space<vmem>>, vector<8x8x128xf32>
    tpu.vector_store %arg7[%c0_99, %c0_100, %c0_101], %298 {strides = array<i32>} : memref<8x8x128xf32, #tpu.memory_space<vmem>>, vector<8x8x128xf32>,
    return
  }
  func.func @transform_0(%arg0: i32) -> (i32, i32, i32) {
    %c0_i32 = arith.constant 0 : i32
    %c0_i32_0 = arith.constant 0 : i32
    %c0_i32_1 = arith.constant 0 : i32
    %c0_i32_2 = arith.constant 0 : i32
    return %c0_i32, %c0_i32_0, %c0_i32_1 : i32, i32, i32
  }
  func.func @transform_1(%arg0: i32) -> (i32, i32) {
    %c0_i32 = arith.constant 0 : i32
    %c0_i32_0 = arith.constant 0 : i32
    %c0_i32_1 = arith.constant 0 : i32
    return %c0_i32, %c0_i32_0 : i32, i32
  }
  func.func @transform_2(%arg0: i32) -> (i32, i32) {
    %c0_i32 = arith.constant 0 : i32
    %c0_i32_0 = arith.constant 0 : i32
    %c0_i32_1 = arith.constant 0 : i32
    return %c0_i32, %c0_i32_0 : i32, i32
  }
  func.func @transform_3(%arg0: i32) -> (i32, i32) {
    %c0_i32 = arith.constant 0 : i32
    %c0_i32_0 = arith.constant 0 : i32
    %c0_i32_1 = arith.constant 0 : i32
    return %c0_i32, %c0_i32_0 : i32, i32
  }
  func.func @transform_4(%arg0: i32) -> (i32, i32) {
    %c0_i32 = arith.constant 0 : i32
    %c0_i32_0 = arith.constant 0 : i32
    %c0_i32_1 = arith.constant 0 : i32
    return %c0_i32, %c0_i32_0 : i32, i32
  }
  func.func @transform_5(%arg0: i32) -> (i32, i32) {
    %c0_i32 = arith.constant 0 : i32
    %c0_i32_0 = arith.constant 0 : i32
    %c0_i32_1 = arith.constant 0 : i32
    return %c0_i32, %c0_i32_0 : i32, i32
  }
  func.func @transform_6(%arg0: i32) -> (i32, i32, i32) {
    %c0_i32 = arith.constant 0 : i32
    %c0_i32_0 = arith.constant 0 : i32
    %c0_i32_1 = arith.constant 0 : i32
    %c0_i32_2 = arith.constant 0 : i32
    return %c0_i32, %c0_i32_0, %c0_i32_1 : i32, i32, i32
  }
}

</mosaic_0001>

<llo_original>
// kernel: rnn_predictor_forward.1
$region0: #{rnn_predictor_forward.1}
  #allocation0 [shape = 'u32[]', space=smem, size = 0x4, offset = 0x4, fixed_abs, tag = 'smem constant byte address 0x4 - core index']
  #allocation1 [shape = 'u32[144,128]{1,0:T(1,128)}', space=vmem, size = 0x12000, scoped, tag = 'internal scratch']
  #allocation2 [shape = 'f32[8,8,512]{2,1,0:T(8,128)}', space=vmem, size = 0x20000, scoped, tag = 'scratch operand']
  #allocation3 [shape = 'f32[8,8,128]{2,1,0:T(8,128)}', space=vmem, size = 0x8000, scoped, tag = 'scratch operand']
  %s0 = inlined_call_operand.vmem [shape: f32[8,8,4], index: 0, kind: input, shape index: {}]
  %s1 = inlined_call_operand.vmem [shape: f32[4,512], index: 1, kind: input, shape index: {}]
  %s2 = inlined_call_operand.hbm [shape: f32[128,512], index: 2, kind: input, shape index: {}]
  %s3 = inlined_call_operand.vmem [shape: f32[1,512], index: 3, kind: input, shape index: {}]
  %s4 = inlined_call_operand.vmem [shape: f32[128,128], index: 4, kind: input, shape index: {}]
  %s5 = inlined_call_operand.vmem [shape: f32[1,128], index: 5, kind: input, shape index: {}]
  %s6 = inlined_call_operand.vmem [shape: f32[8,8,128], index: 6, kind: output, shape index: {}]
  %s7 = sld [smem:[#allocation0]]
  $region38: #{rnn_predictor_forward.1} parent=0
    _
  %s9 = ssub.s32 1, %s7
  %s10 = scalar_select 0, %s9, %s7
  $region1: #{rnn_predictor_forward.1} parent=0
    #allocation4 [shape = 'u8[262144]{0}', space=vmem, size = 0x40000, scoped, tag = 'input window, operand 2, single buffered']
    #allocation5 [shape = 's32[1]{0}', space=sflag, size = 0x4, scoped, tag = 'scoped memory for rnn_predictor_forward.1']
    %11 = vsyncpa [#allocation5], 0
    // Predicated region
    $region2: #{rnn_predictor_forward.1} parent=1 // pred_check
      _
    $region3: #{rnn_predictor_forward.1} parent=1 // pred_check_branch
      %13 = sbr.rel (0) target = $region5
    $region4: #{rnn_predictor_forward.1} parent=1 // pred_region
      _
    $region5: #{rnn_predictor_forward.1} parent=1 // pred_fallthru
      _
    // Predicated region
    $region6: #{rnn_predictor_forward.1} parent=1 // pred_check
      _
    $region7: #{rnn_predictor_forward.1} parent=1 // pred_check_branch
      %15 = sbr.rel (0) target = $region9
    $region8: #{rnn_predictor_forward.1} parent=1 // pred_region
      _
    $region9: #{rnn_predictor_forward.1} parent=1 // pred_fallthru
      _
    // Predicated region
    $region10: #{rnn_predictor_forward.1} parent=1 // pred_check
      _
    $region11: #{rnn_predictor_forward.1} parent=1 // pred_check_branch
      %17 = sbr.rel (0) target = $region13
    $region12: #{rnn_predictor_forward.1} parent=1 // pred_region
      %s19 = ssub.s32 8192, 8192
      %20 = vsyncadd [#allocation5], %s19
      %s21 = sshll.u32 [#allocation4], 4
      %s22 = int_to_ptr.vmem [resolvable:$true] %s21
      %27 = dma.hbm_to_vmem [thread:$0]  %s2, 8192, %s22, [#allocation5], 512, 512, 32
    $region13: #{rnn_predictor_forward.1} parent=1 // pred_fallthru
      _
    // Predicated region
    $region14: #{rnn_predictor_forward.1} parent=1 // pred_check
      _
    $region15: #{rnn_predictor_forward.1} parent=1 // pred_check_branch
      %29 = sbr.rel (0) target = $region17
    $region16: #{rnn_predictor_forward.1} parent=1 // pred_region
      _
    $region17: #{rnn_predictor_forward.1} parent=1 // pred_fallthru
      _
    // Predicated region
    $region18: #{rnn_predictor_forward.1} parent=1 // pred_check
      _
    $region19: #{rnn_predictor_forward.1} parent=1 // pred_check_branch
      %31 = sbr.rel (0) target = $region21
    $region20: #{rnn_predictor_forward.1} parent=1 // pred_region
      _
    $region21: #{rnn_predictor_forward.1} parent=1 // pred_fallthru
      _
    // Predicated region
    $region22: #{rnn_predictor_forward.1} parent=1 // pred_check
      _
    $region23: #{rnn_predictor_forward.1} parent=1 // pred_check_branch
      %33 = sbr.rel (0) target = $region25
    $region24: #{rnn_predictor_forward.1} parent=1 // pred_region
      _
    $region25: #{rnn_predictor_forward.1} parent=1 // pred_fallthru
      _
    // Predicated region
    $region26: #{rnn_predictor_forward.1} parent=1 // pred_check
      _
    $region27: #{rnn_predictor_forward.1} parent=1 // pred_check_branch
      %35 = sbr.rel (0) target = $region29
    $region28: #{rnn_predictor_forward.1} parent=1 // pred_region
      %36 = dma.done [#allocation5], 8192
    $region29: #{rnn_predictor_forward.1} parent=1 // pred_fallthru
      _
    %v37 = vld [vmem:[%s0] sm:$0xff]
    %v38 = vld [vmem:[%s0 + $0x8] sm:$0xff]
    %v39 = vld [vmem:[%s0 + $0x10] sm:$0xff]
    %v40 = vld [vmem:[%s0 + $0x18] sm:$0xff]
    %v41 = vld [vmem:[%s0 + $0x20] sm:$0xff]
    %v42 = vld [vmem:[%s0 + $0x28] sm:$0xff]
    %v43 = vld [vmem:[%s0 + $0x30] sm:$0xff]
    %v44 = vld [vmem:[%s0 + $0x38] sm:$0xff]
    %v45 = vld [vmem:[%s1] sm:$0xff]
    %v46 = vld [vmem:[%s1 + $0x8] sm:$0xff]
    %v47 = vld [vmem:[%s3] sm:$0xf]
    %v49 = vlaneseq
    %v50 = vshrl.u32 %v49, 7
    %v51 = vsub.s32 0, %v50
    %v52 = vrot.slane %v47, %v51
    %v53 = vlaneseq
    %v54 = vshrl.u32 %v53, 7
    %v55 = vsub.s32 1, %v54
    %v56 = vrot.slane %v47, %v55
    %v57 = vlaneseq
    %v58 = vshrl.u32 %v57, 7
    %v59 = vsub.s32 2, %v58
    %v60 = vrot.slane %v47, %v59
    %v61 = vlaneseq
    %v62 = vshrl.u32 %v61, 7
    %v63 = vsub.s32 3, %v62
    %v64 = vrot.slane %v47, %v63
    %v71 = vcombine.high %v45, %v45
    %v72 = vcombine.high %v46, %v46
    %vm73 = vcmask 31744
    %v75 = vsel %vm73, %v37, 0
    %v78 = vsel %vm73, %v38, 0
    %v81 = vsel %vm73, %v39, 0
    %v84 = vsel %vm73, %v40, 0
    %v87 = vsel %vm73, %v41, 0
    %v90 = vsel %vm73, %v42, 0
    %v93 = vsel %vm73, %v43, 0
    %v96 = vsel %vm73, %v44, 0
    %vm98 = vcmask 1043456
    %v99 = vsel %vm98, %v45, 0
    %v101 = vsel %vm98, %v71, 0
    %v103 = vsel %vm98, %v46, 0
    %v105 = vsel %vm98, %v72, 0
    %107 = vmatprep.subr.mxu0 0.0
    %108 = vmatpush1.msra.mxu0 0.0
    %109 = vmatprep.subr.mxu0 0.0
    %110 = vmatpush1.msra.mxu0 0.0
    %111 = vmatprep.subr.mxu0 0.0
    %112 = vmatpush1.msra.mxu0 0.0
    %113 = vmatprep.subr.mxu0 0.0
    %114 = vmatpush1.msra.mxu0 0.0
    %115 = vmatprep.subr.mxu0 0.0
    %116 = vmatpush1.msra.mxu0 0.0
    %117 = vmatprep.subr.mxu0 0.0
    %118 = vmatpush1.msra.mxu0 0.0
    %119 = vmatprep.subr.mxu0 0.0
    %120 = vmatpush1.msra.mxu0 0.0
    %121 = vmatprep.subr.mxu0 0.0
    %122 = vmatpush1.msra.mxu0 0.0
    %123 = vmatprep.subr.mxu0 0.0
    %124 = vmatpush1.msra.mxu0 0.0
    %125 = vmatprep.subr.mxu0 0.0
    %126 = vmatpush1.msra.mxu0 0.0
    %127 = vmatprep.subr.mxu0 0.0
    %128 = vmatpush1.msra.mxu0 0.0
    %129 = vmatprep.subr.mxu0 0.0
    %130 = vmatpush1.msra.mxu0 0.0
    %131 = vmatprep.subr.mxu0 0.0
    %132 = vmatpush1.msra.mxu0 0.0
    %133 = vmatprep.subr.mxu0 0.0
    %134 = vmatpush1.msra.mxu0 0.0
    %135 = vmatprep.subr.mxu0 0.0
    %136 = vmatpush1.msra.mxu0 0.0
    %137 = vmatprep.subr.mxu0 %v101
    %138 = vmatpush1.msra.mxu0 %v99
    %139 = vmatprep.subr.mxu0 0.0
    %140 = vmatpush2.msra.mxu0 0.0
    %141 = vmatprep.subr.mxu0 0.0
    %142 = vmatpush2.msra.mxu0 0.0
    %143 = vmatprep.subr.mxu0 0.0
    %144 = vmatpush2.msra.mxu0 0.0
    %145 = vmatprep.subr.mxu0 0.0
    %146 = vmatpush2.msra.mxu0 0.0
    %147 = vmatprep.subr.mxu0 0.0
    %148 = vmatpush2.msra.mxu0 0.0
    %149 = vmatprep.subr.mxu0 0.0
    %150 = vmatpush2.msra.mxu0 0.0
    %151 = vmatprep.subr.mxu0 0.0
    %152 = vmatpush2.msra.mxu0 0.0
    %153 = vmatprep.subr.mxu0 0.0
    %154 = vmatpush2.msra.mxu0 0.0
    %155 = vmatprep.subr.mxu0 0.0
    %156 = vmatpush2.msra.mxu0 0.0
    %157 = vmatprep.subr.mxu0 0.0
    %158 = vmatpush2.msra.mxu0 0.0
    %159 = vmatprep.subr.mxu0 0.0
    %160 = vmatpush2.msra.mxu0 0.0
    %161 = vmatprep.subr.mxu0 0.0
    %162 = vmatpush2.msra.mxu0 0.0
    %163 = vmatprep.subr.mxu0 0.0
    %164 = vmatpush2.msra.mxu0 0.0
    %165 = vmatprep.subr.mxu0 0.0
    %166 = vmatpush2.msra.mxu0 0.0
    %167 = vmatprep.subr.mxu0 0.0
    %168 = vmatpush2.msra.mxu0 0.0
    %169 = vmatprep.subr.mxu0 0.0
    %170 = vmatpush2.msra.mxu0 0.0
    %171 = vmatprep.mubr.f32.mxu0 0.0
    %172 = vmatmul.mubr.f32.gmra.mxu0 %v75
    %v173 = vpop.f32.mrf.mxu0
    %v174 = vadd.f32 %v52, %v173
    %v175 = vpop.f32.mrf.mxu0
    %v176 = vadd.f32 %v56, %v175
    %177 = vmatprep.mubr.f32.mxu0 0.0
    %178 = vmatmul.mubr.f32.gmra.mxu0 %v78
    %v179 = vpop.f32.mrf.mxu0
    %v180 = vadd.f32 %v52, %v179
    %v181 = vpop.f32.mrf.mxu0
    %v182 = vadd.f32 %v56, %v181
    %183 = vmatprep.mubr.f32.mxu0 0.0
    %184 = vmatmul.mubr.f32.gmra.mxu0 %v81
    %v185 = vpop.f32.mrf.mxu0
    %v186 = vadd.f32 %v52, %v185
    %v187 = vpop.f32.mrf.mxu0
    %v188 = vadd.f32 %v56, %v187
    %189 = vmatprep.mubr.f32.mxu0 0.0
    %190 = vmatmul.mubr.f32.gmra.mxu0 %v84
    %v191 = vpop.f32.mrf.mxu0
    %v192 = vadd.f32 %v52, %v191
    %v193 = vpop.f32.mrf.mxu0
    %v194 = vadd.f32 %v56, %v193
    %195 = vmatprep.mubr.f32.mxu0 0.0
    %196 = vmatmul.mubr.f32.gmra.mxu0 %v87
    %v197 = vpop.f32.mrf.mxu0
    %v198 = vadd.f32 %v52, %v197
    %v199 = vpop.f32.mrf.mxu0
    %v200 = vadd.f32 %v56, %v199
    %201 = vmatprep.mubr.f32.mxu0 0.0
    %202 = vmatmul.mubr.f32.gmra.mxu0 %v90
    %v203 = vpop.f32.mrf.mxu0
    %v204 = vadd.f32 %v52, %v203
    %v205 = vpop.f32.mrf.mxu0
    %v206 = vadd.f32 %v56, %v205
    %207 = vmatprep.mubr.f32.mxu0 0.0
    %208 = vmatmul.mubr.f32.gmra.mxu0 %v93
    %v209 = vpop.f32.mrf.mxu0
    %v210 = vadd.f32 %v52, %v209
    %v211 = vpop.f32.mrf.mxu0
    %v212 = vadd.f32 %v56, %v211
    %213 = vmatprep.mubr.f32.mxu0 0.0
    %214 = vmatmul.mubr.f32.gmra.mxu0 %v96
    %v215 = vpop.f32.mrf.mxu0
    %v216 = vadd.f32 %v52, %v215
    %v217 = vpop.f32.mrf.mxu0
    %v218 = vadd.f32 %v56, %v217
    %219 = vdwg.mxu0
    %220 = vmatprep.subr.mxu0 0.0
    %221 = vmatpush1.msra.mxu0 0.0
    %222 = vmatprep.subr.mxu0 0.0
    %223 = vmatpush1.msra.mxu0 0.0
    %224 = vmatprep.subr.mxu0 0.0
    %225 = vmatpush1.msra.mxu0 0.0
    %226 = vmatprep.subr.mxu0 0.0
    %227 = vmatpush1.msra.mxu0 0.0
    %228 = vmatprep.subr.mxu0 0.0
    %229 = vmatpush1.msra.mxu0 0.0
    %230 = vmatprep.subr.mxu0 0.0
    %231 = vmatpush1.msra.mxu0 0.0
    %232 = vmatprep.subr.mxu0 0.0
    %233 = vmatpush1.msra.mxu0 0.0
    %234 = vmatprep.subr.mxu0 0.0
    %235 = vmatpush1.msra.mxu0 0.0
    %236 = vmatprep.subr.mxu0 0.0
    %237 = vmatpush1.msra.mxu0 0.0
    %238 = vmatprep.subr.mxu0 0.0
    %239 = vmatpush1.msra.mxu0 0.0
    %240 = vmatprep.subr.mxu0 0.0
    %241 = vmatpush1.msra.mxu0 0.0
    %242 = vmatprep.subr.mxu0 0.0
    %243 = vmatpush1.msra.mxu0 0.0
    %244 = vmatprep.subr.mxu0 0.0
    %245 = vmatpush1.msra.mxu0 0.0
    %246 = vmatprep.subr.mxu0 0.0
    %247 = vmatpush1.msra.mxu0 0.0
    %248 = vmatprep.subr.mxu0 0.0
    %249 = vmatpush1.msra.mxu0 0.0
    %250 = vmatprep.subr.mxu0 %v105
    %251 = vmatpush1.msra.mxu0 %v103
    %252 = vmatprep.subr.mxu0 0.0
    %253 = vmatpush2.msra.mxu0 0.0
    %254 = vmatprep.subr.mxu0 0.0
    %255 = vmatpush2.msra.mxu0 0.0
    %256 = vmatprep.subr.mxu0 0.0
    %257 = vmatpush2.msra.mxu0 0.0
    %258 = vmatprep.subr.mxu0 0.0
    %259 = vmatpush2.msra.mxu0 0.0
    %260 = vmatprep.subr.mxu0 0.0
    %261 = vmatpush2.msra.mxu0 0.0
    %262 = vmatprep.subr.mxu0 0.0
    %263 = vmatpush2.msra.mxu0 0.0
    %264 = vmatprep.subr.mxu0 0.0
    %265 = vmatpush2.msra.mxu0 0.0
    %266 = vmatprep.subr.mxu0 0.0
    %267 = vmatpush2.msra.mxu0 0.0
    %268 = vmatprep.subr.mxu0 0.0
    %269 = vmatpush2.msra.mxu0 0.0
    %270 = vmatprep.subr.mxu0 0.0
    %271 = vmatpush2.msra.mxu0 0.0
    %272 = vmatprep.subr.mxu0 0.0
    %273 = vmatpush2.msra.mxu0 0.0
    %274 = vmatprep.subr.mxu0 0.0
    %275 = vmatpush2.msra.mxu0 0.0
    %276 = vmatprep.subr.mxu0 0.0
    %277 = vmatpush2.msra.mxu0 0.0
    %278 = vmatprep.subr.mxu0 0.0
    %279 = vmatpush2.msra.mxu0 0.0
    %280 = vmatprep.subr.mxu0 0.0
    %281 = vmatpush2.msra.mxu0 0.0
    %282 = vmatprep.subr.mxu0 0.0
    %283 = vmatpush2.msra.mxu0 0.0
    %284 = vmatprep.mubr.f32.mxu0 0.0
    %285 = vmatmul.mubr.f32.gmra.mxu0 %v75
    %v286 = vpop.f32.mrf.mxu0
    %v287 = vadd.f32 %v60, %v286
    %v288 = vpop.f32.mrf.mxu0
    %v289 = vadd.f32 %v64, %v288
    %290 = vmatprep.mubr.f32.mxu0 0.0
    %291 = vmatmul.mubr.f32.gmra.mxu0 %v78
    %v292 = vpop.f32.mrf.mxu0
    %v293 = vadd.f32 %v60, %v292
    %v294 = vpop.f32.mrf.mxu0
    %v295 = vadd.f32 %v64, %v294
    %296 = vmatprep.mubr.f32.mxu0 0.0
    %297 = vmatmul.mubr.f32.gmra.mxu0 %v81
    %v298 = vpop.f32.mrf.mxu0
    %v299 = vadd.f32 %v60, %v298
    %v300 = vpop.f32.mrf.mxu0
    %v301 = vadd.f32 %v64, %v300
    %302 = vmatprep.mubr.f32.mxu0 0.0
    %303 = vmatmul.mubr.f32.gmra.mxu0 %v84
    %v304 = vpop.f32.mrf.mxu0
    %v305 = vadd.f32 %v60, %v304
    %v306 = vpop.f32.mrf.mxu0
    %v307 = vadd.f32 %v64, %v306
    %308 = vmatprep.mubr.f32.mxu0 0.0
    %309 = vmatmul.mubr.f32.gmra.mxu0 %v87
    %v310 = vpop.f32.mrf.mxu0
    %v311 = vadd.f32 %v60, %v310
    %v312 = vpop.f32.mrf.mxu0
    %v313 = vadd.f32 %v64, %v312
    %314 = vmatprep.mubr.f32.mxu0 0.0
    %315 = vmatmul.mubr.f32.gmra.mxu0 %v90
    %v316 = vpop.f32.mrf.mxu0
    %v317 = vadd.f32 %v60, %v316
    %v318 = vpop.f32.mrf.mxu0
    %v319 = vadd.f32 %v64, %v318
    %320 = vmatprep.mubr.f32.mxu0 0.0
    %321 = vmatmul.mubr.f32.gmra.mxu0 %v93
    %v322 = vpop.f32.mrf.mxu0
    %v323 = vadd.f32 %v60, %v322
    %v324 = vpop.f32.mrf.mxu0
    %v325 = vadd.f32 %v64, %v324
    %326 = vmatprep.mubr.f32.mxu0 0.0
    %327 = vmatmul.mubr.f32.gmra.mxu0 %v96
    %v328 = vpop.f32.mrf.mxu0
    %v329 = vadd.f32 %v60, %v328
    %v330 = vpop.f32.mrf.mxu0
    %v331 = vadd.f32 %v64, %v330
    %332 = vdwg.mxu0
    %333 = vst [vmem:[#allocation2] sm:$0xff] %v174
    %334 = vst [vmem:[#allocation2 + $0x8] sm:$0xff] %v176
    %335 = vst [vmem:[#allocation2 + $0x10] sm:$0xff] %v287
    %336 = vst [vmem:[#allocation2 + $0x18] sm:$0xff] %v289
    %337 = vst [vmem:[#allocation2 + $0x20] sm:$0xff] %v180
    %338 = vst [vmem:[#allocation2 + $0x28] sm:$0xff] %v182
    %339 = vst [vmem:[#allocation2 + $0x30] sm:$0xff] %v293
    %340 = vst [vmem:[#allocation2 + $0x38] sm:$0xff] %v295
    %341 = vst [vmem:[#allocation2 + $0x40] sm:$0xff] %v186
    %342 = vst [vmem:[#allocation2 + $0x48] sm:$0xff] %v188
    %343 = vst [vmem:[#allocation2 + $0x50] sm:$0xff] %v299
    %344 = vst [vmem:[#allocation2 + $0x58] sm:$0xff] %v301
    %345 = vst [vmem:[#allocation2 + $0x60] sm:$0xff] %v192
    %346 = vst [vmem:[#allocation2 + $0x68] sm:$0xff] %v194
    %347 = vst [vmem:[#allocation2 + $0x70] sm:$0xff] %v305
    %348 = vst [vmem:[#allocation2 + $0x78] sm:$0xff] %v307
    %349 = vst [vmem:[#allocation2 + $0x80] sm:$0xff] %v198
    %350 = vst [vmem:[#allocation2 + $0x88] sm:$0xff] %v200
    %351 = vst [vmem:[#allocation2 + $0x90] sm:$0xff] %v311
    %352 = vst [vmem:[#allocation2 + $0x98] sm:$0xff] %v313
    %353 = vst [vmem:[#allocation2 + $0xa0] sm:$0xff] %v204
    %354 = vst [vmem:[#allocation2 + $0xa8] sm:$0xff] %v206
    %355 = vst [vmem:[#allocation2 + $0xb0] sm:$0xff] %v317
    %356 = vst [vmem:[#allocation2 + $0xb8] sm:$0xff] %v319
    %357 = vst [vmem:[#allocation2 + $0xc0] sm:$0xff] %v210
    %358 = vst [vmem:[#allocation2 + $0xc8] sm:$0xff] %v212
    %359 = vst [vmem:[#allocation2 + $0xd0] sm:$0xff] %v323
    %360 = vst [vmem:[#allocation2 + $0xd8] sm:$0xff] %v325
    %361 = vst [vmem:[#allocation2 + $0xe0] sm:$0xff] %v216
    %362 = vst [vmem:[#allocation2 + $0xe8] sm:$0xff] %v218
    %363 = vst [vmem:[#allocation2 + $0xf0] sm:$0xff] %v329
    %364 = vst [vmem:[#allocation2 + $0xf8] sm:$0xff] %v331
    %v365 = vld [vmem:[#allocation2] sm:$0xff]
    %v366 = vld [vmem:[#allocation2 + $0x8] sm:$0xff]
    %v367 = vld [vmem:[#allocation2 + $0x10] sm:$0xff]
    %v368 = vld [vmem:[#allocation2 + $0x18] sm:$0xff]
    %v369 = vld [vmem:[#allocation4] sm:$0xff]
    %v370 = vld [vmem:[#allocation4 + $0x8] sm:$0xff]
    %v371 = vld [vmem:[#allocation4 + $0x10] sm:$0xff]
    %v372 = vld [vmem:[#allocation4 + $0x18] sm:$0xff]
    %v373 = vld [vmem:[#allocation4 + $0x20] sm:$0xff]
    %v374 = vld [vmem:[#allocation4 + $0x28] sm:$0xff]
    %v375 = vld [vmem:[#allocation4 + $0x30] sm:$0xff]
    %v376 = vld [vmem:[#allocation4 + $0x38] sm:$0xff]
    %v377 = vld [vmem:[#allocation4 + $0x40] sm:$0xff]
    %v378 = vld [vmem:[#allocation4 + $0x48] sm:$0xff]
    %v379 = vld [vmem:[#allocation4 + $0x50] sm:$0xff]
    %v380 = vld [vmem:[#allocation4 + $0x58] sm:$0xff]
    %v381 = vld [vmem:[#allocation4 + $0x60] sm:$0xff]
    %v382 = vld [vmem:[#allocation4 + $0x68] sm:$0xff]
    %v383 = vld [vmem:[#allocation4 + $0x70] sm:$0xff]
    %v384 = vld [vmem:[#allocation4 + $0x78] sm:$0xff]
    %v385 = vld [vmem:[#allocation4 + $0x80] sm:$0xff]
    %v386 = vld [vmem:[#allocation4 + $0x88] sm:$0xff]
    %v387 = vld [vmem:[#allocation4 + $0x90] sm:$0xff]
    %v388 = vld [vmem:[#allocation4 + $0x98] sm:$0xff]
    %v389 = vld [vmem:[#allocation4 + $0xa0] sm:$0xff]
    %v390 = vld [vmem:[#allocation4 + $0xa8] sm:$0xff]
    %v391 = vld [vmem:[#allocation4 + $0xb0] sm:$0xff]
    %v392 = vld [vmem:[#allocation4 + $0xb8] sm:$0xff]
    %v393 = vld [vmem:[#allocation4 + $0xc0] sm:$0xff]
    %v394 = vld [vmem:[#allocation4 + $0xc8] sm:$0xff]
    %v395 = vld [vmem:[#allocation4 + $0xd0] sm:$0xff]
    %v396 = vld [vmem:[#allocation4 + $0xd8] sm:$0xff]
    %v397 = vld [vmem:[#allocation4 + $0xe0] sm:$0xff]
    %v398 = vld [vmem:[#allocation4 + $0xe8] sm:$0xff]
    %v399 = vld [vmem:[#allocation4 + $0xf0] sm:$0xff]
    %v400 = vld [vmem:[#allocation4 + $0xf8] sm:$0xff]
    %v401 = vld [vmem:[#allocation4 + $0x100] sm:$0xff]
    %v402 = vld [vmem:[#allocation4 + $0x108] sm:$0xff]
    %v403 = vld [vmem:[#allocation4 + $0x110] sm:$0xff]
    %v404 = vld [vmem:[#allocation4 + $0x118] sm:$0xff]
    %v405 = vld [vmem:[#allocation4 + $0x120] sm:$0xff]
    %v406 = vld [vmem:[#allocation4 + $0x128] sm:$0xff]
    %v407 = vld [vmem:[#allocation4 + $0x130] sm:$0xff]
    %v408 = vld [vmem:[#allocation4 + $0x138] sm:$0xff]
    %v409 = vld [vmem:[#allocation4 + $0x140] sm:$0xff]
    %v410 = vld [vmem:[#allocation4 + $0x148] sm:$0xff]
    %v411 = vld [vmem:[#allocation4 + $0x150] sm:$0xff]
    %v412 = vld [vmem:[#allocation4 + $0x158] sm:$0xff]
    %v413 = vld [vmem:[#allocation4 + $0x160] sm:$0xff]
    %v414 = vld [vmem:[#allocation4 + $0x168] sm:$0xff]
    %v415 = vld [vmem:[#allocation4 + $0x170] sm:$0xff]
    %v416 = vld [vmem:[#allocation4 + $0x178] sm:$0xff]
    %v417 = vld [vmem:[#allocation4 + $0x180] sm:$0xff]
    %v418 = vld [vmem:[#allocation4 + $0x188] sm:$0xff]
    %v419 = vld [vmem:[#allocation4 + $0x190] sm:$0xff]
    %v420 = vld [vmem:[#allocation4 + $0x198] sm:$0xff]
    %v421 = vld [vmem:[#allocation4 + $0x1a0] sm:$0xff]
    %v422 = vld [vmem:[#allocation4 + $0x1a8] sm:$0xff]
    %v423 = vld [vmem:[#allocation4 + $0x1b0] sm:$0xff]
    %v424 = vld [vmem:[#allocation4 + $0x1b8] sm:$0xff]
    %v425 = vld [vmem:[#allocation4 + $0x1c0] sm:$0xff]
    %v426 = vld [vmem:[#allocation4 + $0x1c8] sm:$0xff]
    %v427 = vld [vmem:[#allocation4 + $0x1d0] sm:$0xff]
    %v428 = vld [vmem:[#allocation4 + $0x1d8] sm:$0xff]
    %v429 = vld [vmem:[#allocation4 + $0x1e0] sm:$0xff]
    %v430 = vld [vmem:[#allocation4 + $0x1e8] sm:$0xff]
    %v431 = vld [vmem:[#allocation4 + $0x1f0] sm:$0xff]
    %v432 = vld [vmem:[#allocation4 + $0x1f8] sm:$0xff]
    %433 = vmatprep.subr.mxu0 %v430
    %434 = vmatpush1.msra.mxu0 %v429
    %435 = vmatprep.subr.mxu0 %v426
    %436 = vmatpush1.msra.mxu0 %v425
    %437 = vmatprep.subr.mxu0 %v422
    %438 = vmatpush1.msra.mxu0 %v421
    %439 = vmatprep.subr.mxu0 %v418
    %440 = vmatpush1.msra.mxu0 %v417
    %441 = vmatprep.subr.mxu0 %v414
    %442 = vmatpush1.msra.mxu0 %v413
    %443 = vmatprep.subr.mxu0 %v410
    %444 = vmatpush1.msra.mxu0 %v409
    %445 = vmatprep.subr.mxu0 %v406
    %446 = vmatpush1.msra.mxu0 %v405
    %447 = vmatprep.subr.mxu0 %v402
    %448 = vmatpush1.msra.mxu0 %v401
    %449 = vmatprep.subr.mxu0 %v398
    %450 = vmatpush1.msra.mxu0 %v397
    %451 = vmatprep.subr.mxu0 %v394
    %452 = vmatpush1.msra.mxu0 %v393
    %453 = vmatprep.subr.mxu0 %v390
    %454 = vmatpush1.msra.mxu0 %v389
    %455 = vmatprep.subr.mxu0 %v386
    %456 = vmatpush1.msra.mxu0 %v385
    %457 = vmatprep.subr.mxu0 %v382
    %458 = vmatpush1.msra.mxu0 %v381
    %459 = vmatprep.subr.mxu0 %v378
    %460 = vmatpush1.msra.mxu0 %v377
    %461 = vmatprep.subr.mxu0 %v374
    %462 = vmatpush1.msra.mxu0 %v373
    %463 = vmatprep.subr.mxu0 %v370
    %464 = vmatpush1.msra.mxu0 %v369
    %465 = vmatprep.subr.mxu0 0.0
    %466 = vmatpush2.msra.mxu0 0.0
    %467 = vmatprep.subr.mxu0 0.0
    %468 = vmatpush2.msra.mxu0 0.0
    %469 = vmatprep.subr.mxu0 0.0
    %470 = vmatpush2.msra.mxu0 0.0
    %471 = vmatprep.subr.mxu0 0.0
    %472 = vmatpush2.msra.mxu0 0.0
    %473 = vmatprep.subr.mxu0 0.0
    %474 = vmatpush2.msra.mxu0 0.0
    %475 = vmatprep.subr.mxu0 0.0
    %476 = vmatpush2.msra.mxu0 0.0
    %477 = vmatprep.subr.mxu0 0.0
    %478 = vmatpush2.msra.mxu0 0.0
    %479 = vmatprep.subr.mxu0 0.0
    %480 = vmatpush2.msra.mxu0 0.0
    %481 = vmatprep.subr.mxu0 0.0
    %482 = vmatpush2.msra.mxu0 0.0
    %483 = vmatprep.subr.mxu0 0.0
    %484 = vmatpush2.msra.mxu0 0.0
    %485 = vmatprep.subr.mxu0 0.0
    %486 = vmatpush2.msra.mxu0 0.0
    %487 = vmatprep.subr.mxu0 0.0
    %488 = vmatpush2.msra.mxu0 0.0
    %489 = vmatprep.subr.mxu0 0.0
    %490 = vmatpush2.msra.mxu0 0.0
    %491 = vmatprep.subr.mxu0 0.0
    %492 = vmatpush2.msra.mxu0 0.0
    %493 = vmatprep.subr.mxu0 0.0
    %494 = vmatpush2.msra.mxu0 0.0
    %495 = vmatprep.subr.mxu0 0.0
    %496 = vmatpush2.msra.mxu0 0.0
    %497 = vmatprep.mubr.f32.mxu0 0.0
    %498 = vmatmul.mubr.f32.gmra.mxu0 0.0
    %v499 = vpop.f32.mrf.mxu0
    %v500 = vadd.f32 0.0, %v499
    %v501 = vpop.f32.mrf.mxu0
    %v502 = vadd.f32 0.0, %v501
    %503 = vdwg.mxu0
    %504 = vmatprep.subr.mxu0 %v432
    %505 = vmatpush1.msra.mxu0 %v431
    %506 = vmatprep.subr.mxu0 %v428
    %507 = vmatpush1.msra.mxu0 %v427
    %508 = vmatprep.subr.mxu0 %v424
    %509 = vmatpush1.msra.mxu0 %v423
    %510 = vmatprep.subr.mxu0 %v420
    %511 = vmatpush1.msra.mxu0 %v419
    %512 = vmatprep.subr.mxu0 %v416
    %513 = vmatpush1.msra.mxu0 %v415
    %514 = vmatprep.subr.mxu0 %v412
    %515 = vmatpush1.msra.mxu0 %v411
    %516 = vmatprep.subr.mxu0 %v408
    %517 = vmatpush1.msra.mxu0 %v407
    %518 = vmatprep.subr.mxu0 %v404
    %519 = vmatpush1.msra.mxu0 %v403
    %520 = vmatprep.subr.mxu0 %v400
    %521 = vmatpush1.msra.mxu0 %v399
    %522 = vmatprep.subr.mxu0 %v396
    %523 = vmatpush1.msra.mxu0 %v395
    %524 = vmatprep.subr.mxu0 %v392
    %525 = vmatpush1.msra.mxu0 %v391
    %526 = vmatprep.subr.mxu0 %v388
    %527 = vmatpush1.msra.mxu0 %v387
    %528 = vmatprep.subr.mxu0 %v384
    %529 = vmatpush1.msra.mxu0 %v383
    %530 = vmatprep.subr.mxu0 %v380
    %531 = vmatpush1.msra.mxu0 %v379
    %532 = vmatprep.subr.mxu0 %v376
    %533 = vmatpush1.msra.mxu0 %v375
    %534 = vmatprep.subr.mxu0 %v372
    %535 = vmatpush1.msra.mxu0 %v371
    %536 = vmatprep.subr.mxu0 0.0
    %537 = vmatpush2.msra.mxu0 0.0
    %538 = vmatprep.subr.mxu0 0.0
    %539 = vmatpush2.msra.mxu0 0.0
    %540 = vmatprep.subr.mxu0 0.0
    %541 = vmatpush2.msra.mxu0 0.0
    %542 = vmatprep.subr.mxu0 0.0
    %543 = vmatpush2.msra.mxu0 0.0
    %544 = vmatprep.subr.mxu0 0.0
    %545 = vmatpush2.msra.mxu0 0.0
    %546 = vmatprep.subr.mxu0 0.0
    %547 = vmatpush2.msra.mxu0 0.0
    %548 = vmatprep.subr.mxu0 0.0
    %549 = vmatpush2.msra.mxu0 0.0
    %550 = vmatprep.subr.mxu0 0.0
    %551 = vmatpush2.msra.mxu0 0.0
    %552 = vmatprep.subr.mxu0 0.0
    %553 = vmatpush2.msra.mxu0 0.0
    %554 = vmatprep.subr.mxu0 0.0
    %555 = vmatpush2.msra.mxu0 0.0
    %556 = vmatprep.subr.mxu0 0.0
    %557 = vmatpush2.msra.mxu0 0.0
    %558 = vmatprep.subr.mxu0 0.0
    %559 = vmatpush2.msra.mxu0 0.0
    %560 = vmatprep.subr.mxu0 0.0
    %561 = vmatpush2.msra.mxu0 0.0
    %562 = vmatprep.subr.mxu0 0.0
    %563 = vmatpush2.msra.mxu0 0.0
    %564 = vmatprep.subr.mxu0 0.0
    %565 = vmatpush2.msra.mxu0 0.0
    %566 = vmatprep.subr.mxu0 0.0
    %567 = vmatpush2.msra.mxu0 0.0
    %568 = vmatprep.mubr.f32.mxu0 0.0
    %569 = vmatmul.mubr.f32.gmra.mxu0 0.0
    %v570 = vpop.f32.mrf.mxu0
    %v571 = vadd.f32 0.0, %v570
    %v572 = vpop.f32.mrf.mxu0
    %v573 = vadd.f32 0.0, %v572
    %574 = vdwg.mxu0
    %v575 = vadd.f32 %v365, %v500
    %v576 = vadd.f32 %v366, %v502
    %v577 = vadd.f32 %v367, %v571
    %v578 = vadd.f32 %v368, %v573
    %v579 = vxor.u32 %v575, 2147483648
    %v580 = vmul.f32 %v579, 1.442695
    %v581 = vpow.pop %v580
    %v582 = vadd.f32 %v581, 1.0
    %v583 = vrcp.pop %v582
    %v584 = vmul.f32 1.0, %v583
    %v585 = vxor.u32 %v576, 2147483648
    %v586 = vmul.f32 %v585, 1.442695
    %v587 = vpow.pop %v586
    %v588 = vadd.f32 %v587, 1.0
    %v589 = vrcp.pop %v588
    %v590 = vmul.f32 1.0, %v589
    %v591 = vtanh.pop %v577
    %v592 = vxor.u32 %v578, 2147483648
    %v593 = vmul.f32 %v592, 1.442695
    %v594 = vpow.pop %v593
    %v595 = vadd.f32 %v594, 1.0
    %v596 = vrcp.pop %v595
    %v597 = vmul.f32 1.0, %v596
    %v598 = vmul.f32 %v590, 0.0
    %v599 = vmul.f32 %v584, %v591
    %v600 = vadd.f32 %v598, %v599
    %v601 = vtanh.pop %v600
    %v602 = vmul.f32 %v597, %v601
    %603 = vst [vmem:[#allocation3] sm:$0xff] %v602
    %s604 = scalar_lea.vmem [#allocation2], 32
    %v605 = vld [vmem:[%s604] sm:$0xff]
    %v606 = vld [vmem:[%s604 + $0x8] sm:$0xff]
    %v607 = vld [vmem:[%s604 + $0x10] sm:$0xff]
    %v608 = vld [vmem:[%s604 + $0x18] sm:$0xff]
    %v609 = vld [vmem:[#allocation4] sm:$0xff]
    %v610 = vld [vmem:[#allocation4 + $0x8] sm:$0xff]
    %v611 = vld [vmem:[#allocation4 + $0x10] sm:$0xff]
    %v612 = vld [vmem:[#allocation4 + $0x18] sm:$0xff]
    %v613 = vld [vmem:[#allocation4 + $0x20] sm:$0xff]
    %v614 = vld [vmem:[#allocation4 + $0x28] sm:$0xff]
    %v615 = vld [vmem:[#allocation4 + $0x30] sm:$0xff]
    %v616 = vld [vmem:[#allocation4 + $0x38] sm:$0xff]
    %v617 = vld [vmem:[#allocation4 + $0x40] sm:$0xff]
    %v618 = vld [vmem:[#allocation4 + $0x48] sm:$0xff]
    %v619 = vld [vmem:[#allocation4 + $0x50] sm:$0xff]
    %v620 = vld [vmem:[#allocation4 + $0x58] sm:$0xff]
    %v621 = vld [vmem:[#allocation4 + $0x60] sm:$0xff]
    %v622 = vld [vmem:[#allocation4 + $0x68] sm:$0xff]
    %v623 = vld [vmem:[#allocation4 + $0x70] sm:$0xff]
    %v624 = vld [vmem:[#allocation4 + $0x78] sm:$0xff]
    %v625 = vld [vmem:[#allocation4 + $0x80] sm:$0xff]
    %v626 = vld [vmem:[#allocation4 + $0x88] sm:$0xff]
    %v627 = vld [vmem:[#allocation4 + $0x90] sm:$0xff]
    %v628 = vld [vmem:[#allocation4 + $0x98] sm:$0xff]
    %v629 = vld [vmem:[#allocation4 + $0xa0] sm:$0xff]
    %v630 = vld [vmem:[#allocation4 + $0xa8] sm:$0xff]
    %v631 = vld [vmem:[#allocation4 + $0xb0] sm:$0xff]
    %v632 = vld [vmem:[#allocation4 + $0xb8] sm:$0xff]
    %v633 = vld [vmem:[#allocation4 + $0xc0] sm:$0xff]
    %v634 = vld [vmem:[#allocation4 + $0xc8] sm:$0xff]
    %v635 = vld [vmem:[#allocation4 + $0xd0] sm:$0xff]
    %v636 = vld [vmem:[#allocation4 + $0xd8] sm:$0xff]
    %v637 = vld [vmem:[#allocation4 + $0xe0] sm:$0xff]
    %v638 = vld [vmem:[#allocation4 + $0xe8] sm:$0xff]
    %v639 = vld [vmem:[#allocation4 + $0xf0] sm:$0xff]
    %v640 = vld [vmem:[#allocation4 + $0xf8] sm:$0xff]
    %v641 = vld [vmem:[#allocation4 + $0x100] sm:$0xff]
    %v642 = vld [vmem:[#allocation4 + $0x108] sm:$0xff]
    %v643 = vld [vmem:[#allocation4 + $0x110] sm:$0xff]
    %v644 = vld [vmem:[#allocation4 + $0x118] sm:$0xff]
    %v645 = vld [vmem:[#allocation4 + $0x120] sm:$0xff]
    %v646 = vld [vmem:[#allocation4 + $0x128] sm:$0xff]
    %v647 = vld [vmem:[#allocation4 + $0x130] sm:$0xff]
    %v648 = vld [vmem:[#allocation4 + $0x138] sm:$0xff]
    %v649 = vld [vmem:[#allocation4 + $0x140] sm:$0xff]
    %v650 = vld [vmem:[#allocation4 + $0x148] sm:$0xff]
    %v651 = vld [vmem:[#allocation4 + $0x150] sm:$0xff]
    %v652 = vld [vmem:[#allocation4 + $0x158] sm:$0xff]
    %v653 = vld [vmem:[#allocation4 + $0x160] sm:$0xff]
    %v654 = vld [vmem:[#allocation4 + $0x168] sm:$0xff]
    %v655 = vld [vmem:[#allocation4 + $0x170] sm:$0xff]
    %v656 = vld [vmem:[#allocation4 + $0x178] sm:$0xff]
    %v657 = vld [vmem:[#allocation4 + $0x180] sm:$0xff]
    %v658 = vld [vmem:[#allocation4 + $0x188] sm:$0xff]
    %v659 = vld [vmem:[#allocation4 + $0x190] sm:$0xff]
    %v660 = vld [vmem:[#allocation4 + $0x198] sm:$0xff]
    %v661 = vld [vmem:[#allocation4 + $0x1a0] sm:$0xff]
    %v662 = vld [vmem:[#allocation4 + $0x1a8] sm:$0xff]
    %v663 = vld [vmem:[#allocation4 + $0x1b0] sm:$0xff]
    %v664 = vld [vmem:[#allocation4 + $0x1b8] sm:$0xff]
    %v665 = vld [vmem:[#allocation4 + $0x1c0] sm:$0xff]
    %v666 = vld [vmem:[#allocation4 + $0x1c8] sm:$0xff]
    %v667 = vld [vmem:[#allocation4 + $0x1d0] sm:$0xff]
    %v668 = vld [vmem:[#allocation4 + $0x1d8] sm:$0xff]
    %v669 = vld [vmem:[#allocation4 + $0x1e0] sm:$0xff]
    %v670 = vld [vmem:[#allocation4 + $0x1e8] sm:$0xff]
    %v671 = vld [vmem:[#allocation4 + $0x1f0] sm:$0xff]
    %v672 = vld [vmem:[#allocation4 + $0x1f8] sm:$0xff]
    %673 = vmatprep.subr.mxu0 %v670
    %674 = vmatpush1.msra.mxu0 %v669
    %675 = vmatprep.subr.mxu0 %v666
    %676 = vmatpush1.msra.mxu0 %v665
    %677 = vmatprep.subr.mxu0 %v662
    %678 = vmatpush1.msra.mxu0 %v661
    %679 = vmatprep.subr.mxu0 %v658
    %680 = vmatpush1.msra.mxu0 %v657
    %681 = vmatprep.subr.mxu0 %v654
    %682 = vmatpush1.msra.mxu0 %v653
    %683 = vmatprep.subr.mxu0 %v650
    %684 = vmatpush1.msra.mxu0 %v649
    %685 = vmatprep.subr.mxu0 %v646
    %686 = vmatpush1.msra.mxu0 %v645
    %687 = vmatprep.subr.mxu0 %v642
    %688 = vmatpush1.msra.mxu0 %v641
    %689 = vmatprep.subr.mxu0 %v638
    %690 = vmatpush1.msra.mxu0 %v637
    %691 = vmatprep.subr.mxu0 %v634
    %692 = vmatpush1.msra.mxu0 %v633
    %693 = vmatprep.subr.mxu0 %v630
    %694 = vmatpush1.msra.mxu0 %v629
    %695 = vmatprep.subr.mxu0 %v626
    %696 = vmatpush1.msra.mxu0 %v625
    %697 = vmatprep.subr.mxu0 %v622
    %698 = vmatpush1.msra.mxu0 %v621
    %699 = vmatprep.subr.mxu0 %v618
    %700 = vmatpush1.msra.mxu0 %v617
    %701 = vmatprep.subr.mxu0 %v614
    %702 = vmatpush1.msra.mxu0 %v613
    %703 = vmatprep.subr.mxu0 %v610
    %704 = vmatpush1.msra.mxu0 %v609
    %705 = vmatprep.subr.mxu0 0.0
    %706 = vmatpush2.msra.mxu0 0.0
    %707 = vmatprep.subr.mxu0 0.0
    %708 = vmatpush2.msra.mxu0 0.0
    %709 = vmatprep.subr.mxu0 0.0
    %710 = vmatpush2.msra.mxu0 0.0
    %711 = vmatprep.subr.mxu0 0.0
    %712 = vmatpush2.msra.mxu0 0.0
    %713 = vmatprep.subr.mxu0 0.0
    %714 = vmatpush2.msra.mxu0 0.0
    %715 = vmatprep.subr.mxu0 0.0
    %716 = vmatpush2.msra.mxu0 0.0
    %717 = vmatprep.subr.mxu0 0.0
    %718 = vmatpush2.msra.mxu0 0.0
    %719 = vmatprep.subr.mxu0 0.0
    %720 = vmatpush2.msra.mxu0 0.0
    %721 = vmatprep.subr.mxu0 0.0
    %722 = vmatpush2.msra.mxu0 0.0
    %723 = vmatprep.subr.mxu0 0.0
    %724 = vmatpush2.msra.mxu0 0.0
    %725 = vmatprep.subr.mxu0 0.0
    %726 = vmatpush2.msra.mxu0 0.0
    %727 = vmatprep.subr.mxu0 0.0
    %728 = vmatpush2.msra.mxu0 0.0
    %729 = vmatprep.subr.mxu0 0.0
    %730 = vmatpush2.msra.mxu0 0.0
    %731 = vmatprep.subr.mxu0 0.0
    %732 = vmatpush2.msra.mxu0 0.0
    %733 = vmatprep.subr.mxu0 0.0
    %734 = vmatpush2.msra.mxu0 0.0
    %735 = vmatprep.subr.mxu0 0.0
    %736 = vmatpush2.msra.mxu0 0.0
    %737 = vmatprep.mubr.f32.mxu0 0.0
    %738 = vmatmul.mubr.f32.gmra.mxu0 %v602
    %v739 = vpop.f32.mrf.mxu0
    %v740 = vadd.f32 0.0, %v739
    %v741 = vpop.f32.mrf.mxu0
    %v742 = vadd.f32 0.0, %v741
    %743 = vdwg.mxu0
    %744 = vmatprep.subr.mxu0 %v672
    %745 = vmatpush1.msra.mxu0 %v671
    %746 = vmatprep.subr.mxu0 %v668
    %747 = vmatpush1.msra.mxu0 %v667
    %748 = vmatprep.subr.mxu0 %v664
    %749 = vmatpush1.msra.mxu0 %v663
    %750 = vmatprep.subr.mxu0 %v660
    %751 = vmatpush1.msra.mxu0 %v659
    %752 = vmatprep.subr.mxu0 %v656
    %753 = vmatpush1.msra.mxu0 %v655
    %754 = vmatprep.subr.mxu0 %v652
    %755 = vmatpush1.msra.mxu0 %v651
    %756 = vmatprep.subr.mxu0 %v648
    %757 = vmatpush1.msra.mxu0 %v647
    %758 = vmatprep.subr.mxu0 %v644
    %759 = vmatpush1.msra.mxu0 %v643
    %760 = vmatprep.subr.mxu0 %v640
    %761 = vmatpush1.msra.mxu0 %v639
    %762 = vmatprep.subr.mxu0 %v636
    %763 = vmatpush1.msra.mxu0 %v635
    %764 = vmatprep.subr.mxu0 %v632
    %765 = vmatpush1.msra.mxu0 %v631
    %766 = vmatprep.subr.mxu0 %v628
    %767 = vmatpush1.msra.mxu0 %v627
    %768 = vmatprep.subr.mxu0 %v624
    %769 = vmatpush1.msra.mxu0 %v623
    %770 = vmatprep.subr.mxu0 %v620
    %771 = vmatpush1.msra.mxu0 %v619
    %772 = vmatprep.subr.mxu0 %v616
    %773 = vmatpush1.msra.mxu0 %v615
    %774 = vmatprep.subr.mxu0 %v612
    %775 = vmatpush1.msra.mxu0 %v611
    %776 = vmatprep.subr.mxu0 0.0
    %777 = vmatpush2.msra.mxu0 0.0
    %778 = vmatprep.subr.mxu0 0.0
    %779 = vmatpush2.msra.mxu0 0.0
    %780 = vmatprep.subr.mxu0 0.0
    %781 = vmatpush2.msra.mxu0 0.0
    %782 = vmatprep.subr.mxu0 0.0
    %783 = vmatpush2.msra.mxu0 0.0
    %784 = vmatprep.subr.mxu0 0.0
    %785 = vmatpush2.msra.mxu0 0.0
    %786 = vmatprep.subr.mxu0 0.0
    %787 = vmatpush2.msra.mxu0 0.0
    %788 = vmatprep.subr.mxu0 0.0
    %789 = vmatpush2.msra.mxu0 0.0
    %790 = vmatprep.subr.mxu0 0.0
    %791 = vmatpush2.msra.mxu0 0.0
    %792 = vmatprep.subr.mxu0 0.0
    %793 = vmatpush2.msra.mxu0 0.0
    %794 = vmatprep.subr.mxu0 0.0
    %795 = vmatpush2.msra.mxu0 0.0
    %796 = vmatprep.subr.mxu0 0.0
    %797 = vmatpush2.msra.mxu0 0.0
    %798 = vmatprep.subr.mxu0 0.0
    %799 = vmatpush2.msra.mxu0 0.0
    %800 = vmatprep.subr.mxu0 0.0
    %801 = vmatpush2.msra.mxu0 0.0
    %802 = vmatprep.subr.mxu0 0.0
    %803 = vmatpush2.msra.mxu0 0.0
    %804 = vmatprep.subr.mxu0 0.0
    %805 = vmatpush2.msra.mxu0 0.0
    %806 = vmatprep.subr.mxu0 0.0
    %807 = vmatpush2.msra.mxu0 0.0
    %808 = vmatprep.mubr.f32.mxu0 0.0
    %809 = vmatmul.mubr.f32.gmra.mxu0 %v602
    %v810 = vpop.f32.mrf.mxu0
    %v811 = vadd.f32 0.0, %v810
    %v812 = vpop.f32.mrf.mxu0
    %v813 = vadd.f32 0.0, %v812
    %814 = vdwg.mxu0
    %v815 = vadd.f32 %v605, %v740
    %v816 = vadd.f32 %v606, %v742
    %v817 = vadd.f32 %v607, %v811
    %v818 = vadd.f32 %v608, %v813
    %v819 = vxor.u32 %v815, 2147483648
    %v820 = vmul.f32 %v819, 1.442695
    %v821 = vpow.pop %v820
    %v822 = vadd.f32 %v821, 1.0
    %v823 = vrcp.pop %v822
    %v824 = vmul.f32 1.0, %v823
    %v825 = vxor.u32 %v816, 2147483648
    %v826 = vmul.f32 %v825, 1.442695
    %v827 = vpow.pop %v826
    %v828 = vadd.f32 %v827, 1.0
    %v829 = vrcp.pop %v828
    %v830 = vmul.f32 1.0, %v829
    %v831 = vtanh.pop %v817
    %v832 = vxor.u32 %v818, 2147483648
    %v833 = vmul.f32 %v832, 1.442695
    %v834 = vpow.pop %v833
    %v835 = vadd.f32 %v834, 1.0
    %v836 = vrcp.pop %v835
    %v837 = vmul.f32 1.0, %v836
    %v838 = vmul.f32 %v830, %v600
    %v839 = vmul.f32 %v824, %v831
    %v840 = vadd.f32 %v838, %v839
    %v841 = vtanh.pop %v840
    %v842 = vmul.f32 %v837, %v841
    %s843 = scalar_lea.vmem [#allocation3], 8
    %844 = vst [vmem:[%s843] sm:$0xff] %v842
    %s845 = scalar_lea.vmem [#allocation2], 64
    %v846 = vld [vmem:[%s845] sm:$0xff]
    %v847 = vld [vmem:[%s845 + $0x8] sm:$0xff]
    %v848 = vld [vmem:[%s845 + $0x10] sm:$0xff]
    %v849 = vld [vmem:[%s845 + $0x18] sm:$0xff]
    %v850 = vld [vmem:[#allocation4] sm:$0xff]
    %v851 = vld [vmem:[#allocation4 + $0x8] sm:$0xff]
    %v852 = vld [vmem:[#allocation4 + $0x10] sm:$0xff]
    %v853 = vld [vmem:[#allocation4 + $0x18] sm:$0xff]
    %v854 = vld [vmem:[#allocation4 + $0x20] sm:$0xff]
    %v855 = vld [vmem:[#allocation4 + $0x28] sm:$0xff]
    %v856 = vld [vmem:[#allocation4 + $0x30] sm:$0xff]
    %v857 = vld [vmem:[#allocation4 + $0x38] sm:$0xff]
    %v858 = vld [vmem:[#allocation4 + $0x40] sm:$0xff]
    %v859 = vld [vmem:[#allocation4 + $0x48] sm:$0xff]
    %v860 = vld [vmem:[#allocation4 + $0x50] sm:$0xff]
    %v861 = vld [vmem:[#allocation4 + $0x58] sm:$0xff]
    %v862 = vld [vmem:[#allocation4 + $0x60] sm:$0xff]
    %v863 = vld [vmem:[#allocation4 + $0x68] sm:$0xff]
    %v864 = vld [vmem:[#allocation4 + $0x70] sm:$0xff]
    %v865 = vld [vmem:[#allocation4 + $0x78] sm:$0xff]
    %v866 = vld [vmem:[#allocation4 + $0x80] sm:$0xff]
    %v867 = vld [vmem:[#allocation4 + $0x88] sm:$0xff]
    %v868 = vld [vmem:[#allocation4 + $0x90] sm:$0xff]
    %v869 = vld [vmem:[#allocation4 + $0x98] sm:$0xff]
    %v870 = vld [vmem:[#allocation4 + $0xa0] sm:$0xff]
    %v871 = vld [vmem:[#allocation4 + $0xa8] sm:$0xff]
    %v872 = vld [vmem:[#allocation4 + $0xb0] sm:$0xff]
    %v873 = vld [vmem:[#allocation4 + $0xb8] sm:$0xff]
    %v874 = vld [vmem:[#allocation4 + $0xc0] sm:$0xff]
    %v875 = vld [vmem:[#allocation4 + $0xc8] sm:$0xff]
    %v876 = vld [vmem:[#allocation4 + $0xd0] sm:$0xff]
    %v877 = vld [vmem:[#allocation4 + $0xd8] sm:$0xff]
    %v878 = vld [vmem:[#allocation4 + $0xe0] sm:$0xff]
    %v879 = vld [vmem:[#allocation4 + $0xe8] sm:$0xff]
    %v880 = vld [vmem:[#allocation4 + $0xf0] sm:$0xff]
    %v881 = vld [vmem:[#allocation4 + $0xf8] sm:$0xff]
    %v882 = vld [vmem:[#allocation4 + $0x100] sm:$0xff]
    %v883 = vld [vmem:[#allocation4 + $0x108] sm:$0xff]
    %v884 = vld [vmem:[#allocation4 + $0x110] sm:$0xff]
    %v885 = vld [vmem:[#allocation4 + $0x118] sm:$0xff]
    %v886 = vld [vmem:[#allocation4 + $0x120] sm:$0xff]
    %v887 = vld [vmem:[#allocation4 + $0x128] sm:$0xff]
    %v888 = vld [vmem:[#allocation4 + $0x130] sm:$0xff]
    %v889 = vld [vmem:[#allocation4 + $0x138] sm:$0xff]
    %v890 = vld [vmem:[#allocation4 + $0x140] sm:$0xff]
    %v891 = vld [vmem:[#allocation4 + $0x148] sm:$0xff]
    %v892 = vld [vmem:[#allocation4 + $0x150] sm:$0xff]
    %v893 = vld [vmem:[#allocation4 + $0x158] sm:$0xff]
    %v894 = vld [vmem:[#allocation4 + $0x160] sm:$0xff]
    %v895 = vld [vmem:[#allocation4 + $0x168] sm:$0xff]
    %v896 = vld [vmem:[#allocation4 + $0x170] sm:$0xff]
    %v897 = vld [vmem:[#allocation4 + $0x178] sm:$0xff]
    %v898 = vld [vmem:[#allocation4 + $0x180] sm:$0xff]
    %v899 = vld [vmem:[#allocation4 + $0x188] sm:$0xff]
    %v900 = vld [vmem:[#allocation4 + $0x190] sm:$0xff]
    %v901 = vld [vmem:[#allocation4 + $0x198] sm:$0xff]
    %v902 = vld [vmem:[#allocation4 + $0x1a0] sm:$0xff]
    %v903 = vld [vmem:[#allocation4 + $0x1a8] sm:$0xff]
    %v904 = vld [vmem:[#allocation4 + $0x1b0] sm:$0xff]
    %v905 = vld [vmem:[#allocation4 + $0x1b8] sm:$0xff]
    %v906 = vld [vmem:[#allocation4 + $0x1c0] sm:$0xff]
    %v907 = vld [vmem:[#allocation4 + $0x1c8] sm:$0xff]
    %v908 = vld [vmem:[#allocation4 + $0x1d0] sm:$0xff]
    %v909 = vld [vmem:[#allocation4 + $0x1d8] sm:$0xff]
    %v910 = vld [vmem:[#allocation4 + $0x1e0] sm:$0xff]
    %v911 = vld [vmem:[#allocation4 + $0x1e8] sm:$0xff]
    %v912 = vld [vmem:[#allocation4 + $0x1f0] sm:$0xff]
    %v913 = vld [vmem:[#allocation4 + $0x1f8] sm:$0xff]
    %914 = vmatprep.subr.mxu0 %v911
    %915 = vmatpush1.msra.mxu0 %v910
    %916 = vmatprep.subr.mxu0 %v907
    %917 = vmatpush1.msra.mxu0 %v906
    %918 = vmatprep.subr.mxu0 %v903
    %919 = vmatpush1.msra.mxu0 %v902
    %920 = vmatprep.subr.mxu0 %v899
    %921 = vmatpush1.msra.mxu0 %v898
    %922 = vmatprep.subr.mxu0 %v895
    %923 = vmatpush1.msra.mxu0 %v894
    %924 = vmatprep.subr.mxu0 %v891
    %925 = vmatpush1.msra.mxu0 %v890
    %926 = vmatprep.subr.mxu0 %v887
    %927 = vmatpush1.msra.mxu0 %v886
    %928 = vmatprep.subr.mxu0 %v883
    %929 = vmatpush1.msra.mxu0 %v882
    %930 = vmatprep.subr.mxu0 %v879
    %931 = vmatpush1.msra.mxu0 %v878
    %932 = vmatprep.subr.mxu0 %v875
    %933 = vmatpush1.msra.mxu0 %v874
    %934 = vmatprep.subr.mxu0 %v871
    %935 = vmatpush1.msra.mxu0 %v870
    %936 = vmatprep.subr.mxu0 %v867
    %937 = vmatpush1.msra.mxu0 %v866
    %938 = vmatprep.subr.mxu0 %v863
    %939 = vmatpush1.msra.mxu0 %v862
    %940 = vmatprep.subr.mxu0 %v859
    %941 = vmatpush1.msra.mxu0 %v858
    %942 = vmatprep.subr.mxu0 %v855
    %943 = vmatpush1.msra.mxu0 %v854
    %944 = vmatprep.subr.mxu0 %v851
    %945 = vmatpush1.msra.mxu0 %v850
    %946 = vmatprep.subr.mxu0 0.0
    %947 = vmatpush2.msra.mxu0 0.0
    %948 = vmatprep.subr.mxu0 0.0
    %949 = vmatpush2.msra.mxu0 0.0
    %950 = vmatprep.subr.mxu0 0.0
    %951 = vmatpush2.msra.mxu0 0.0
    %952 = vmatprep.subr.mxu0 0.0
    %953 = vmatpush2.msra.mxu0 0.0
    %954 = vmatprep.subr.mxu0 0.0
    %955 = vmatpush2.msra.mxu0 0.0
    %956 = vmatprep.subr.mxu0 0.0
    %957 = vmatpush2.msra.mxu0 0.0
    %958 = vmatprep.subr.mxu0 0.0
    %959 = vmatpush2.msra.mxu0 0.0
    %960 = vmatprep.subr.mxu0 0.0
    %961 = vmatpush2.msra.mxu0 0.0
    %962 = vmatprep.subr.mxu0 0.0
    %963 = vmatpush2.msra.mxu0 0.0
    %964 = vmatprep.subr.mxu0 0.0
    %965 = vmatpush2.msra.mxu0 0.0
    %966 = vmatprep.subr.mxu0 0.0
    %967 = vmatpush2.msra.mxu0 0.0
    %968 = vmatprep.subr.mxu0 0.0
    %969 = vmatpush2.msra.mxu0 0.0
    %970 = vmatprep.subr.mxu0 0.0
    %971 = vmatpush2.msra.mxu0 0.0
    %972 = vmatprep.subr.mxu0 0.0
    %973 = vmatpush2.msra.mxu0 0.0
    %974 = vmatprep.subr.mxu0 0.0
    %975 = vmatpush2.msra.mxu0 0.0
    %976 = vmatprep.subr.mxu0 0.0
    %977 = vmatpush2.msra.mxu0 0.0
    %978 = vmatprep.mubr.f32.mxu0 0.0
    %979 = vmatmul.mubr.f32.gmra.mxu0 %v842
    %v980 = vpop.f32.mrf.mxu0
    %v981 = vadd.f32 0.0, %v980
    %v982 = vpop.f32.mrf.mxu0
    %v983 = vadd.f32 0.0, %v982
    %984 = vdwg.mxu0
    %985 = vmatprep.subr.mxu0 %v913
    %986 = vmatpush1.msra.mxu0 %v912
    %987 = vmatprep.subr.mxu0 %v909
    %988 = vmatpush1.msra.mxu0 %v908
    %989 = vmatprep.subr.mxu0 %v905
    %990 = vmatpush1.msra.mxu0 %v904
    %991 = vmatprep.subr.mxu0 %v901
    %992 = vmatpush1.msra.mxu0 %v900
    %993 = vmatprep.subr.mxu0 %v897
    %994 = vmatpush1.msra.mxu0 %v896
    %995 = vmatprep.subr.mxu0 %v893
    %996 = vmatpush1.msra.mxu0 %v892
    %997 = vmatprep.subr.mxu0 %v889
    %998 = vmatpush1.msra.mxu0 %v888
    %999 = vmatprep.subr.mxu0 %v885
    %1000 = vmatpush1.msra.mxu0 %v884
    %1001 = vmatprep.subr.mxu0 %v881
    %1002 = vmatpush1.msra.mxu0 %v880
    %1003 = vmatprep.subr.mxu0 %v877
    %1004 = vmatpush1.msra.mxu0 %v876
    %1005 = vmatprep.subr.mxu0 %v873
    %1006 = vmatpush1.msra.mxu0 %v872
    %1007 = vmatprep.subr.mxu0 %v869
    %1008 = vmatpush1.msra.mxu0 %v868
    %1009 = vmatprep.subr.mxu0 %v865
    %1010 = vmatpush1.msra.mxu0 %v864
    %1011 = vmatprep.subr.mxu0 %v861
    %1012 = vmatpush1.msra.mxu0 %v860
    %1013 = vmatprep.subr.mxu0 %v857
    %1014 = vmatpush1.msra.mxu0 %v856
    %1015 = vmatprep.subr.mxu0 %v853
    %1016 = vmatpush1.msra.mxu0 %v852
    %1017 = vmatprep.subr.mxu0 0.0
    %1018 = vmatpush2.msra.mxu0 0.0
    %1019 = vmatprep.subr.mxu0 0.0
    %1020 = vmatpush2.msra.mxu0 0.0
    %1021 = vmatprep.subr.mxu0 0.0
    %1022 = vmatpush2.msra.mxu0 0.0
    %1023 = vmatprep.subr.mxu0 0.0
    %1024 = vmatpush2.msra.mxu0 0.0
    %1025 = vmatprep.subr.mxu0 0.0
    %1026 = vmatpush2.msra.mxu0 0.0
    %1027 = vmatprep.subr.mxu0 0.0
    %1028 = vmatpush2.msra.mxu0 0.0
    %1029 = vmatprep.subr.mxu0 0.0
    %1030 = vmatpush2.msra.mxu0 0.0
    %1031 = vmatprep.subr.mxu0 0.0
    %1032 = vmatpush2.msra.mxu0 0.0
    %1033 = vmatprep.subr.mxu0 0.0
    %1034 = vmatpush2.msra.mxu0 0.0
    %1035 = vmatprep.subr.mxu0 0.0
    %1036 = vmatpush2.msra.mxu0 0.0
    %1037 = vmatprep.subr.mxu0 0.0
    %1038 = vmatpush2.msra.mxu0 0.0
    %1039 = vmatprep.subr.mxu0 0.0
    %1040 = vmatpush2.msra.mxu0 0.0
    %1041 = vmatprep.subr.mxu0 0.0
    %1042 = vmatpush2.msra.mxu0 0.0
    %1043 = vmatprep.subr.mxu0 0.0
    %1044 = vmatpush2.msra.mxu0 0.0
    %1045 = vmatprep.subr.mxu0 0.0
    %1046 = vmatpush2.msra.mxu0 0.0
    %1047 = vmatprep.subr.mxu0 0.0
    %1048 = vmatpush2.msra.mxu0 0.0
    %1049 = vmatprep.mubr.f32.mxu0 0.0
    %1050 = vmatmul.mubr.f32.gmra.mxu0 %v842
    %v1051 = vpop.f32.mrf.mxu0
    %v1052 = vadd.f32 0.0, %v1051
    %v1053 = vpop.f32.mrf.mxu0
    %v1054 = vadd.f32 0.0, %v1053
    %1055 = vdwg.mxu0
    %v1056 = vadd.f32 %v846, %v981
    %v1057 = vadd.f32 %v847, %v983
    %v1058 = vadd.f32 %v848, %v1052
    %v1059 = vadd.f32 %v849, %v1054
    %v1060 = vxor.u32 %v1056, 2147483648
    %v1061 = vmul.f32 %v1060, 1.442695
    %v1062 = vpow.pop %v1061
    %v1063 = vadd.f32 %v1062, 1.0
    %v1064 = vrcp.pop %v1063
    %v1065 = vmul.f32 1.0, %v1064
    %v1066 = vxor.u32 %v1057, 2147483648
    %v1067 = vmul.f32 %v1066, 1.442695
    %v1068 = vpow.pop %v1067
    %v1069 = vadd.f32 %v1068, 1.0
    %v1070 = vrcp.pop %v1069
    %v1071 = vmul.f32 1.0, %v1070
    %v1072 = vtanh.pop %v1058
    %v1073 = vxor.u32 %v1059, 2147483648
    %v1074 = vmul.f32 %v1073, 1.442695
    %v1075 = vpow.pop %v1074
    %v1076 = vadd.f32 %v1075, 1.0
    %v1077 = vrcp.pop %v1076
    %v1078 = vmul.f32 1.0, %v1077
    %v1079 = vmul.f32 %v1071, %v840
    %v1080 = vmul.f32 %v1065, %v1072
    %v1081 = vadd.f32 %v1079, %v1080
    %v1082 = vtanh.pop %v1081
    %v1083 = vmul.f32 %v1078, %v1082
    %s1084 = scalar_lea.vmem [#allocation3], 16
    %1085 = vst [vmem:[%s1084] sm:$0xff] %v1083
    %s1086 = scalar_lea.vmem [#allocation2], 96
    %v1087 = vld [vmem:[%s1086] sm:$0xff]
    %v1088 = vld [vmem:[%s1086 + $0x8] sm:$0xff]
    %v1089 = vld [vmem:[%s1086 + $0x10] sm:$0xff]
    %v1090 = vld [vmem:[%s1086 + $0x18] sm:$0xff]
    %v1091 = vld [vmem:[#allocation4] sm:$0xff]
    %v1092 = vld [vmem:[#allocation4 + $0x8] sm:$0xff]
    %v1093 = vld [vmem:[#allocation4 + $0x10] sm:$0xff]
    %v1094 = vld [vmem:[#allocation4 + $0x18] sm:$0xff]
    %v1095 = vld [vmem:[#allocation4 + $0x20] sm:$0xff]
    %v1096 = vld [vmem:[#allocation4 + $0x28] sm:$0xff]
    %v1097 = vld [vmem:[#allocation4 + $0x30] sm:$0xff]
    %v1098 = vld [vmem:[#allocation4 + $0x38] sm:$0xff]
    %v1099 = vld [vmem:[#allocation4 + $0x40] sm:$0xff]
    %v1100 = vld [vmem:[#allocation4 + $0x48] sm:$0xff]
    %v1101 = vld [vmem:[#allocation4 + $0x50] sm:$0xff]
    %v1102 = vld [vmem:[#allocation4 + $0x58] sm:$0xff]
    %v1103 = vld [vmem:[#allocation4 + $0x60] sm:$0xff]
    %v1104 = vld [vmem:[#allocation4 + $0x68] sm:$0xff]
    %v1105 = vld [vmem:[#allocation4 + $0x70] sm:$0xff]
    %v1106 = vld [vmem:[#allocation4 + $0x78] sm:$0xff]
    %v1107 = vld [vmem:[#allocation4 + $0x80] sm:$0xff]
    %v1108 = vld [vmem:[#allocation4 + $0x88] sm:$0xff]
    %v1109 = vld [vmem:[#allocation4 + $0x90] sm:$0xff]
    %v1110 = vld [vmem:[#allocation4 + $0x98] sm:$0xff]
    %v1111 = vld [vmem:[#allocation4 + $0xa0] sm:$0xff]
    %v1112 = vld [vmem:[#allocation4 + $0xa8] sm:$0xff]
    %v1113 = vld [vmem:[#allocation4 + $0xb0] sm:$0xff]
    %v1114 = vld [vmem:[#allocation4 + $0xb8] sm:$0xff]
    %v1115 = vld [vmem:[#allocation4 + $0xc0] sm:$0xff]
    %v1116 = vld [vmem:[#allocation4 + $0xc8] sm:$0xff]
    %v1117 = vld [vmem:[#allocation4 + $0xd0] sm:$0xff]
    %v1118 = vld [vmem:[#allocation4 + $0xd8] sm:$0xff]
    %v1119 = vld [vmem:[#allocation4 + $0xe0] sm:$0xff]
    %v1120 = vld [vmem:[#allocation4 + $0xe8] sm:$0xff]
    %v1121 = vld [vmem:[#allocation4 + $0xf0] sm:$0xff]
    %v1122 = vld [vmem:[#allocation4 + $0xf8] sm:$0xff]
    %v1123 = vld [vmem:[#allocation4 + $0x100] sm:$0xff]
    %v1124 = vld [vmem:[#allocation4 + $0x108] sm:$0xff]
    %v1125 = vld [vmem:[#allocation4 + $0x110] sm:$0xff]
    %v1126 = vld [vmem:[#allocation4 + $0x118] sm:$0xff]
    %v1127 = vld [vmem:[#allocation4 + $0x120] sm:$0xff]
    %v1128 = vld [vmem:[#allocation4 + $0x128] sm:$0xff]
    %v1129 = vld [vmem:[#allocation4 + $0x130] sm:$0xff]
    %v1130 = vld [vmem:[#allocation4 + $0x138] sm:$0xff]
    %v1131 = vld [vmem:[#allocation4 + $0x140] sm:$0xff]
    %v1132 = vld [vmem:[#allocation4 + $0x148] sm:$0xff]
    %v1133 = vld [vmem:[#allocation4 + $0x150] sm:$0xff]
    %v1134 = vld [vmem:[#allocation4 + $0x158] sm:$0xff]
    %v1135 = vld [vmem:[#allocation4 + $0x160] sm:$0xff]
    %v1136 = vld [vmem:[#allocation4 + $0x168] sm:$0xff]
    %v1137 = vld [vmem:[#allocation4 + $0x170] sm:$0xff]
    %v1138 = vld [vmem:[#allocation4 + $0x178] sm:$0xff]
    %v1139 = vld [vmem:[#allocation4 + $0x180] sm:$0xff]
    %v1140 = vld [vmem:[#allocation4 + $0x188] sm:$0xff]
    %v1141 = vld [vmem:[#allocation4 + $0x190] sm:$0xff]
    %v1142 = vld [vmem:[#allocation4 + $0x198] sm:$0xff]
    %v1143 = vld [vmem:[#allocation4 + $0x1a0] sm:$0xff]
    %v1144 = vld [vmem:[#allocation4 + $0x1a8] sm:$0xff]
    %v1145 = vld [vmem:[#allocation4 + $0x1b0] sm:$0xff]
    %v1146 = vld [vmem:[#allocation4 + $0x1b8] sm:$0xff]
    %v1147 = vld [vmem:[#allocation4 + $0x1c0] sm:$0xff]
    %v1148 = vld [vmem:[#allocation4 + $0x1c8] sm:$0xff]
    %v1149 = vld [vmem:[#allocation4 + $0x1d0] sm:$0xff]
    %v1150 = vld [vmem:[#allocation4 + $0x1d8] sm:$0xff]
    %v1151 = vld [vmem:[#allocation4 + $0x1e0] sm:$0xff]
    %v1152 = vld [vmem:[#allocation4 + $0x1e8] sm:$0xff]
    %v1153 = vld [vmem:[#allocation4 + $0x1f0] sm:$0xff]
    %v1154 = vld [vmem:[#allocation4 + $0x1f8] sm:$0xff]
    %1155 = vmatprep.subr.mxu0 %v1152
    %1156 = vmatpush1.msra.mxu0 %v1151
    %1157 = vmatprep.subr.mxu0 %v1148
    %1158 = vmatpush1.msra.mxu0 %v1147
    %1159 = vmatprep.subr.mxu0 %v1144
    %1160 = vmatpush1.msra.mxu0 %v1143
    %1161 = vmatprep.subr.mxu0 %v1140
    %1162 = vmatpush1.msra.mxu0 %v1139
    %1163 = vmatprep.subr.mxu0 %v1136
    %1164 = vmatpush1.msra.mxu0 %v1135
    %1165 = vmatprep.subr.mxu0 %v1132
    %1166 = vmatpush1.msra.mxu0 %v1131
    %1167 = vmatprep.subr.mxu0 %v1128
    %1168 = vmatpush1.msra.mxu0 %v1127
    %1169 = vmatprep.subr.mxu0 %v1124
    %1170 = vmatpush1.msra.mxu0 %v1123
    %1171 = vmatprep.subr.mxu0 %v1120
    %1172 = vmatpush1.msra.mxu0 %v1119
    %1173 = vmatprep.subr.mxu0 %v1116
    %1174 = vmatpush1.msra.mxu0 %v1115
    %1175 = vmatprep.subr.mxu0 %v1112
    %1176 = vmatpush1.msra.mxu0 %v1111
    %1177 = vmatprep.subr.mxu0 %v1108
    %1178 = vmatpush1.msra.mxu0 %v1107
    %1179 = vmatprep.subr.mxu0 %v1104
    %1180 = vmatpush1.msra.mxu0 %v1103
    %1181 = vmatprep.subr.mxu0 %v1100
    %1182 = vmatpush1.msra.mxu0 %v1099
    %1183 = vmatprep.subr.mxu0 %v1096
    %1184 = vmatpush1.msra.mxu0 %v1095
    %1185 = vmatprep.subr.mxu0 %v1092
    %1186 = vmatpush1.msra.mxu0 %v1091
    %1187 = vmatprep.subr.mxu0 0.0
    %1188 = vmatpush2.msra.mxu0 0.0
    %1189 = vmatprep.subr.mxu0 0.0
    %1190 = vmatpush2.msra.mxu0 0.0
    %1191 = vmatprep.subr.mxu0 0.0
    %1192 = vmatpush2.msra.mxu0 0.0
    %1193 = vmatprep.subr.mxu0 0.0
    %1194 = vmatpush2.msra.mxu0 0.0
    %1195 = vmatprep.subr.mxu0 0.0
    %1196 = vmatpush2.msra.mxu0 0.0
    %1197 = vmatprep.subr.mxu0 0.0
    %1198 = vmatpush2.msra.mxu0 0.0
    %1199 = vmatprep.subr.mxu0 0.0
    %1200 = vmatpush2.msra.mxu0 0.0
    %1201 = vmatprep.subr.mxu0 0.0
    %1202 = vmatpush2.msra.mxu0 0.0
    %1203 = vmatprep.subr.mxu0 0.0
    %1204 = vmatpush2.msra.mxu0 0.0
    %1205 = vmatprep.subr.mxu0 0.0
    %1206 = vmatpush2.msra.mxu0 0.0
    %1207 = vmatprep.subr.mxu0 0.0
    %1208 = vmatpush2.msra.mxu0 0.0
    %1209 = vmatprep.subr.mxu0 0.0
    %1210 = vmatpush2.msra.mxu0 0.0
    %1211 = vmatprep.subr.mxu0 0.0
    %1212 = vmatpush2.msra.mxu0 0.0
    %1213 = vmatprep.subr.mxu0 0.0
    %1214 = vmatpush2.msra.mxu0 0.0
    %1215 = vmatprep.subr.mxu0 0.0
    %1216 = vmatpush2.msra.mxu0 0.0
    %1217 = vmatprep.subr.mxu0 0.0
    %1218 = vmatpush2.msra.mxu0 0.0
    %1219 = vmatprep.mubr.f32.mxu0 0.0
    %1220 = vmatmul.mubr.f32.gmra.mxu0 %v1083
    %v1221 = vpop.f32.mrf.mxu0
    %v1222 = vadd.f32 0.0, %v1221
    %v1223 = vpop.f32.mrf.mxu0
    %v1224 = vadd.f32 0.0, %v1223
    %1225 = vdwg.mxu0
    %1226 = vmatprep.subr.mxu0 %v1154
    %1227 = vmatpush1.msra.mxu0 %v1153
    %1228 = vmatprep.subr.mxu0 %v1150
    %1229 = vmatpush1.msra.mxu0 %v1149
    %1230 = vmatprep.subr.mxu0 %v1146
    %1231 = vmatpush1.msra.mxu0 %v1145
    %1232 = vmatprep.subr.mxu0 %v1142
    %1233 = vmatpush1.msra.mxu0 %v1141
    %1234 = vmatprep.subr.mxu0 %v1138
    %1235 = vmatpush1.msra.mxu0 %v1137
    %1236 = vmatprep.subr.mxu0 %v1134
    %1237 = vmatpush1.msra.mxu0 %v1133
    %1238 = vmatprep.subr.mxu0 %v1130
    %1239 = vmatpush1.msra.mxu0 %v1129
    %1240 = vmatprep.subr.mxu0 %v1126
    %1241 = vmatpush1.msra.mxu0 %v1125
    %1242 = vmatprep.subr.mxu0 %v1122
    %1243 = vmatpush1.msra.mxu0 %v1121
    %1244 = vmatprep.subr.mxu0 %v1118
    %1245 = vmatpush1.msra.mxu0 %v1117
    %1246 = vmatprep.subr.mxu0 %v1114
    %1247 = vmatpush1.msra.mxu0 %v1113
    %1248 = vmatprep.subr.mxu0 %v1110
    %1249 = vmatpush1.msra.mxu0 %v1109
    %1250 = vmatprep.subr.mxu0 %v1106
    %1251 = vmatpush1.msra.mxu0 %v1105
    %1252 = vmatprep.subr.mxu0 %v1102
    %1253 = vmatpush1.msra.mxu0 %v1101
    %1254 = vmatprep.subr.mxu0 %v1098
    %1255 = vmatpush1.msra.mxu0 %v1097
    %1256 = vmatprep.subr.mxu0 %v1094
    %1257 = vmatpush1.msra.mxu0 %v1093
    %1258 = vmatprep.subr.mxu0 0.0
    %1259 = vmatpush2.msra.mxu0 0.0
    %1260 = vmatprep.subr.mxu0 0.0
    %1261 = vmatpush2.msra.mxu0 0.0
    %1262 = vmatprep.subr.mxu0 0.0
    %1263 = vmatpush2.msra.mxu0 0.0
    %1264 = vmatprep.subr.mxu0 0.0
    %1265 = vmatpush2.msra.mxu0 0.0
    %1266 = vmatprep.subr.mxu0 0.0
    %1267 = vmatpush2.msra.mxu0 0.0
    %1268 = vmatprep.subr.mxu0 0.0
    %1269 = vmatpush2.msra.mxu0 0.0
    %1270 = vmatprep.subr.mxu0 0.0
    %1271 = vmatpush2.msra.mxu0 0.0
    %1272 = vmatprep.subr.mxu0 0.0
    %1273 = vmatpush2.msra.mxu0 0.0
    %1274 = vmatprep.subr.mxu0 0.0
    %1275 = vmatpush2.msra.mxu0 0.0
    %1276 = vmatprep.subr.mxu0 0.0
    %1277 = vmatpush2.msra.mxu0 0.0
    %1278 = vmatprep.subr.mxu0 0.0
    %1279 = vmatpush2.msra.mxu0 0.0
    %1280 = vmatprep.subr.mxu0 0.0
    %1281 = vmatpush2.msra.mxu0 0.0
    %1282 = vmatprep.subr.mxu0 0.0
    %1283 = vmatpush2.msra.mxu0 0.0
    %1284 = vmatprep.subr.mxu0 0.0
    %1285 = vmatpush2.msra.mxu0 0.0
    %1286 = vmatprep.subr.mxu0 0.0
    %1287 = vmatpush2.msra.mxu0 0.0
    %1288 = vmatprep.subr.mxu0 0.0
    %1289 = vmatpush2.msra.mxu0 0.0
    %1290 = vmatprep.mubr.f32.mxu0 0.0
    %1291 = vmatmul.mubr.f32.gmra.mxu0 %v1083
    %v1292 = vpop.f32.mrf.mxu0
    %v1293 = vadd.f32 0.0, %v1292
    %v1294 = vpop.f32.mrf.mxu0
    %v1295 = vadd.f32 0.0, %v1294
    %1296 = vdwg.mxu0
    %v1297 = vadd.f32 %v1087, %v1222
    %v1298 = vadd.f32 %v1088, %v1224
    %v1299 = vadd.f32 %v1089, %v1293
    %v1300 = vadd.f32 %v1090, %v1295
    %v1301 = vxor.u32 %v1297, 2147483648
    %v1302 = vmul.f32 %v1301, 1.442695
    %v1303 = vpow.pop %v1302
    %v1304 = vadd.f32 %v1303, 1.0
    %v1305 = vrcp.pop %v1304
    %v1306 = vmul.f32 1.0, %v1305
    %v1307 = vxor.u32 %v1298, 2147483648
    %v1308 = vmul.f32 %v1307, 1.442695
    %v1309 = vpow.pop %v1308
    %v1310 = vadd.f32 %v1309, 1.0
    %v1311 = vrcp.pop %v1310
    %v1312 = vmul.f32 1.0, %v1311
    %v1313 = vtanh.pop %v1299
    %v1314 = vxor.u32 %v1300, 2147483648
    %v1315 = vmul.f32 %v1314, 1.442695
    %v1316 = vpow.pop %v1315
    %v1317 = vadd.f32 %v1316, 1.0
    %v1318 = vrcp.pop %v1317
    %v1319 = vmul.f32 1.0, %v1318
    %v1320 = vmul.f32 %v1312, %v1081
    %v1321 = vmul.f32 %v1306, %v1313
    %v1322 = vadd.f32 %v1320, %v1321
    %v1323 = vtanh.pop %v1322
    %v1324 = vmul.f32 %v1319, %v1323
    %s1325 = scalar_lea.vmem [#allocation3], 24
    %1326 = vst [vmem:[%s1325] sm:$0xff] %v1324
    %s1327 = scalar_lea.vmem [#allocation2], 128
    %v1328 = vld [vmem:[%s1327] sm:$0xff]
    %v1329 = vld [vmem:[%s1327 + $0x8] sm:$0xff]
    %v1330 = vld [vmem:[%s1327 + $0x10] sm:$0xff]
    %v1331 = vld [vmem:[%s1327 + $0x18] sm:$0xff]
    %v1332 = vld [vmem:[#allocation4] sm:$0xff]
    %v1333 = vld [vmem:[#allocation4 + $0x8] sm:$0xff]
    %v1334 = vld [vmem:[#allocation4 + $0x10] sm:$0xff]
    %v1335 = vld [vmem:[#allocation4 + $0x18] sm:$0xff]
    %v1336 = vld [vmem:[#allocation4 + $0x20] sm:$0xff]
    %v1337 = vld [vmem:[#allocation4 + $0x28] sm:$0xff]
    %v1338 = vld [vmem:[#allocation4 + $0x30] sm:$0xff]
    %v1339 = vld [vmem:[#allocation4 + $0x38] sm:$0xff]
    %v1340 = vld [vmem:[#allocation4 + $0x40] sm:$0xff]
    %v1341 = vld [vmem:[#allocation4 + $0x48] sm:$0xff]
    %v1342 = vld [vmem:[#allocation4 + $0x50] sm:$0xff]
    %v1343 = vld [vmem:[#allocation4 + $0x58] sm:$0xff]
    %v1344 = vld [vmem:[#allocation4 + $0x60] sm:$0xff]
    %v1345 = vld [vmem:[#allocation4 + $0x68] sm:$0xff]
    %v1346 = vld [vmem:[#allocation4 + $0x70] sm:$0xff]
    %v1347 = vld [vmem:[#allocation4 + $0x78] sm:$0xff]
    %v1348 = vld [vmem:[#allocation4 + $0x80] sm:$0xff]
    %v1349 = vld [vmem:[#allocation4 + $0x88] sm:$0xff]
    %v1350 = vld [vmem:[#allocation4 + $0x90] sm:$0xff]
    %v1351 = vld [vmem:[#allocation4 + $0x98] sm:$0xff]
    %v1352 = vld [vmem:[#allocation4 + $0xa0] sm:$0xff]
    %v1353 = vld [vmem:[#allocation4 + $0xa8] sm:$0xff]
    %v1354 = vld [vmem:[#allocation4 + $0xb0] sm:$0xff]
    %v1355 = vld [vmem:[#allocation4 + $0xb8] sm:$0xff]
    %v1356 = vld [vmem:[#allocation4 + $0xc0] sm:$0xff]
    %v1357 = vld [vmem:[#allocation4 + $0xc8] sm:$0xff]
    %v1358 = vld [vmem:[#allocation4 + $0xd0] sm:$0xff]
    %v1359 = vld [vmem:[#allocation4 + $0xd8] sm:$0xff]
    %v1360 = vld [vmem:[#allocation4 + $0xe0] sm:$0xff]
    %v1361 = vld [vmem:[#allocation4 + $0xe8] sm:$0xff]
    %v1362 = vld [vmem:[#allocation4 + $0xf0] sm:$0xff]
    %v1363 = vld [vmem:[#allocation4 + $0xf8] sm:$0xff]
    %v1364 = vld [vmem:[#allocation4 + $0x100] sm:$0xff]
    %v1365 = vld [vmem:[#allocation4 + $0x108] sm:$0xff]
    %v1366 = vld [vmem:[#allocation4 + $0x110] sm:$0xff]
    %v1367 = vld [vmem:[#allocation4 + $0x118] sm:$0xff]
    %v1368 = vld [vmem:[#allocation4 + $0x120] sm:$0xff]
    %v1369 = vld [vmem:[#allocation4 + $0x128] sm:$0xff]
    %v1370 = vld [vmem:[#allocation4 + $0x130] sm:$0xff]
    %v1371 = vld [vmem:[#allocation4 + $0x138] sm:$0xff]
    %v1372 = vld [vmem:[#allocation4 + $0x140] sm:$0xff]
    %v1373 = vld [vmem:[#allocation4 + $0x148] sm:$0xff]
    %v1374 = vld [vmem:[#allocation4 + $0x150] sm:$0xff]
    %v1375 = vld [vmem:[#allocation4 + $0x158] sm:$0xff]
    %v1376 = vld [vmem:[#allocation4 + $0x160] sm:$0xff]
    %v1377 = vld [vmem:[#allocation4 + $0x168] sm:$0xff]
    %v1378 = vld [vmem:[#allocation4 + $0x170] sm:$0xff]
    %v1379 = vld [vmem:[#allocation4 + $0x178] sm:$0xff]
    %v1380 = vld [vmem:[#allocation4 + $0x180] sm:$0xff]
    %v1381 = vld [vmem:[#allocation4 + $0x188] sm:$0xff]
    %v1382 = vld [vmem:[#allocation4 + $0x190] sm:$0xff]
    %v1383 = vld [vmem:[#allocation4 + $0x198] sm:$0xff]
    %v1384 = vld [vmem:[#allocation4 + $0x1a0] sm:$0xff]
    %v1385 = vld [vmem:[#allocation4 + $0x1a8] sm:$0xff]
    %v1386 = vld [vmem:[#allocation4 + $0x1b0] sm:$0xff]
    %v1387 = vld [vmem:[#allocation4 + $0x1b8] sm:$0xff]
    %v1388 = vld [vmem:[#allocation4 + $0x1c0] sm:$0xff]
    %v1389 = vld [vmem:[#allocation4 + $0x1c8] sm:$0xff]
    %v1390 = vld [vmem:[#allocation4 + $0x1d0] sm:$0xff]
    %v1391 = vld [vmem:[#allocation4 + $0x1d8] sm:$0xff]
    %v1392 = vld [vmem:[#allocation4 + $0x1e0] sm:$0xff]
    %v1393 = vld [vmem:[#allocation4 + $0x1e8] sm:$0xff]
    %v1394 = vld [vmem:[#allocation4 + $0x1f0] sm:$0xff]
    %v1395 = vld [vmem:[#allocation4 + $0x1f8] sm:$0xff]
    %1396 = vmatprep.subr.mxu0 %v1393
    %1397 = vmatpush1.msra.mxu0 %v1392
    %1398 = vmatprep.subr.mxu0 %v1389
    %1399 = vmatpush1.msra.mxu0 %v1388
    %1400 = vmatprep.subr.mxu0 %v1385
    %1401 = vmatpush1.msra.mxu0 %v1384
    %1402 = vmatprep.subr.mxu0 %v1381
    %1403 = vmatpush1.msra.mxu0 %v1380
    %1404 = vmatprep.subr.mxu0 %v1377
    %1405 = vmatpush1.msra.mxu0 %v1376
    %1406 = vmatprep.subr.mxu0 %v1373
    %1407 = vmatpush1.msra.mxu0 %v1372
    %1408 = vmatprep.subr.mxu0 %v1369
    %1409 = vmatpush1.msra.mxu0 %v1368
    %1410 = vmatprep.subr.mxu0 %v1365
    %1411 = vmatpush1.msra.mxu0 %v1364
    %1412 = vmatprep.subr.mxu0 %v1361
    %1413 = vmatpush1.msra.mxu0 %v1360
    %1414 = vmatprep.subr.mxu0 %v1357
    %1415 = vmatpush1.msra.mxu0 %v1356
    %1416 = vmatprep.subr.mxu0 %v1353
    %1417 = vmatpush1.msra.mxu0 %v1352
    %1418 = vmatprep.subr.mxu0 %v1349
    %1419 = vmatpush1.msra.mxu0 %v1348
    %1420 = vmatprep.subr.mxu0 %v1345
    %1421 = vmatpush1.msra.mxu0 %v1344
    %1422 = vmatprep.subr.mxu0 %v1341
    %1423 = vmatpush1.msra.mxu0 %v1340
    %1424 = vmatprep.subr.mxu0 %v1337
    %1425 = vmatpush1.msra.mxu0 %v1336
    %1426 = vmatprep.subr.mxu0 %v1333
    %1427 = vmatpush1.msra.mxu0 %v1332
    %1428 = vmatprep.subr.mxu0 0.0
    %1429 = vmatpush2.msra.mxu0 0.0
    %1430 = vmatprep.subr.mxu0 0.0
    %1431 = vmatpush2.msra.mxu0 0.0
    %1432 = vmatprep.subr.mxu0 0.0
    %1433 = vmatpush2.msra.mxu0 0.0
    %1434 = vmatprep.subr.mxu0 0.0
    %1435 = vmatpush2.msra.mxu0 0.0
    %1436 = vmatprep.subr.mxu0 0.0
    %1437 = vmatpush2.msra.mxu0 0.0
    %1438 = vmatprep.subr.mxu0 0.0
    %1439 = vmatpush2.msra.mxu0 0.0
    %1440 = vmatprep.subr.mxu0 0.0
    %1441 = vmatpush2.msra.mxu0 0.0
    %1442 = vmatprep.subr.mxu0 0.0
    %1443 = vmatpush2.msra.mxu0 0.0
    %1444 = vmatprep.subr.mxu0 0.0
    %1445 = vmatpush2.msra.mxu0 0.0
    %1446 = vmatprep.subr.mxu0 0.0
    %1447 = vmatpush2.msra.mxu0 0.0
    %1448 = vmatprep.subr.mxu0 0.0
    %1449 = vmatpush2.msra.mxu0 0.0
    %1450 = vmatprep.subr.mxu0 0.0
    %1451 = vmatpush2.msra.mxu0 0.0
    %1452 = vmatprep.subr.mxu0 0.0
    %1453 = vmatpush2.msra.mxu0 0.0
    %1454 = vmatprep.subr.mxu0 0.0
    %1455 = vmatpush2.msra.mxu0 0.0
    %1456 = vmatprep.subr.mxu0 0.0
    %1457 = vmatpush2.msra.mxu0 0.0
    %1458 = vmatprep.subr.mxu0 0.0
    %1459 = vmatpush2.msra.mxu0 0.0
    %1460 = vmatprep.mubr.f32.mxu0 0.0
    %1461 = vmatmul.mubr.f32.gmra.mxu0 %v1324
    %v1462 = vpop.f32.mrf.mxu0
    %v1463 = vadd.f32 0.0, %v1462
    %v1464 = vpop.f32.mrf.mxu0
    %v1465 = vadd.f32 0.0, %v1464
    %1466 = vdwg.mxu0
    %1467 = vmatprep.subr.mxu0 %v1395
    %1468 = vmatpush1.msra.mxu0 %v1394
    %1469 = vmatprep.subr.mxu0 %v1391
    %1470 = vmatpush1.msra.mxu0 %v1390
    %1471 = vmatprep.subr.mxu0 %v1387
    %1472 = vmatpush1.msra.mxu0 %v1386
    %1473 = vmatprep.subr.mxu0 %v1383
    %1474 = vmatpush1.msra.mxu0 %v1382
    %1475 = vmatprep.subr.mxu0 %v1379
    %1476 = vmatpush1.msra.mxu0 %v1378
    %1477 = vmatprep.subr.mxu0 %v1375
    %1478 = vmatpush1.msra.mxu0 %v1374
    %1479 = vmatprep.subr.mxu0 %v1371
    %1480 = vmatpush1.msra.mxu0 %v1370
    %1481 = vmatprep.subr.mxu0 %v1367
    %1482 = vmatpush1.msra.mxu0 %v1366
    %1483 = vmatprep.subr.mxu0 %v1363
    %1484 = vmatpush1.msra.mxu0 %v1362
    %1485 = vmatprep.subr.mxu0 %v1359
    %1486 = vmatpush1.msra.mxu0 %v1358
    %1487 = vmatprep.subr.mxu0 %v1355
    %1488 = vmatpush1.msra.mxu0 %v1354
    %1489 = vmatprep.subr.mxu0 %v1351
    %1490 = vmatpush1.msra.mxu0 %v1350
    %1491 = vmatprep.subr.mxu0 %v1347
    %1492 = vmatpush1.msra.mxu0 %v1346
    %1493 = vmatprep.subr.mxu0 %v1343
    %1494 = vmatpush1.msra.mxu0 %v1342
    %1495 = vmatprep.subr.mxu0 %v1339
    %1496 = vmatpush1.msra.mxu0 %v1338
    %1497 = vmatprep.subr.mxu0 %v1335
    %1498 = vmatpush1.msra.mxu0 %v1334
    %1499 = vmatprep.subr.mxu0 0.0
    %1500 = vmatpush2.msra.mxu0 0.0
    %1501 = vmatprep.subr.mxu0 0.0
    %1502 = vmatpush2.msra.mxu0 0.0
    %1503 = vmatprep.subr.mxu0 0.0
    %1504 = vmatpush2.msra.mxu0 0.0
    %1505 = vmatprep.subr.mxu0 0.0
    %1506 = vmatpush2.msra.mxu0 0.0
    %1507 = vmatprep.subr.mxu0 0.0
    %1508 = vmatpush2.msra.mxu0 0.0
    %1509 = vmatprep.subr.mxu0 0.0
    %1510 = vmatpush2.msra.mxu0 0.0
    %1511 = vmatprep.subr.mxu0 0.0
    %1512 = vmatpush2.msra.mxu0 0.0
    %1513 = vmatprep.subr.mxu0 0.0
    %1514 = vmatpush2.msra.mxu0 0.0
    %1515 = vmatprep.subr.mxu0 0.0
    %1516 = vmatpush2.msra.mxu0 0.0
    %1517 = vmatprep.subr.mxu0 0.0
    %1518 = vmatpush2.msra.mxu0 0.0
    %1519 = vmatprep.subr.mxu0 0.0
    %1520 = vmatpush2.msra.mxu0 0.0
    %1521 = vmatprep.subr.mxu0 0.0
    %1522 = vmatpush2.msra.mxu0 0.0
    %1523 = vmatprep.subr.mxu0 0.0
    %1524 = vmatpush2.msra.mxu0 0.0
    %1525 = vmatprep.subr.mxu0 0.0
    %1526 = vmatpush2.msra.mxu0 0.0
    %1527 = vmatprep.subr.mxu0 0.0
    %1528 = vmatpush2.msra.mxu0 0.0
    %1529 = vmatprep.subr.mxu0 0.0
    %1530 = vmatpush2.msra.mxu0 0.0
    %1531 = vmatprep.mubr.f32.mxu0 0.0
    %1532 = vmatmul.mubr.f32.gmra.mxu0 %v1324
    %v1533 = vpop.f32.mrf.mxu0
    %v1534 = vadd.f32 0.0, %v1533
    %v1535 = vpop.f32.mrf.mxu0
    %v1536 = vadd.f32 0.0, %v1535
    %1537 = vdwg.mxu0
    %v1538 = vadd.f32 %v1328, %v1463
    %v1539 = vadd.f32 %v1329, %v1465
    %v1540 = vadd.f32 %v1330, %v1534
    %v1541 = vadd.f32 %v1331, %v1536
    %v1542 = vxor.u32 %v1538, 2147483648
    %v1543 = vmul.f32 %v1542, 1.442695
    %v1544 = vpow.pop %v1543
    %v1545 = vadd.f32 %v1544, 1.0
    %v1546 = vrcp.pop %v1545
    %v1547 = vmul.f32 1.0, %v1546
    %v1548 = vxor.u32 %v1539, 2147483648
    %v1549 = vmul.f32 %v1548, 1.442695
    %v1550 = vpow.pop %v1549
    %v1551 = vadd.f32 %v1550, 1.0
    %v1552 = vrcp.pop %v1551
    %v1553 = vmul.f32 1.0, %v1552
    %v1554 = vtanh.pop %v1540
    %v1555 = vxor.u32 %v1541, 2147483648
    %v1556 = vmul.f32 %v1555, 1.442695
    %v1557 = vpow.pop %v1556
    %v1558 = vadd.f32 %v1557, 1.0
    %v1559 = vrcp.pop %v1558
    %v1560 = vmul.f32 1.0, %v1559
    %v1561 = vmul.f32 %v1553, %v1322
    %v1562 = vmul.f32 %v1547, %v1554
    %v1563 = vadd.f32 %v1561, %v1562
    %v1564 = vtanh.pop %v1563
    %v1565 = vmul.f32 %v1560, %v1564
    %s1566 = scalar_lea.vmem [#allocation3], 32
    %1567 = vst [vmem:[%s1566] sm:$0xff] %v1565
    %s1568 = scalar_lea.vmem [#allocation2], 160
    %v1569 = vld [vmem:[%s1568] sm:$0xff]
    %v1570 = vld [vmem:[%s1568 + $0x8] sm:$0xff]
    %v1571 = vld [vmem:[%s1568 + $0x10] sm:$0xff]
    %v1572 = vld [vmem:[%s1568 + $0x18] sm:$0xff]
    %v1573 = vld [vmem:[#allocation4] sm:$0xff]
    %v1574 = vld [vmem:[#allocation4 + $0x8] sm:$0xff]
    %v1575 = vld [vmem:[#allocation4 + $0x10] sm:$0xff]
    %v1576 = vld [vmem:[#allocation4 + $0x18] sm:$0xff]
    %v1577 = vld [vmem:[#allocation4 + $0x20] sm:$0xff]
    %v1578 = vld [vmem:[#allocation4 + $0x28] sm:$0xff]
    %v1579 = vld [vmem:[#allocation4 + $0x30] sm:$0xff]
    %v1580 = vld [vmem:[#allocation4 + $0x38] sm:$0xff]
    %v1581 = vld [vmem:[#allocation4 + $0x40] sm:$0xff]
    %v1582 = vld [vmem:[#allocation4 + $0x48] sm:$0xff]
    %v1583 = vld [vmem:[#allocation4 + $0x50] sm:$0xff]
    %v1584 = vld [vmem:[#allocation4 + $0x58] sm:$0xff]
    %v1585 = vld [vmem:[#allocation4 + $0x60] sm:$0xff]
    %v1586 = vld [vmem:[#allocation4 + $0x68] sm:$0xff]
    %v1587 = vld [vmem:[#allocation4 + $0x70] sm:$0xff]
    %v1588 = vld [vmem:[#allocation4 + $0x78] sm:$0xff]
    %v1589 = vld [vmem:[#allocation4 + $0x80] sm:$0xff]
    %v1590 = vld [vmem:[#allocation4 + $0x88] sm:$0xff]
    %v1591 = vld [vmem:[#allocation4 + $0x90] sm:$0xff]
    %v1592 = vld [vmem:[#allocation4 + $0x98] sm:$0xff]
    %v1593 = vld [vmem:[#allocation4 + $0xa0] sm:$0xff]
    %v1594 = vld [vmem:[#allocation4 + $0xa8] sm:$0xff]
    %v1595 = vld [vmem:[#allocation4 + $0xb0] sm:$0xff]
    %v1596 = vld [vmem:[#allocation4 + $0xb8] sm:$0xff]
    %v1597 = vld [vmem:[#allocation4 + $0xc0] sm:$0xff]
    %v1598 = vld [vmem:[#allocation4 + $0xc8] sm:$0xff]
    %v1599 = vld [vmem:[#allocation4 + $0xd0] sm:$0xff]
    %v1600 = vld [vmem:[#allocation4 + $0xd8] sm:$0xff]
    %v1601 = vld [vmem:[#allocation4 + $0xe0] sm:$0xff]
    %v1602 = vld [vmem:[#allocation4 + $0xe8] sm:$0xff]
    %v1603 = vld [vmem:[#allocation4 + $0xf0] sm:$0xff]
    %v1604 = vld [vmem:[#allocation4 + $0xf8] sm:$0xff]
    %v1605 = vld [vmem:[#allocation4 + $0x100] sm:$0xff]
    %v1606 = vld [vmem:[#allocation4 + $0x108] sm:$0xff]
    %v1607 = vld [vmem:[#allocation4 + $0x110] sm:$0xff]
    %v1608 = vld [vmem:[#allocation4 + $0x118] sm:$0xff]
    %v1609 = vld [vmem:[#allocation4 + $0x120] sm:$0xff]
    %v1610 = vld [vmem:[#allocation4 + $0x128] sm:$0xff]
    %v1611 = vld [vmem:[#allocation4 + $0x130] sm:$0xff]
    %v1612 = vld [vmem:[#allocation4 + $0x138] sm:$0xff]
    %v1613 = vld [vmem:[#allocation4 + $0x140] sm:$0xff]
    %v1614 = vld [vmem:[#allocation4 + $0x148] sm:$0xff]
    %v1615 = vld [vmem:[#allocation4 + $0x150] sm:$0xff]
    %v1616 = vld [vmem:[#allocation4 + $0x158] sm:$0xff]
    %v1617 = vld [vmem:[#allocation4 + $0x160] sm:$0xff]
    %v1618 = vld [vmem:[#allocation4 + $0x168] sm:$0xff]
    %v1619 = vld [vmem:[#allocation4 + $0x170] sm:$0xff]
    %v1620 = vld [vmem:[#allocation4 + $0x178] sm:$0xff]
    %v1621 = vld [vmem:[#allocation4 + $0x180] sm:$0xff]
    %v1622 = vld [vmem:[#allocation4 + $0x188] sm:$0xff]
    %v1623 = vld [vmem:[#allocation4 + $0x190] sm:$0xff]
    %v1624 = vld [vmem:[#allocation4 + $0x198] sm:$0xff]
    %v1625 = vld [vmem:[#allocation4 + $0x1a0] sm:$0xff]
    %v1626 = vld [vmem:[#allocation4 + $0x1a8] sm:$0xff]
    %v1627 = vld [vmem:[#allocation4 + $0x1b0] sm:$0xff]
    %v1628 = vld [vmem:[#allocation4 + $0x1b8] sm:$0xff]
    %v1629 = vld [vmem:[#allocation4 + $0x1c0] sm:$0xff]
    %v1630 = vld [vmem:[#allocation4 + $0x1c8] sm:$0xff]
    %v1631 = vld [vmem:[#allocation4 + $0x1d0] sm:$0xff]
    %v1632 = vld [vmem:[#allocation4 + $0x1d8] sm:$0xff]
    %v1633 = vld [vmem:[#allocation4 + $0x1e0] sm:$0xff]
    %v1634 = vld [vmem:[#allocation4 + $0x1e8] sm:$0xff]
    %v1635 = vld [vmem:[#allocation4 + $0x1f0] sm:$0xff]
    %v1636 = vld [vmem:[#allocation4 + $0x1f8] sm:$0xff]
    %1637 = vmatprep.subr.mxu0 %v1634
    %1638 = vmatpush1.msra.mxu0 %v1633
    %1639 = vmatprep.subr.mxu0 %v1630
    %1640 = vmatpush1.msra.mxu0 %v1629
    %1641 = vmatprep.subr.mxu0 %v1626
    %1642 = vmatpush1.msra.mxu0 %v1625
    %1643 = vmatprep.subr.mxu0 %v1622
    %1644 = vmatpush1.msra.mxu0 %v1621
    %1645 = vmatprep.subr.mxu0 %v1618
    %1646 = vmatpush1.msra.mxu0 %v1617
    %1647 = vmatprep.subr.mxu0 %v1614
    %1648 = vmatpush1.msra.mxu0 %v1613
    %1649 = vmatprep.subr.mxu0 %v1610
    %1650 = vmatpush1.msra.mxu0 %v1609
    %1651 = vmatprep.subr.mxu0 %v1606
    %1652 = vmatpush1.msra.mxu0 %v1605
    %1653 = vmatprep.subr.mxu0 %v1602
    %1654 = vmatpush1.msra.mxu0 %v1601
    %1655 = vmatprep.subr.mxu0 %v1598
    %1656 = vmatpush1.msra.mxu0 %v1597
    %1657 = vmatprep.subr.mxu0 %v1594
    %1658 = vmatpush1.msra.mxu0 %v1593
    %1659 = vmatprep.subr.mxu0 %v1590
    %1660 = vmatpush1.msra.mxu0 %v1589
    %1661 = vmatprep.subr.mxu0 %v1586
    %1662 = vmatpush1.msra.mxu0 %v1585
    %1663 = vmatprep.subr.mxu0 %v1582
    %1664 = vmatpush1.msra.mxu0 %v1581
    %1665 = vmatprep.subr.mxu0 %v1578
    %1666 = vmatpush1.msra.mxu0 %v1577
    %1667 = vmatprep.subr.mxu0 %v1574
    %1668 = vmatpush1.msra.mxu0 %v1573
    %1669 = vmatprep.subr.mxu0 0.0
    %1670 = vmatpush2.msra.mxu0 0.0
    %1671 = vmatprep.subr.mxu0 0.0
    %1672 = vmatpush2.msra.mxu0 0.0
    %1673 = vmatprep.subr.mxu0 0.0
    %1674 = vmatpush2.msra.mxu0 0.0
    %1675 = vmatprep.subr.mxu0 0.0
    %1676 = vmatpush2.msra.mxu0 0.0
    %1677 = vmatprep.subr.mxu0 0.0
    %1678 = vmatpush2.msra.mxu0 0.0
    %1679 = vmatprep.subr.mxu0 0.0
    %1680 = vmatpush2.msra.mxu0 0.0
    %1681 = vmatprep.subr.mxu0 0.0
    %1682 = vmatpush2.msra.mxu0 0.0
    %1683 = vmatprep.subr.mxu0 0.0
    %1684 = vmatpush2.msra.mxu0 0.0
    %1685 = vmatprep.subr.mxu0 0.0
    %1686 = vmatpush2.msra.mxu0 0.0
    %1687 = vmatprep.subr.mxu0 0.0
    %1688 = vmatpush2.msra.mxu0 0.0
    %1689 = vmatprep.subr.mxu0 0.0
    %1690 = vmatpush2.msra.mxu0 0.0
    %1691 = vmatprep.subr.mxu0 0.0
    %1692 = vmatpush2.msra.mxu0 0.0
    %1693 = vmatprep.subr.mxu0 0.0
    %1694 = vmatpush2.msra.mxu0 0.0
    %1695 = vmatprep.subr.mxu0 0.0
    %1696 = vmatpush2.msra.mxu0 0.0
    %1697 = vmatprep.subr.mxu0 0.0
    %1698 = vmatpush2.msra.mxu0 0.0
    %1699 = vmatprep.subr.mxu0 0.0
    %1700 = vmatpush2.msra.mxu0 0.0
    %1701 = vmatprep.mubr.f32.mxu0 0.0
    %1702 = vmatmul.mubr.f32.gmra.mxu0 %v1565
    %v1703 = vpop.f32.mrf.mxu0
    %v1704 = vadd.f32 0.0, %v1703
    %v1705 = vpop.f32.mrf.mxu0
    %v1706 = vadd.f32 0.0, %v1705
    %1707 = vdwg.mxu0
    %1708 = vmatprep.subr.mxu0 %v1636
    %1709 = vmatpush1.msra.mxu0 %v1635
    %1710 = vmatprep.subr.mxu0 %v1632
    %1711 = vmatpush1.msra.mxu0 %v1631
    %1712 = vmatprep.subr.mxu0 %v1628
    %1713 = vmatpush1.msra.mxu0 %v1627
    %1714 = vmatprep.subr.mxu0 %v1624
    %1715 = vmatpush1.msra.mxu0 %v1623
    %1716 = vmatprep.subr.mxu0 %v1620
    %1717 = vmatpush1.msra.mxu0 %v1619
    %1718 = vmatprep.subr.mxu0 %v1616
    %1719 = vmatpush1.msra.mxu0 %v1615
    %1720 = vmatprep.subr.mxu0 %v1612
    %1721 = vmatpush1.msra.mxu0 %v1611
    %1722 = vmatprep.subr.mxu0 %v1608
    %1723 = vmatpush1.msra.mxu0 %v1607
    %1724 = vmatprep.subr.mxu0 %v1604
    %1725 = vmatpush1.msra.mxu0 %v1603
    %1726 = vmatprep.subr.mxu0 %v1600
    %1727 = vmatpush1.msra.mxu0 %v1599
    %1728 = vmatprep.subr.mxu0 %v1596
    %1729 = vmatpush1.msra.mxu0 %v1595
    %1730 = vmatprep.subr.mxu0 %v1592
    %1731 = vmatpush1.msra.mxu0 %v1591
    %1732 = vmatprep.subr.mxu0 %v1588
    %1733 = vmatpush1.msra.mxu0 %v1587
    %1734 = vmatprep.subr.mxu0 %v1584
    %1735 = vmatpush1.msra.mxu0 %v1583
    %1736 = vmatprep.subr.mxu0 %v1580
    %1737 = vmatpush1.msra.mxu0 %v1579
    %1738 = vmatprep.subr.mxu0 %v1576
    %1739 = vmatpush1.msra.mxu0 %v1575
    %1740 = vmatprep.subr.mxu0 0.0
    %1741 = vmatpush2.msra.mxu0 0.0
    %1742 = vmatprep.subr.mxu0 0.0
    %1743 = vmatpush2.msra.mxu0 0.0
    %1744 = vmatprep.subr.mxu0 0.0
    %1745 = vmatpush2.msra.mxu0 0.0
    %1746 = vmatprep.subr.mxu0 0.0
    %1747 = vmatpush2.msra.mxu0 0.0
    %1748 = vmatprep.subr.mxu0 0.0
    %1749 = vmatpush2.msra.mxu0 0.0
    %1750 = vmatprep.subr.mxu0 0.0
    %1751 = vmatpush2.msra.mxu0 0.0
    %1752 = vmatprep.subr.mxu0 0.0
    %1753 = vmatpush2.msra.mxu0 0.0
    %1754 = vmatprep.subr.mxu0 0.0
    %1755 = vmatpush2.msra.mxu0 0.0
    %1756 = vmatprep.subr.mxu0 0.0
    %1757 = vmatpush2.msra.mxu0 0.0
    %1758 = vmatprep.subr.mxu0 0.0
    %1759 = vmatpush2.msra.mxu0 0.0
    %1760 = vmatprep.subr.mxu0 0.0
    %1761 = vmatpush2.msra.mxu0 0.0
    %1762 = vmatprep.subr.mxu0 0.0
    %1763 = vmatpush2.msra.mxu0 0.0
    %1764 = vmatprep.subr.mxu0 0.0
    %1765 = vmatpush2.msra.mxu0 0.0
    %1766 = vmatprep.subr.mxu0 0.0
    %1767 = vmatpush2.msra.mxu0 0.0
    %1768 = vmatprep.subr.mxu0 0.0
    %1769 = vmatpush2.msra.mxu0 0.0
    %1770 = vmatprep.subr.mxu0 0.0
    %1771 = vmatpush2.msra.mxu0 0.0
    %1772 = vmatprep.mubr.f32.mxu0 0.0
    %1773 = vmatmul.mubr.f32.gmra.mxu0 %v1565
    %v1774 = vpop.f32.mrf.mxu0
    %v1775 = vadd.f32 0.0, %v1774
    %v1776 = vpop.f32.mrf.mxu0
    %v1777 = vadd.f32 0.0, %v1776
    %1778 = vdwg.mxu0
    %v1779 = vadd.f32 %v1569, %v1704
    %v1780 = vadd.f32 %v1570, %v1706
    %v1781 = vadd.f32 %v1571, %v1775
    %v1782 = vadd.f32 %v1572, %v1777
    %v1783 = vxor.u32 %v1779, 2147483648
    %v1784 = vmul.f32 %v1783, 1.442695
    %v1785 = vpow.pop %v1784
    %v1786 = vadd.f32 %v1785, 1.0
    %v1787 = vrcp.pop %v1786
    %v1788 = vmul.f32 1.0, %v1787
    %v1789 = vxor.u32 %v1780, 2147483648
    %v1790 = vmul.f32 %v1789, 1.442695
    %v1791 = vpow.pop %v1790
    %v1792 = vadd.f32 %v1791, 1.0
    %v1793 = vrcp.pop %v1792
    %v1794 = vmul.f32 1.0, %v1793
    %v1795 = vtanh.pop %v1781
    %v1796 = vxor.u32 %v1782, 2147483648
    %v1797 = vmul.f32 %v1796, 1.442695
    %v1798 = vpow.pop %v1797
    %v1799 = vadd.f32 %v1798, 1.0
    %v1800 = vrcp.pop %v1799
    %v1801 = vmul.f32 1.0, %v1800
    %v1802 = vmul.f32 %v1794, %v1563
    %v1803 = vmul.f32 %v1788, %v1795
    %v1804 = vadd.f32 %v1802, %v1803
    %v1805 = vtanh.pop %v1804
    %v1806 = vmul.f32 %v1801, %v1805
    %s1807 = scalar_lea.vmem [#allocation3], 40
    %1808 = vst [vmem:[%s1807] sm:$0xff] %v1806
    %s1809 = scalar_lea.vmem [#allocation2], 192
    %v1810 = vld [vmem:[%s1809] sm:$0xff]
    %v1811 = vld [vmem:[%s1809 + $0x8] sm:$0xff]
    %v1812 = vld [vmem:[%s1809 + $0x10] sm:$0xff]
    %v1813 = vld [vmem:[%s1809 + $0x18] sm:$0xff]
    %v1814 = vld [vmem:[#allocation4] sm:$0xff]
    %v1815 = vld [vmem:[#allocation4 + $0x8] sm:$0xff]
    %v1816 = vld [vmem:[#allocation4 + $0x10] sm:$0xff]
    %v1817 = vld [vmem:[#allocation4 + $0x18] sm:$0xff]
    %v1818 = vld [vmem:[#allocation4 + $0x20] sm:$0xff]
    %v1819 = vld [vmem:[#allocation4 + $0x28] sm:$0xff]
    %v1820 = vld [vmem:[#allocation4 + $0x30] sm:$0xff]
    %v1821 = vld [vmem:[#allocation4 + $0x38] sm:$0xff]
    %v1822 = vld [vmem:[#allocation4 + $0x40] sm:$0xff]
    %v1823 = vld [vmem:[#allocation4 + $0x48] sm:$0xff]
    %v1824 = vld [vmem:[#allocation4 + $0x50] sm:$0xff]
    %v1825 = vld [vmem:[#allocation4 + $0x58] sm:$0xff]
    %v1826 = vld [vmem:[#allocation4 + $0x60] sm:$0xff]
    %v1827 = vld [vmem:[#allocation4 + $0x68] sm:$0xff]
    %v1828 = vld [vmem:[#allocation4 + $0x70] sm:$0xff]
    %v1829 = vld [vmem:[#allocation4 + $0x78] sm:$0xff]
    %v1830 = vld [vmem:[#allocation4 + $0x80] sm:$0xff]
    %v1831 = vld [vmem:[#allocation4 + $0x88] sm:$0xff]
    %v1832 = vld [vmem:[#allocation4 + $0x90] sm:$0xff]
    %v1833 = vld [vmem:[#allocation4 + $0x98] sm:$0xff]
    %v1834 = vld [vmem:[#allocation4 + $0xa0] sm:$0xff]
    %v1835 = vld [vmem:[#allocation4 + $0xa8] sm:$0xff]
    %v1836 = vld [vmem:[#allocation4 + $0xb0] sm:$0xff]
    %v1837 = vld [vmem:[#allocation4 + $0xb8] sm:$0xff]
    %v1838 = vld [vmem:[#allocation4 + $0xc0] sm:$0xff]
    %v1839 = vld [vmem:[#allocation4 + $0xc8] sm:$0xff]
    %v1840 = vld [vmem:[#allocation4 + $0xd0] sm:$0xff]
    %v1841 = vld [vmem:[#allocation4 + $0xd8] sm:$0xff]
    %v1842 = vld [vmem:[#allocation4 + $0xe0] sm:$0xff]
    %v1843 = vld [vmem:[#allocation4 + $0xe8] sm:$0xff]
    %v1844 = vld [vmem:[#allocation4 + $0xf0] sm:$0xff]
    %v1845 = vld [vmem:[#allocation4 + $0xf8] sm:$0xff]
    %v1846 = vld [vmem:[#allocation4 + $0x100] sm:$0xff]
    %v1847 = vld [vmem:[#allocation4 + $0x108] sm:$0xff]
    %v1848 = vld [vmem:[#allocation4 + $0x110] sm:$0xff]
    %v1849 = vld [vmem:[#allocation4 + $0x118] sm:$0xff]
    %v1850 = vld [vmem:[#allocation4 + $0x120] sm:$0xff]
    %v1851 = vld [vmem:[#allocation4 + $0x128] sm:$0xff]
    %v1852 = vld [vmem:[#allocation4 + $0x130] sm:$0xff]
    %v1853 = vld [vmem:[#allocation4 + $0x138] sm:$0xff]
    %v1854 = vld [vmem:[#allocation4 + $0x140] sm:$0xff]
    %v1855 = vld [vmem:[#allocation4 + $0x148] sm:$0xff]
    %v1856 = vld [vmem:[#allocation4 + $0x150] sm:$0xff]
    %v1857 = vld [vmem:[#allocation4 + $0x158] sm:$0xff]
    %v1858 = vld [vmem:[#allocation4 + $0x160] sm:$0xff]
    %v1859 = vld [vmem:[#allocation4 + $0x168] sm:$0xff]
    %v1860 = vld [vmem:[#allocation4 + $0x170] sm:$0xff]
    %v1861 = vld [vmem:[#allocation4 + $0x178] sm:$0xff]
    %v1862 = vld [vmem:[#allocation4 + $0x180] sm:$0xff]
    %v1863 = vld [vmem:[#allocation4 + $0x188] sm:$0xff]
    %v1864 = vld [vmem:[#allocation4 + $0x190] sm:$0xff]
    %v1865 = vld [vmem:[#allocation4 + $0x198] sm:$0xff]
    %v1866 = vld [vmem:[#allocation4 + $0x1a0] sm:$0xff]
    %v1867 = vld [vmem:[#allocation4 + $0x1a8] sm:$0xff]
    %v1868 = vld [vmem:[#allocation4 + $0x1b0] sm:$0xff]
    %v1869 = vld [vmem:[#allocation4 + $0x1b8] sm:$0xff]
    %v1870 = vld [vmem:[#allocation4 + $0x1c0] sm:$0xff]
    %v1871 = vld [vmem:[#allocation4 + $0x1c8] sm:$0xff]
    %v1872 = vld [vmem:[#allocation4 + $0x1d0] sm:$0xff]
    %v1873 = vld [vmem:[#allocation4 + $0x1d8] sm:$0xff]
    %v1874 = vld [vmem:[#allocation4 + $0x1e0] sm:$0xff]
    %v1875 = vld [vmem:[#allocation4 + $0x1e8] sm:$0xff]
    %v1876 = vld [vmem:[#allocation4 + $0x1f0] sm:$0xff]
    %v1877 = vld [vmem:[#allocation4 + $0x1f8] sm:$0xff]
    %1878 = vmatprep.subr.mxu0 %v1875
    %1879 = vmatpush1.msra.mxu0 %v1874
    %1880 = vmatprep.subr.mxu0 %v1871
    %1881 = vmatpush1.msra.mxu0 %v1870
    %1882 = vmatprep.subr.mxu0 %v1867
    %1883 = vmatpush1.msra.mxu0 %v1866
    %1884 = vmatprep.subr.mxu0 %v1863
    %1885 = vmatpush1.msra.mxu0 %v1862
    %1886 = vmatprep.subr.mxu0 %v1859
    %1887 = vmatpush1.msra.mxu0 %v1858
    %1888 = vmatprep.subr.mxu0 %v1855
    %1889 = vmatpush1.msra.mxu0 %v1854
    %1890 = vmatprep.subr.mxu0 %v1851
    %1891 = vmatpush1.msra.mxu0 %v1850
    %1892 = vmatprep.subr.mxu0 %v1847
    %1893 = vmatpush1.msra.mxu0 %v1846
    %1894 = vmatprep.subr.mxu0 %v1843
    %1895 = vmatpush1.msra.mxu0 %v1842
    %1896 = vmatprep.subr.mxu0 %v1839
    %1897 = vmatpush1.msra.mxu0 %v1838
    %1898 = vmatprep.subr.mxu0 %v1835
    %1899 = vmatpush1.msra.mxu0 %v1834
    %1900 = vmatprep.subr.mxu0 %v1831
    %1901 = vmatpush1.msra.mxu0 %v1830
    %1902 = vmatprep.subr.mxu0 %v1827
    %1903 = vmatpush1.msra.mxu0 %v1826
    %1904 = vmatprep.subr.mxu0 %v1823
    %1905 = vmatpush1.msra.mxu0 %v1822
    %1906 = vmatprep.subr.mxu0 %v1819
    %1907 = vmatpush1.msra.mxu0 %v1818
    %1908 = vmatprep.subr.mxu0 %v1815
    %1909 = vmatpush1.msra.mxu0 %v1814
    %1910 = vmatprep.subr.mxu0 0.0
    %1911 = vmatpush2.msra.mxu0 0.0
    %1912 = vmatprep.subr.mxu0 0.0
    %1913 = vmatpush2.msra.mxu0 0.0
    %1914 = vmatprep.subr.mxu0 0.0
    %1915 = vmatpush2.msra.mxu0 0.0
    %1916 = vmatprep.subr.mxu0 0.0
    %1917 = vmatpush2.msra.mxu0 0.0
    %1918 = vmatprep.subr.mxu0 0.0
    %1919 = vmatpush2.msra.mxu0 0.0
    %1920 = vmatprep.subr.mxu0 0.0
    %1921 = vmatpush2.msra.mxu0 0.0
    %1922 = vmatprep.subr.mxu0 0.0
    %1923 = vmatpush2.msra.mxu0 0.0
    %1924 = vmatprep.subr.mxu0 0.0
    %1925 = vmatpush2.msra.mxu0 0.0
    %1926 = vmatprep.subr.mxu0 0.0
    %1927 = vmatpush2.msra.mxu0 0.0
    %1928 = vmatprep.subr.mxu0 0.0
    %1929 = vmatpush2.msra.mxu0 0.0
    %1930 = vmatprep.subr.mxu0 0.0
    %1931 = vmatpush2.msra.mxu0 0.0
    %1932 = vmatprep.subr.mxu0 0.0
    %1933 = vmatpush2.msra.mxu0 0.0
    %1934 = vmatprep.subr.mxu0 0.0
    %1935 = vmatpush2.msra.mxu0 0.0
    %1936 = vmatprep.subr.mxu0 0.0
    %1937 = vmatpush2.msra.mxu0 0.0
    %1938 = vmatprep.subr.mxu0 0.0
    %1939 = vmatpush2.msra.mxu0 0.0
    %1940 = vmatprep.subr.mxu0 0.0
    %1941 = vmatpush2.msra.mxu0 0.0
    %1942 = vmatprep.mubr.f32.mxu0 0.0
    %1943 = vmatmul.mubr.f32.gmra.mxu0 %v1806
    %v1944 = vpop.f32.mrf.mxu0
    %v1945 = vadd.f32 0.0, %v1944
    %v1946 = vpop.f32.mrf.mxu0
    %v1947 = vadd.f32 0.0, %v1946
    %1948 = vdwg.mxu0
    %1949 = vmatprep.subr.mxu0 %v1877
    %1950 = vmatpush1.msra.mxu0 %v1876
    %1951 = vmatprep.subr.mxu0 %v1873
    %1952 = vmatpush1.msra.mxu0 %v1872
    %1953 = vmatprep.subr.mxu0 %v1869
    %1954 = vmatpush1.msra.mxu0 %v1868
    %1955 = vmatprep.subr.mxu0 %v1865
    %1956 = vmatpush1.msra.mxu0 %v1864
    %1957 = vmatprep.subr.mxu0 %v1861
    %1958 = vmatpush1.msra.mxu0 %v1860
    %1959 = vmatprep.subr.mxu0 %v1857
    %1960 = vmatpush1.msra.mxu0 %v1856
    %1961 = vmatprep.subr.mxu0 %v1853
    %1962 = vmatpush1.msra.mxu0 %v1852
    %1963 = vmatprep.subr.mxu0 %v1849
    %1964 = vmatpush1.msra.mxu0 %v1848
    %1965 = vmatprep.subr.mxu0 %v1845
    %1966 = vmatpush1.msra.mxu0 %v1844
    %1967 = vmatprep.subr.mxu0 %v1841
    %1968 = vmatpush1.msra.mxu0 %v1840
    %1969 = vmatprep.subr.mxu0 %v1837
    %1970 = vmatpush1.msra.mxu0 %v1836
    %1971 = vmatprep.subr.mxu0 %v1833
    %1972 = vmatpush1.msra.mxu0 %v1832
    %1973 = vmatprep.subr.mxu0 %v1829
    %1974 = vmatpush1.msra.mxu0 %v1828
    %1975 = vmatprep.subr.mxu0 %v1825
    %1976 = vmatpush1.msra.mxu0 %v1824
    %1977 = vmatprep.subr.mxu0 %v1821
    %1978 = vmatpush1.msra.mxu0 %v1820
    %1979 = vmatprep.subr.mxu0 %v1817
    %1980 = vmatpush1.msra.mxu0 %v1816
    %1981 = vmatprep.subr.mxu0 0.0
    %1982 = vmatpush2.msra.mxu0 0.0
    %1983 = vmatprep.subr.mxu0 0.0
    %1984 = vmatpush2.msra.mxu0 0.0
    %1985 = vmatprep.subr.mxu0 0.0
    %1986 = vmatpush2.msra.mxu0 0.0
    %1987 = vmatprep.subr.mxu0 0.0
    %1988 = vmatpush2.msra.mxu0 0.0
    %1989 = vmatprep.subr.mxu0 0.0
    %1990 = vmatpush2.msra.mxu0 0.0
    %1991 = vmatprep.subr.mxu0 0.0
    %1992 = vmatpush2.msra.mxu0 0.0
    %1993 = vmatprep.subr.mxu0 0.0
    %1994 = vmatpush2.msra.mxu0 0.0
    %1995 = vmatprep.subr.mxu0 0.0
    %1996 = vmatpush2.msra.mxu0 0.0
    %1997 = vmatprep.subr.mxu0 0.0
    %1998 = vmatpush2.msra.mxu0 0.0
    %1999 = vmatprep.subr.mxu0 0.0
    %2000 = vmatpush2.msra.mxu0 0.0
    %2001 = vmatprep.subr.mxu0 0.0
    %2002 = vmatpush2.msra.mxu0 0.0
    %2003 = vmatprep.subr.mxu0 0.0
    %2004 = vmatpush2.msra.mxu0 0.0
    %2005 = vmatprep.subr.mxu0 0.0
    %2006 = vmatpush2.msra.mxu0 0.0
    %2007 = vmatprep.subr.mxu0 0.0
    %2008 = vmatpush2.msra.mxu0 0.0
    %2009 = vmatprep.subr.mxu0 0.0
    %2010 = vmatpush2.msra.mxu0 0.0
    %2011 = vmatprep.subr.mxu0 0.0
    %2012 = vmatpush2.msra.mxu0 0.0
    %2013 = vmatprep.mubr.f32.mxu0 0.0
    %2014 = vmatmul.mubr.f32.gmra.mxu0 %v1806
    %v2015 = vpop.f32.mrf.mxu0
    %v2016 = vadd.f32 0.0, %v2015
    %v2017 = vpop.f32.mrf.mxu0
    %v2018 = vadd.f32 0.0, %v2017
    %2019 = vdwg.mxu0
    %v2020 = vadd.f32 %v1810, %v1945
    %v2021 = vadd.f32 %v1811, %v1947
    %v2022 = vadd.f32 %v1812, %v2016
    %v2023 = vadd.f32 %v1813, %v2018
    %v2024 = vxor.u32 %v2020, 2147483648
    %v2025 = vmul.f32 %v2024, 1.442695
    %v2026 = vpow.pop %v2025
    %v2027 = vadd.f32 %v2026, 1.0
    %v2028 = vrcp.pop %v2027
    %v2029 = vmul.f32 1.0, %v2028
    %v2030 = vxor.u32 %v2021, 2147483648
    %v2031 = vmul.f32 %v2030, 1.442695
    %v2032 = vpow.pop %v2031
    %v2033 = vadd.f32 %v2032, 1.0
    %v2034 = vrcp.pop %v2033
    %v2035 = vmul.f32 1.0, %v2034
    %v2036 = vtanh.pop %v2022
    %v2037 = vxor.u32 %v2023, 2147483648
    %v2038 = vmul.f32 %v2037, 1.442695
    %v2039 = vpow.pop %v2038
    %v2040 = vadd.f32 %v2039, 1.0
    %v2041 = vrcp.pop %v2040
    %v2042 = vmul.f32 1.0, %v2041
    %v2043 = vmul.f32 %v2035, %v1804
    %v2044 = vmul.f32 %v2029, %v2036
    %v2045 = vadd.f32 %v2043, %v2044
    %v2046 = vtanh.pop %v2045
    %v2047 = vmul.f32 %v2042, %v2046
    %s2048 = scalar_lea.vmem [#allocation3], 48
    %2049 = vst [vmem:[%s2048] sm:$0xff] %v2047
    %s2050 = scalar_lea.vmem [#allocation2], 224
    %v2051 = vld [vmem:[%s2050] sm:$0xff]
    %v2052 = vld [vmem:[%s2050 + $0x8] sm:$0xff]
    %v2053 = vld [vmem:[%s2050 + $0x10] sm:$0xff]
    %v2054 = vld [vmem:[%s2050 + $0x18] sm:$0xff]
    %v2055 = vld [vmem:[#allocation4] sm:$0xff]
    %v2056 = vld [vmem:[#allocation4 + $0x8] sm:$0xff]
    %v2057 = vld [vmem:[#allocation4 + $0x10] sm:$0xff]
    %v2058 = vld [vmem:[#allocation4 + $0x18] sm:$0xff]
    %v2059 = vld [vmem:[#allocation4 + $0x20] sm:$0xff]
    %v2060 = vld [vmem:[#allocation4 + $0x28] sm:$0xff]
    %v2061 = vld [vmem:[#allocation4 + $0x30] sm:$0xff]
    %v2062 = vld [vmem:[#allocation4 + $0x38] sm:$0xff]
    %v2063 = vld [vmem:[#allocation4 + $0x40] sm:$0xff]
    %v2064 = vld [vmem:[#allocation4 + $0x48] sm:$0xff]
    %v2065 = vld [vmem:[#allocation4 + $0x50] sm:$0xff]
    %v2066 = vld [vmem:[#allocation4 + $0x58] sm:$0xff]
    %v2067 = vld [vmem:[#allocation4 + $0x60] sm:$0xff]
    %v2068 = vld [vmem:[#allocation4 + $0x68] sm:$0xff]
    %v2069 = vld [vmem:[#allocation4 + $0x70] sm:$0xff]
    %v2070 = vld [vmem:[#allocation4 + $0x78] sm:$0xff]
    %v2071 = vld [vmem:[#allocation4 + $0x80] sm:$0xff]
    %v2072 = vld [vmem:[#allocation4 + $0x88] sm:$0xff]
    %v2073 = vld [vmem:[#allocation4 + $0x90] sm:$0xff]
    %v2074 = vld [vmem:[#allocation4 + $0x98] sm:$0xff]
    %v2075 = vld [vmem:[#allocation4 + $0xa0] sm:$0xff]
    %v2076 = vld [vmem:[#allocation4 + $0xa8] sm:$0xff]
    %v2077 = vld [vmem:[#allocation4 + $0xb0] sm:$0xff]
    %v2078 = vld [vmem:[#allocation4 + $0xb8] sm:$0xff]
    %v2079 = vld [vmem:[#allocation4 + $0xc0] sm:$0xff]
    %v2080 = vld [vmem:[#allocation4 + $0xc8] sm:$0xff]
    %v2081 = vld [vmem:[#allocation4 + $0xd0] sm:$0xff]
    %v2082 = vld [vmem:[#allocation4 + $0xd8] sm:$0xff]
    %v2083 = vld [vmem:[#allocation4 + $0xe0] sm:$0xff]
    %v2084 = vld [vmem:[#allocation4 + $0xe8] sm:$0xff]
    %v2085 = vld [vmem:[#allocation4 + $0xf0] sm:$0xff]
    %v2086 = vld [vmem:[#allocation4 + $0xf8] sm:$0xff]
    %v2087 = vld [vmem:[#allocation4 + $0x100] sm:$0xff]
    %v2088 = vld [vmem:[#allocation4 + $0x108] sm:$0xff]
    %v2089 = vld [vmem:[#allocation4 + $0x110] sm:$0xff]
    %v2090 = vld [vmem:[#allocation4 + $0x118] sm:$0xff]
    %v2091 = vld [vmem:[#allocation4 + $0x120] sm:$0xff]
    %v2092 = vld [vmem:[#allocation4 + $0x128] sm:$0xff]
    %v2093 = vld [vmem:[#allocation4 + $0x130] sm:$0xff]
    %v2094 = vld [vmem:[#allocation4 + $0x138] sm:$0xff]
    %v2095 = vld [vmem:[#allocation4 + $0x140] sm:$0xff]
    %v2096 = vld [vmem:[#allocation4 + $0x148] sm:$0xff]
    %v2097 = vld [vmem:[#allocation4 + $0x150] sm:$0xff]
    %v2098 = vld [vmem:[#allocation4 + $0x158] sm:$0xff]
    %v2099 = vld [vmem:[#allocation4 + $0x160] sm:$0xff]
    %v2100 = vld [vmem:[#allocation4 + $0x168] sm:$0xff]
    %v2101 = vld [vmem:[#allocation4 + $0x170] sm:$0xff]
    %v2102 = vld [vmem:[#allocation4 + $0x178] sm:$0xff]
    %v2103 = vld [vmem:[#allocation4 + $0x180] sm:$0xff]
    %v2104 = vld [vmem:[#allocation4 + $0x188] sm:$0xff]
    %v2105 = vld [vmem:[#allocation4 + $0x190] sm:$0xff]
    %v2106 = vld [vmem:[#allocation4 + $0x198] sm:$0xff]
    %v2107 = vld [vmem:[#allocation4 + $0x1a0] sm:$0xff]
    %v2108 = vld [vmem:[#allocation4 + $0x1a8] sm:$0xff]
    %v2109 = vld [vmem:[#allocation4 + $0x1b0] sm:$0xff]
    %v2110 = vld [vmem:[#allocation4 + $0x1b8] sm:$0xff]
    %v2111 = vld [vmem:[#allocation4 + $0x1c0] sm:$0xff]
    %v2112 = vld [vmem:[#allocation4 + $0x1c8] sm:$0xff]
    %v2113 = vld [vmem:[#allocation4 + $0x1d0] sm:$0xff]
    %v2114 = vld [vmem:[#allocation4 + $0x1d8] sm:$0xff]
    %v2115 = vld [vmem:[#allocation4 + $0x1e0] sm:$0xff]
    %v2116 = vld [vmem:[#allocation4 + $0x1e8] sm:$0xff]
    %v2117 = vld [vmem:[#allocation4 + $0x1f0] sm:$0xff]
    %v2118 = vld [vmem:[#allocation4 + $0x1f8] sm:$0xff]
    %2119 = vmatprep.subr.mxu0 %v2116
    %2120 = vmatpush1.msra.mxu0 %v2115
    %2121 = vmatprep.subr.mxu0 %v2112
    %2122 = vmatpush1.msra.mxu0 %v2111
    %2123 = vmatprep.subr.mxu0 %v2108
    %2124 = vmatpush1.msra.mxu0 %v2107
    %2125 = vmatprep.subr.mxu0 %v2104
    %2126 = vmatpush1.msra.mxu0 %v2103
    %2127 = vmatprep.subr.mxu0 %v2100
    %2128 = vmatpush1.msra.mxu0 %v2099
    %2129 = vmatprep.subr.mxu0 %v2096
    %2130 = vmatpush1.msra.mxu0 %v2095
    %2131 = vmatprep.subr.mxu0 %v2092
    %2132 = vmatpush1.msra.mxu0 %v2091
    %2133 = vmatprep.subr.mxu0 %v2088
    %2134 = vmatpush1.msra.mxu0 %v2087
    %2135 = vmatprep.subr.mxu0 %v2084
    %2136 = vmatpush1.msra.mxu0 %v2083
    %2137 = vmatprep.subr.mxu0 %v2080
    %2138 = vmatpush1.msra.mxu0 %v2079
    %2139 = vmatprep.subr.mxu0 %v2076
    %2140 = vmatpush1.msra.mxu0 %v2075
    %2141 = vmatprep.subr.mxu0 %v2072
    %2142 = vmatpush1.msra.mxu0 %v2071
    %2143 = vmatprep.subr.mxu0 %v2068
    %2144 = vmatpush1.msra.mxu0 %v2067
    %2145 = vmatprep.subr.mxu0 %v2064
    %2146 = vmatpush1.msra.mxu0 %v2063
    %2147 = vmatprep.subr.mxu0 %v2060
    %2148 = vmatpush1.msra.mxu0 %v2059
    %2149 = vmatprep.subr.mxu0 %v2056
    %2150 = vmatpush1.msra.mxu0 %v2055
    %2151 = vmatprep.subr.mxu0 0.0
    %2152 = vmatpush2.msra.mxu0 0.0
    %2153 = vmatprep.subr.mxu0 0.0
    %2154 = vmatpush2.msra.mxu0 0.0
    %2155 = vmatprep.subr.mxu0 0.0
    %2156 = vmatpush2.msra.mxu0 0.0
    %2157 = vmatprep.subr.mxu0 0.0
    %2158 = vmatpush2.msra.mxu0 0.0
    %2159 = vmatprep.subr.mxu0 0.0
    %2160 = vmatpush2.msra.mxu0 0.0
    %2161 = vmatprep.subr.mxu0 0.0
    %2162 = vmatpush2.msra.mxu0 0.0
    %2163 = vmatprep.subr.mxu0 0.0
    %2164 = vmatpush2.msra.mxu0 0.0
    %2165 = vmatprep.subr.mxu0 0.0
    %2166 = vmatpush2.msra.mxu0 0.0
    %2167 = vmatprep.subr.mxu0 0.0
    %2168 = vmatpush2.msra.mxu0 0.0
    %2169 = vmatprep.subr.mxu0 0.0
    %2170 = vmatpush2.msra.mxu0 0.0
    %2171 = vmatprep.subr.mxu0 0.0
    %2172 = vmatpush2.msra.mxu0 0.0
    %2173 = vmatprep.subr.mxu0 0.0
    %2174 = vmatpush2.msra.mxu0 0.0
    %2175 = vmatprep.subr.mxu0 0.0
    %2176 = vmatpush2.msra.mxu0 0.0
    %2177 = vmatprep.subr.mxu0 0.0
    %2178 = vmatpush2.msra.mxu0 0.0
    %2179 = vmatprep.subr.mxu0 0.0
    %2180 = vmatpush2.msra.mxu0 0.0
    %2181 = vmatprep.subr.mxu0 0.0
    %2182 = vmatpush2.msra.mxu0 0.0
    %2183 = vmatprep.mubr.f32.mxu0 0.0
    %2184 = vmatmul.mubr.f32.gmra.mxu0 %v2047
    %v2185 = vpop.f32.mrf.mxu0
    %v2186 = vadd.f32 0.0, %v2185
    %v2187 = vpop.f32.mrf.mxu0
    %v2188 = vadd.f32 0.0, %v2187
    %2189 = vdwg.mxu0
    %2190 = vmatprep.subr.mxu0 %v2118
    %2191 = vmatpush1.msra.mxu0 %v2117
    %2192 = vmatprep.subr.mxu0 %v2114
    %2193 = vmatpush1.msra.mxu0 %v2113
    %2194 = vmatprep.subr.mxu0 %v2110
    %2195 = vmatpush1.msra.mxu0 %v2109
    %2196 = vmatprep.subr.mxu0 %v2106
    %2197 = vmatpush1.msra.mxu0 %v2105
    %2198 = vmatprep.subr.mxu0 %v2102
    %2199 = vmatpush1.msra.mxu0 %v2101
    %2200 = vmatprep.subr.mxu0 %v2098
    %2201 = vmatpush1.msra.mxu0 %v2097
    %2202 = vmatprep.subr.mxu0 %v2094
    %2203 = vmatpush1.msra.mxu0 %v2093
    %2204 = vmatprep.subr.mxu0 %v2090
    %2205 = vmatpush1.msra.mxu0 %v2089
    %2206 = vmatprep.subr.mxu0 %v2086
    %2207 = vmatpush1.msra.mxu0 %v2085
    %2208 = vmatprep.subr.mxu0 %v2082
    %2209 = vmatpush1.msra.mxu0 %v2081
    %2210 = vmatprep.subr.mxu0 %v2078
    %2211 = vmatpush1.msra.mxu0 %v2077
    %2212 = vmatprep.subr.mxu0 %v2074
    %2213 = vmatpush1.msra.mxu0 %v2073
    %2214 = vmatprep.subr.mxu0 %v2070
    %2215 = vmatpush1.msra.mxu0 %v2069
    %2216 = vmatprep.subr.mxu0 %v2066
    %2217 = vmatpush1.msra.mxu0 %v2065
    %2218 = vmatprep.subr.mxu0 %v2062
    %2219 = vmatpush1.msra.mxu0 %v2061
    %2220 = vmatprep.subr.mxu0 %v2058
    %2221 = vmatpush1.msra.mxu0 %v2057
    %2222 = vmatprep.subr.mxu0 0.0
    %2223 = vmatpush2.msra.mxu0 0.0
    %2224 = vmatprep.subr.mxu0 0.0
    %2225 = vmatpush2.msra.mxu0 0.0
    %2226 = vmatprep.subr.mxu0 0.0
    %2227 = vmatpush2.msra.mxu0 0.0
    %2228 = vmatprep.subr.mxu0 0.0
    %2229 = vmatpush2.msra.mxu0 0.0
    %2230 = vmatprep.subr.mxu0 0.0
    %2231 = vmatpush2.msra.mxu0 0.0
    %2232 = vmatprep.subr.mxu0 0.0
    %2233 = vmatpush2.msra.mxu0 0.0
    %2234 = vmatprep.subr.mxu0 0.0
    %2235 = vmatpush2.msra.mxu0 0.0
    %2236 = vmatprep.subr.mxu0 0.0
    %2237 = vmatpush2.msra.mxu0 0.0
    %2238 = vmatprep.subr.mxu0 0.0
    %2239 = vmatpush2.msra.mxu0 0.0
    %2240 = vmatprep.subr.mxu0 0.0
    %2241 = vmatpush2.msra.mxu0 0.0
    %2242 = vmatprep.subr.mxu0 0.0
    %2243 = vmatpush2.msra.mxu0 0.0
    %2244 = vmatprep.subr.mxu0 0.0
    %2245 = vmatpush2.msra.mxu0 0.0
    %2246 = vmatprep.subr.mxu0 0.0
    %2247 = vmatpush2.msra.mxu0 0.0
    %2248 = vmatprep.subr.mxu0 0.0
    %2249 = vmatpush2.msra.mxu0 0.0
    %2250 = vmatprep.subr.mxu0 0.0
    %2251 = vmatpush2.msra.mxu0 0.0
    %2252 = vmatprep.subr.mxu0 0.0
    %2253 = vmatpush2.msra.mxu0 0.0
    %2254 = vmatprep.mubr.f32.mxu0 0.0
    %2255 = vmatmul.mubr.f32.gmra.mxu0 %v2047
    %v2256 = vpop.f32.mrf.mxu0
    %v2257 = vadd.f32 0.0, %v2256
    %v2258 = vpop.f32.mrf.mxu0
    %v2259 = vadd.f32 0.0, %v2258
    %2260 = vdwg.mxu0
    %v2261 = vadd.f32 %v2051, %v2186
    %v2262 = vadd.f32 %v2052, %v2188
    %v2263 = vadd.f32 %v2053, %v2257
    %v2264 = vadd.f32 %v2054, %v2259
    %v2265 = vxor.u32 %v2261, 2147483648
    %v2266 = vmul.f32 %v2265, 1.442695
    %v2267 = vpow.pop %v2266
    %v2268 = vadd.f32 %v2267, 1.0
    %v2269 = vrcp.pop %v2268
    %v2270 = vmul.f32 1.0, %v2269
    %v2271 = vxor.u32 %v2262, 2147483648
    %v2272 = vmul.f32 %v2271, 1.442695
    %v2273 = vpow.pop %v2272
    %v2274 = vadd.f32 %v2273, 1.0
    %v2275 = vrcp.pop %v2274
    %v2276 = vmul.f32 1.0, %v2275
    %v2277 = vtanh.pop %v2263
    %v2278 = vxor.u32 %v2264, 2147483648
    %v2279 = vmul.f32 %v2278, 1.442695
    %v2280 = vpow.pop %v2279
    %v2281 = vadd.f32 %v2280, 1.0
    %v2282 = vrcp.pop %v2281
    %v2283 = vmul.f32 1.0, %v2282
    %v2284 = vmul.f32 %v2276, %v2045
    %v2285 = vmul.f32 %v2270, %v2277
    %v2286 = vadd.f32 %v2284, %v2285
    %v2287 = vtanh.pop %v2286
    %v2288 = vmul.f32 %v2283, %v2287
    %s2289 = scalar_lea.vmem [#allocation3], 56
    %2290 = vst [vmem:[%s2289] sm:$0xff] %v2288
    %v2291 = vld [vmem:[#allocation3] sm:$0xff]
    %v2292 = vld [vmem:[#allocation3 + $0x8] sm:$0xff]
    %v2293 = vld [vmem:[#allocation3 + $0x10] sm:$0xff]
    %v2294 = vld [vmem:[#allocation3 + $0x18] sm:$0xff]
    %v2295 = vld [vmem:[#allocation3 + $0x20] sm:$0xff]
    %v2296 = vld [vmem:[#allocation3 + $0x28] sm:$0xff]
    %v2297 = vld [vmem:[#allocation3 + $0x30] sm:$0xff]
    %v2298 = vld [vmem:[#allocation3 + $0x38] sm:$0xff]
    %v2299 = vld [vmem:[%s4] sm:$0xff]
    %v2300 = vld [vmem:[%s4 + $0x8] sm:$0xff]
    %v2301 = vld [vmem:[%s4 + $0x10] sm:$0xff]
    %v2302 = vld [vmem:[%s4 + $0x18] sm:$0xff]
    %v2303 = vld [vmem:[%s4 + $0x20] sm:$0xff]
    %v2304 = vld [vmem:[%s4 + $0x28] sm:$0xff]
    %v2305 = vld [vmem:[%s4 + $0x30] sm:$0xff]
    %v2306 = vld [vmem:[%s4 + $0x38] sm:$0xff]
    %v2307 = vld [vmem:[%s4 + $0x40] sm:$0xff]
    %v2308 = vld [vmem:[%s4 + $0x48] sm:$0xff]
    %v2309 = vld [vmem:[%s4 + $0x50] sm:$0xff]
    %v2310 = vld [vmem:[%s4 + $0x58] sm:$0xff]
    %v2311 = vld [vmem:[%s4 + $0x60] sm:$0xff]
    %v2312 = vld [vmem:[%s4 + $0x68] sm:$0xff]
    %v2313 = vld [vmem:[%s4 + $0x70] sm:$0xff]
    %v2314 = vld [vmem:[%s4 + $0x78] sm:$0xff]
    %v2315 = vld [vmem:[%s5] sm:$0x1]
    %v2317 = vlaneseq
    %v2318 = vshrl.u32 %v2317, 7
    %v2319 = vsub.s32 0, %v2318
    %v2320 = vrot.slane %v2315, %v2319
    %2322 = vmatprep.subr.mxu0 0.0
    %2323 = vmatpush1.msra.mxu0 %v2314
    %2324 = vmatprep.subr.mxu0 0.0
    %2325 = vmatpush1.msra.mxu0 %v2313
    %2326 = vmatprep.subr.mxu0 0.0
    %2327 = vmatpush1.msra.mxu0 %v2312
    %2328 = vmatprep.subr.mxu0 0.0
    %2329 = vmatpush1.msra.mxu0 %v2311
    %2330 = vmatprep.subr.mxu0 0.0
    %2331 = vmatpush1.msra.mxu0 %v2310
    %2332 = vmatprep.subr.mxu0 0.0
    %2333 = vmatpush1.msra.mxu0 %v2309
    %2334 = vmatprep.subr.mxu0 0.0
    %2335 = vmatpush1.msra.mxu0 %v2308
    %2336 = vmatprep.subr.mxu0 0.0
    %2337 = vmatpush1.msra.mxu0 %v2307
    %2338 = vmatprep.subr.mxu0 0.0
    %2339 = vmatpush1.msra.mxu0 %v2306
    %2340 = vmatprep.subr.mxu0 0.0
    %2341 = vmatpush1.msra.mxu0 %v2305
    %2342 = vmatprep.subr.mxu0 0.0
    %2343 = vmatpush1.msra.mxu0 %v2304
    %2344 = vmatprep.subr.mxu0 0.0
    %2345 = vmatpush1.msra.mxu0 %v2303
    %2346 = vmatprep.subr.mxu0 0.0
    %2347 = vmatpush1.msra.mxu0 %v2302
    %2348 = vmatprep.subr.mxu0 0.0
    %2349 = vmatpush1.msra.mxu0 %v2301
    %2350 = vmatprep.subr.mxu0 0.0
    %2351 = vmatpush1.msra.mxu0 %v2300
    %2352 = vmatprep.subr.mxu0 0.0
    %2353 = vmatpush1.msra.mxu0 %v2299
    %2354 = vmatprep.subr.mxu0 0.0
    %2355 = vmatpush2.msra.mxu0 0.0
    %2356 = vmatprep.subr.mxu0 0.0
    %2357 = vmatpush2.msra.mxu0 0.0
    %2358 = vmatprep.subr.mxu0 0.0
    %2359 = vmatpush2.msra.mxu0 0.0
    %2360 = vmatprep.subr.mxu0 0.0
    %2361 = vmatpush2.msra.mxu0 0.0
    %2362 = vmatprep.subr.mxu0 0.0
    %2363 = vmatpush2.msra.mxu0 0.0
    %2364 = vmatprep.subr.mxu0 0.0
    %2365 = vmatpush2.msra.mxu0 0.0
    %2366 = vmatprep.subr.mxu0 0.0
    %2367 = vmatpush2.msra.mxu0 0.0
    %2368 = vmatprep.subr.mxu0 0.0
    %2369 = vmatpush2.msra.mxu0 0.0
    %2370 = vmatprep.subr.mxu0 0.0
    %2371 = vmatpush2.msra.mxu0 0.0
    %2372 = vmatprep.subr.mxu0 0.0
    %2373 = vmatpush2.msra.mxu0 0.0
    %2374 = vmatprep.subr.mxu0 0.0
    %2375 = vmatpush2.msra.mxu0 0.0
    %2376 = vmatprep.subr.mxu0 0.0
    %2377 = vmatpush2.msra.mxu0 0.0
    %2378 = vmatprep.subr.mxu0 0.0
    %2379 = vmatpush2.msra.mxu0 0.0
    %2380 = vmatprep.subr.mxu0 0.0
    %2381 = vmatpush2.msra.mxu0 0.0
    %2382 = vmatprep.subr.mxu0 0.0
    %2383 = vmatpush2.msra.mxu0 0.0
    %2384 = vmatprep.subr.mxu0 0.0
    %2385 = vmatpush2.msra.mxu0 0.0
    %2386 = vmatprep.mubr.f32.mxu0 0.0
    %2387 = vmatmul.mubr.f32.gmra.mxu0 %v2291
    %v2388 = vpop.f32.mrf.mxu0
    %v2389 = vadd.f32 %v2320, %v2388
    %v2390 = vpop.f32.mrf.mxu0
    %2391 = vmatprep.mubr.f32.mxu0 0.0
    %2392 = vmatmul.mubr.f32.gmra.mxu0 %v2292
    %v2393 = vpop.f32.mrf.mxu0
    %v2394 = vadd.f32 %v2320, %v2393
    %v2395 = vpop.f32.mrf.mxu0
    %2396 = vmatprep.mubr.f32.mxu0 0.0
    %2397 = vmatmul.mubr.f32.gmra.mxu0 %v2293
    %v2398 = vpop.f32.mrf.mxu0
    %v2399 = vadd.f32 %v2320, %v2398
    %v2400 = vpop.f32.mrf.mxu0
    %2401 = vmatprep.mubr.f32.mxu0 0.0
    %2402 = vmatmul.mubr.f32.gmra.mxu0 %v2294
    %v2403 = vpop.f32.mrf.mxu0
    %v2404 = vadd.f32 %v2320, %v2403
    %v2405 = vpop.f32.mrf.mxu0
    %2406 = vmatprep.mubr.f32.mxu0 0.0
    %2407 = vmatmul.mubr.f32.gmra.mxu0 %v2295
    %v2408 = vpop.f32.mrf.mxu0
    %v2409 = vadd.f32 %v2320, %v2408
    %v2410 = vpop.f32.mrf.mxu0
    %2411 = vmatprep.mubr.f32.mxu0 0.0
    %2412 = vmatmul.mubr.f32.gmra.mxu0 %v2296
    %v2413 = vpop.f32.mrf.mxu0
    %v2414 = vadd.f32 %v2320, %v2413
    %v2415 = vpop.f32.mrf.mxu0
    %2416 = vmatprep.mubr.f32.mxu0 0.0
    %2417 = vmatmul.mubr.f32.gmra.mxu0 %v2297
    %v2418 = vpop.f32.mrf.mxu0
    %v2419 = vadd.f32 %v2320, %v2418
    %v2420 = vpop.f32.mrf.mxu0
    %2421 = vmatprep.mubr.f32.mxu0 0.0
    %2422 = vmatmul.mubr.f32.gmra.mxu0 %v2298
    %v2423 = vpop.f32.mrf.mxu0
    %v2424 = vadd.f32 %v2320, %v2423
    %v2425 = vpop.f32.mrf.mxu0
    %2426 = vdwg.mxu0
    %2427 = vst [vmem:[%s6] sm:$0xff] %v2389
    %2428 = vst [vmem:[%s6 + $0x8] sm:$0xff] %v2394
    %2429 = vst [vmem:[%s6 + $0x10] sm:$0xff] %v2399
    %2430 = vst [vmem:[%s6 + $0x18] sm:$0xff] %v2404
    %2431 = vst [vmem:[%s6 + $0x20] sm:$0xff] %v2409
    %2432 = vst [vmem:[%s6 + $0x28] sm:$0xff] %v2414
    %2433 = vst [vmem:[%s6 + $0x30] sm:$0xff] %v2419
    %2434 = vst [vmem:[%s6 + $0x38] sm:$0xff] %v2424
    // Predicated region
    $region30: #{rnn_predictor_forward.1} parent=1 // pred_check
      _
    $region31: #{rnn_predictor_forward.1} parent=1 // pred_check_branch
      %2436 = sbr.rel (0) target = $region33
    $region32: #{rnn_predictor_forward.1} parent=1 // pred_region
      _
    $region33: #{rnn_predictor_forward.1} parent=1 // pred_fallthru
      _
    // Predicated region
    $region34: #{rnn_predictor_forward.1} parent=1 // pred_check
      _
    $region35: #{rnn_predictor_forward.1} parent=1 // pred_check_branch
      %2438 = sbr.rel (0) target = $region37
    $region36: #{rnn_predictor_forward.1} parent=1 // pred_region
      _
    $region37: #{rnn_predictor_forward.1} parent=1 // pred_fallthru
      _
    %2439 = vsyncpa [#allocation5], 1

</llo_original>
